<compile_context>
chip_gen: v7x
topology: tpu7x:2x2x1
jax: 0.10.0
libtpu: 0.0.40
codegen_flags: <defaults>
</compile_context>

<pallas_src>
import functools
import jax
import jax.numpy as jnp
from jax.experimental import pallas as pl
from jax.experimental.pallas import tpu as pltpu

NEG_SLOPE = 0.2
BN_EPS = 1e-5
LANES = 128


# ---------------------------------------------------------------- Pallas kernel
def conv_bn_lrelu_kernel(x_ref, w_ref, g_ref, b_ref, o_ref, *, use_bn, use_relu):
    """Fused conv-as-matmul + (optional) BatchNorm(train) + (optional) LeakyReLU.

    Single grid step: the whole layer (rows = batch*OH*OW) is resident in VMEM,
    so batch statistics are computed directly (two-pass, numerically safe) and
    applied in the same kernel.
    """
    # bf16 x bf16 -> f32 accumulation on the MXU.
    y = jnp.dot(x_ref[...], w_ref[...], preferred_element_type=jnp.float32)

    if use_bn:
        m = y.shape[0]
        mean = jnp.sum(y, axis=0, keepdims=True) * (1.0 / m)
        cent = y - mean
        var = jnp.sum(cent * cent, axis=0, keepdims=True) * (1.0 / m)  # biased var
        y = cent * (g_ref[...] * jax.lax.rsqrt(var + BN_EPS)) + b_ref[...]

    if use_relu:
        y = jnp.where(y >= 0, y, NEG_SLOPE * y)

    o_ref[...] = y


# ---------------------------------------------------------------- pallas_call wrapper
def fused_conv_layer(patches, wmat_p, gamma_p, beta_p, *, use_bn, use_relu):
    M, K = patches.shape
    _, NP = wmat_p.shape                      # NP is a multiple of 128 (lane-dense)
    kernel = functools.partial(conv_bn_lrelu_kernel, use_bn=use_bn, use_relu=use_relu)
    return pl.pallas_call(
        kernel,
        out_shape=jax.ShapeDtypeStruct((M, NP), jnp.float32),
        grid_spec=pltpu.PrefetchScalarGridSpec(
            num_scalar_prefetch=0,
            grid=(1,),                        # whole layer fits VMEM at these shapes
            in_specs=[pl.BlockSpec((M, K), lambda i: (0, 0)),
                      pl.BlockSpec((K, NP), lambda i: (0, 0)),
                      pl.BlockSpec((1, NP), lambda i: (0, 0)),
                      pl.BlockSpec((1, NP), lambda i: (0, 0))],
            out_specs=pl.BlockSpec((M, NP), lambda i: (0, 0))),
        compiler_params=pltpu.CompilerParams(
            dimension_semantics=("arbitrary",)),
    )(patches, wmat_p, gamma_p, beta_p)


# ---------------------------------------------------------------- JAX glue (layout only, NHWC)
def im2col_nhwc(x, kh, kw, stride, pad):
    # x: (N, H, W, C) -> (N*OH*OW, KH*KW*C); no big transposes needed in NHWC.
    N, H, W, C = x.shape
    xp = jnp.pad(x, ((0, 0), (pad, pad), (pad, pad), (0, 0)))
    OH = (H + 2 * pad - kh) // stride + 1
    OW = (W + 2 * pad - kw) // stride + 1
    pieces = []
    for i in range(kh):
        for j in range(kw):
            pieces.append(xp[:, i:i + stride * OH:stride, j:j + stride * OW:stride, :])
    p = jnp.stack(pieces, axis=3)                         # (N, OH, OW, KH*KW, C)
    p = p.reshape(N * OH * OW, kh * kw * C)
    return p, OH, OW


def conv_block(x_nhwc, w, gamma, beta, stride, pad, *, use_bn, use_relu):
    """Conv (PyTorch OIHW weight) + optional BN(train) + optional LeakyReLU, NHWC in/out."""
    N = x_nhwc.shape[0]
    O, C, KH, KW = w.shape
    patches, OH, OW = im2col_nhwc(x_nhwc, KH, KW, stride, pad)

    NP = ((O + LANES - 1) // LANES) * LANES               # pad out-channels to 128 lanes
    # (O, C, KH, KW) -> (KH, KW, C, O) to match NHWC patch feature order (kh, kw, c).
    wmat = w.transpose(2, 3, 1, 0).reshape(KH * KW * C, O)
    wmat_p = jnp.pad(wmat, ((0, 0), (0, NP - O)))

    if gamma is None:
        gamma = jnp.ones((O,), jnp.float32)
        beta = jnp.zeros((O,), jnp.float32)
    g_p = jnp.pad(gamma.astype(jnp.float32), (0, NP - O), constant_values=1.0).reshape(1, NP)
    b_p = jnp.pad(beta.astype(jnp.float32), (0, NP - O)).reshape(1, NP)

    y = fused_conv_layer(patches.astype(jnp.bfloat16),
                         wmat_p.astype(jnp.bfloat16),
                         g_p, b_p, use_bn=use_bn, use_relu=use_relu)
    return y[:, :O].reshape(N, OH, OW, O)


# ---------------------------------------------------------------- forward pass
def critic_forward(params, x, labels):
    # conditional path: label embedding becomes an extra (last) input channel.
    B, C, H, W = x.shape
    emb = params["embed"][labels].reshape(B, H, W, 1)
    x = jnp.concatenate([x.transpose(0, 2, 3, 1), emb], axis=-1)   # NHWC

    # layer 1: Conv(k=4, s=2, p=1, bias=False) + LeakyReLU(0.2)  (relu fused into matmul)
    x = conv_block(x, params["w1"], None, None, 2, 1, use_bn=False, use_relu=True)
    # blocks 2-4: Conv + BatchNorm2d (training-mode batch stats) + LeakyReLU(0.2)
    x = conv_block(x, params["w2"], params["g2"], params["b2"], 2, 1, use_bn=True, use_relu=True)
    x = conv_block(x, params["w3"], params["g3"], params["b3"], 2, 1, use_bn=True, use_relu=True)
    x = conv_block(x, params["w4"], params["g4"], params["b4"], 2, 1, use_bn=True, use_relu=True)
    # final Conv(k=4, s=1, p=0, bias=False) -> (B, 1, 1, 1)
    x = conv_block(x, params["w5"], None, None, 1, 0, use_bn=False, use_relu=False)
    return x.reshape(-1)                                   # == output.view(-1, 1).squeeze(1)


# pure-JAX f32 reference for correctness check
def ref_forward(params, x, labels):
    B, C, H, W = x.shape
    emb = params["embed"][labels].reshape(B, 1, H, W)
    x = jnp.concatenate([x, emb], axis=1)

    def conv(x, w, stride, pad):
        return jax.lax.conv_general_dilated(
            x, w, (stride, stride), [(pad, pad), (pad, pad)],
            dimension_numbers=("NCHW", "OIHW", "NCHW"))

    def leaky(v):
        return jnp.where(v >= 0, v, NEG_SLOPE * v)

    def bn(v, g, b):
        mean = v.mean(axis=(0, 2, 3), keepdims=True)
        var = ((v - mean) ** 2).mean(axis=(0, 2, 3), keepdims=True)
        return (v - mean) / jnp.sqrt(var + BN_EPS) * g.reshape(1, -1, 1, 1) + b.reshape(1, -1, 1, 1)

    x = leaky(conv(x, params["w1"], 2, 1))
    x = leaky(bn(conv(x, params["w2"], 2, 1), params["g2"], params["b2"]))
    x = leaky(bn(conv(x, params["w3"], 2, 1), params["g3"], params["b3"]))
    x = leaky(bn(conv(x, params["w4"], 2, 1), params["g4"], params["b4"]))
    x = conv(x, params["w5"], 1, 0)
    return x.reshape(-1)


if __name__ == "__main__":
    # Critic(ncf=8, channels_dim=3, conditional=True, num_classes=10, image_dim=64)
    # (image_dim must be 64 so the 4 stride-2 convs + final 4x4 valid conv reach 1x1)
    ncf, channels_dim, num_classes, image_dim, batch = 8, 3, 10, 64, 2
    cin = channels_dim + 1     # conditional -> +1 label channel
    # TODO(synk): instance_norm=True path (InstanceNorm2d) not implemented; defaults use BatchNorm.

    keys = jax.random.split(jax.random.PRNGKey(0), 14)

    def conv_w(k, o, i):
        return 0.02 * jax.random.normal(k, (o, i, 4, 4), jnp.float32)

    params = {
        "embed": 0.1 * jax.random.normal(keys[0], (num_classes, image_dim * image_dim), jnp.float32),
        "w1": conv_w(keys[1], ncf, cin),
        "w2": conv_w(keys[2], ncf * 2, ncf),
        "w3": conv_w(keys[3], ncf * 4, ncf * 2),
        "w4": conv_w(keys[4], ncf * 8, ncf * 4),
        "w5": conv_w(keys[5], 1, ncf * 8),
        "g2": 1.0 + 0.02 * jax.random.normal(keys[6], (ncf * 2,), jnp.float32),
        "b2": 0.02 * jax.random.normal(keys[7], (ncf * 2,), jnp.float32),
        "g3": 1.0 + 0.02 * jax.random.normal(keys[8], (ncf * 4,), jnp.float32),
        "b3": 0.02 * jax.random.normal(keys[9], (ncf * 4,), jnp.float32),
        "g4": 1.0 + 0.02 * jax.random.normal(keys[10], (ncf * 8,), jnp.float32),
        "b4": 0.02 * jax.random.normal(keys[11], (ncf * 8,), jnp.float32),
    }

    x = jax.random.normal(keys[12], (batch, channels_dim, image_dim, image_dim), jnp.float32)
    labels = jax.random.randint(keys[13], (batch,), 0, num_classes)

    out = jax.block_until_ready(jax.jit(critic_forward)(params, x, labels))

    ref = ref_forward(params, x, labels)
    assert out.shape == (batch,), out.shape
    # bf16 MXU inputs (f32 accumulation/stats) -> compare against the f32 reference
    # with a bf16-appropriate tolerance.
    assert jnp.allclose(out, ref, rtol=3e-2, atol=3e-2), (out, ref)
    print("KERNEL_OK")
</pallas_src>

<mosaic_0001>
module attributes {stable_mosaic.version = 11 : i64} {
  func.func @conv_bn_lrelu_kernel(%arg0: i32, %arg1: memref<2048x64xbf16, #tpu.memory_space<vmem>>, %arg2: memref<64x128xbf16, #tpu.memory_space<vmem>>, %arg3: memref<1x128xf32, #tpu.memory_space<vmem>>, %arg4: memref<1x128xf32, #tpu.memory_space<vmem>>, %arg5: memref<2048x128xf32, #tpu.memory_space<vmem>>) attributes {dimension_semantics = [#tpu.dimension_semantics<arbitrary>], iteration_bounds = array<i64: 1>, scalar_prefetch = 0 : i64, scratch_operands = 0 : i64, tpu.core_type = #tpu.core_type<tc>, window_params = [{pipeline_mode = #tpu.pipeline_mode<synchronous>, transform_indices = @transform_0, window_bounds = array<i64: 2048, 64>}, {pipeline_mode = #tpu.pipeline_mode<synchronous>, transform_indices = @transform_1, window_bounds = array<i64: 64, 128>}, {pipeline_mode = #tpu.pipeline_mode<synchronous>, transform_indices = @transform_2, window_bounds = array<i64: 1, 128>}, {pipeline_mode = #tpu.pipeline_mode<synchronous>, transform_indices = @transform_3, window_bounds = array<i64: 1, 128>}, {pipeline_mode = #tpu.pipeline_mode<synchronous>, transform_indices = @transform_4, window_bounds = array<i64: 2048, 128>}]} {
    %c0 = arith.constant 0 : index
    %c0_0 = arith.constant 0 : index
    %0 = vector.load %arg1[%c0, %c0_0] : memref<2048x64xbf16, #tpu.memory_space<vmem>>, vector<2048x64xbf16>
    %c0_1 = arith.constant 0 : index
    %c0_2 = arith.constant 0 : index
    %1 = vector.load %arg2[%c0_1, %c0_2] : memref<64x128xbf16, #tpu.memory_space<vmem>>, vector<64x128xbf16>
    %cst = arith.constant dense<0.000000e+00> : vector<2048x128xf32>
    %2 = tpu.matmul %0, %1, %cst {dimension_numbers = #tpu.dot_dimension_numbers<[1], [0], [0], [1], [0, 0, 1, 1], [], []>} : vector<2048x64xbf16>, vector<64x128xbf16>, vector<2048x128xf32> -> vector<2048x128xf32>
    %cst_3 = arith.constant 0.000000e+00 : f32
    %3 = vector.broadcast %cst_3 : f32 to vector<2048x128xf32>
    %4 = arith.cmpf oge, %2, %3 : vector<2048x128xf32>
    %cst_4 = arith.constant 2.000000e-01 : f32
    %5 = vector.broadcast %cst_4 : f32 to vector<2048x128xf32>
    %6 = arith.mulf %5, %2 : vector<2048x128xf32>
    %7 = arith.select %4, %2, %6 : vector<2048x128xi1>, vector<2048x128xf32>
    %c0_5 = arith.constant 0 : index
    %c0_6 = arith.constant 0 : index
    %8 = vector.load %arg5[%c0_5, %c0_6] : memref<2048x128xf32, #tpu.memory_space<vmem>>, vector<2048x128xf32>
    tpu.vector_store %arg5[%c0_5, %c0_6], %7 {strides = array<i32>} : memref<2048x128xf32, #tpu.memory_space<vmem>>, vector<2048x128xf32>,
    return
  }
  func.func @transform_0(%arg0: i32) -> (i32, i32) {
    %c0_i32 = arith.constant 0 : i32
    %c0_i32_0 = arith.constant 0 : i32
    %c0_i32_1 = arith.constant 0 : i32
    return %c0_i32, %c0_i32_0 : i32, i32
  }
  func.func @transform_1(%arg0: i32) -> (i32, i32) {
    %c0_i32 = arith.constant 0 : i32
    %c0_i32_0 = arith.constant 0 : i32
    %c0_i32_1 = arith.constant 0 : i32
    return %c0_i32, %c0_i32_0 : i32, i32
  }
  func.func @transform_2(%arg0: i32) -> (i32, i32) {
    %c0_i32 = arith.constant 0 : i32
    %c0_i32_0 = arith.constant 0 : i32
    %c0_i32_1 = arith.constant 0 : i32
    return %c0_i32, %c0_i32_0 : i32, i32
  }
  func.func @transform_3(%arg0: i32) -> (i32, i32) {
    %c0_i32 = arith.constant 0 : i32
    %c0_i32_0 = arith.constant 0 : i32
    %c0_i32_1 = arith.constant 0 : i32
    return %c0_i32, %c0_i32_0 : i32, i32
  }
  func.func @transform_4(%arg0: i32) -> (i32, i32) {
    %c0_i32 = arith.constant 0 : i32
    %c0_i32_0 = arith.constant 0 : i32
    %c0_i32_1 = arith.constant 0 : i32
    return %c0_i32, %c0_i32_0 : i32, i32
  }
}

module attributes {stable_mosaic.version = 11 : i64} {
  func.func @conv_bn_lrelu_kernel(%arg0: i32, %arg1: memref<512x128xbf16, #tpu.memory_space<vmem>>, %arg2: memref<128x128xbf16, #tpu.memory_space<vmem>>, %arg3: memref<1x128xf32, #tpu.memory_space<vmem>>, %arg4: memref<1x128xf32, #tpu.memory_space<vmem>>, %arg5: memref<512x128xf32, #tpu.memory_space<vmem>>) attributes {dimension_semantics = [#tpu.dimension_semantics<arbitrary>], iteration_bounds = array<i64: 1>, scalar_prefetch = 0 : i64, scratch_operands = 0 : i64, tpu.core_type = #tpu.core_type<tc>, window_params = [{pipeline_mode = #tpu.pipeline_mode<synchronous>, transform_indices = @transform_0, window_bounds = array<i64: 512, 128>}, {pipeline_mode = #tpu.pipeline_mode<synchronous>, transform_indices = @transform_1, window_bounds = array<i64: 128, 128>}, {pipeline_mode = #tpu.pipeline_mode<synchronous>, transform_indices = @transform_2, window_bounds = array<i64: 1, 128>}, {pipeline_mode = #tpu.pipeline_mode<synchronous>, transform_indices = @transform_3, window_bounds = array<i64: 1, 128>}, {pipeline_mode = #tpu.pipeline_mode<synchronous>, transform_indices = @transform_4, window_bounds = array<i64: 512, 128>}]} {
    %c0 = arith.constant 0 : index
    %c0_0 = arith.constant 0 : index
    %0 = vector.load %arg1[%c0, %c0_0] : memref<512x128xbf16, #tpu.memory_space<vmem>>, vector<512x128xbf16>
    %c0_1 = arith.constant 0 : index
    %c0_2 = arith.constant 0 : index
    %1 = vector.load %arg2[%c0_1, %c0_2] : memref<128x128xbf16, #tpu.memory_space<vmem>>, vector<128x128xbf16>
    %cst = arith.constant dense<0.000000e+00> : vector<512x128xf32>
    %2 = tpu.matmul %0, %1, %cst {dimension_numbers = #tpu.dot_dimension_numbers<[1], [0], [0], [1], [0, 0, 1, 1], [], []>} : vector<512x128xbf16>, vector<128x128xbf16>, vector<512x128xf32> -> vector<512x128xf32>
    %cst_3 = arith.constant dense<0.000000e+00> : vector<128xf32>
    %3 = vector.multi_reduction <add>, %2, %cst_3 [0] : vector<512x128xf32> to vector<128xf32>
    %4 = vector.shape_cast %3 : vector<128xf32> to vector<1x128xf32>
    %cst_4 = arith.constant 0.001953125 : f32
    %5 = vector.broadcast %cst_4 : f32 to vector<1x128xf32>
    %6 = arith.mulf %4, %5 : vector<1x128xf32>
    %7 = vector.broadcast %6 : vector<1x128xf32> to vector<512x128xf32>
    %8 = arith.subf %2, %7 : vector<512x128xf32>
    %9 = arith.mulf %8, %8 : vector<512x128xf32>
    %cst_5 = arith.constant dense<0.000000e+00> : vector<128xf32>
    %10 = vector.multi_reduction <add>, %9, %cst_5 [0] : vector<512x128xf32> to vector<128xf32>
    %11 = vector.shape_cast %10 : vector<128xf32> to vector<1x128xf32>
    %cst_6 = arith.constant 0.001953125 : f32
    %12 = vector.broadcast %cst_6 : f32 to vector<1x128xf32>
    %13 = arith.mulf %11, %12 : vector<1x128xf32>
    %c0_7 = arith.constant 0 : index
    %c0_8 = arith.constant 0 : index
    %14 = vector.load %arg3[%c0_7, %c0_8] : memref<1x128xf32, #tpu.memory_space<vmem>>, vector<1x128xf32>
    %cst_9 = arith.constant 9.99999974E-6 : f32
    %15 = vector.broadcast %cst_9 : f32 to vector<1x128xf32>
    %16 = arith.addf %13, %15 : vector<1x128xf32>
    %17 = math.rsqrt %16 : vector<1x128xf32>
    %18 = arith.mulf %14, %17 : vector<1x128xf32>
    %19 = vector.broadcast %18 : vector<1x128xf32> to vector<512x128xf32>
    %20 = arith.mulf %8, %19 : vector<512x128xf32>
    %c0_10 = arith.constant 0 : index
    %c0_11 = arith.constant 0 : index
    %21 = vector.load %arg4[%c0_10, %c0_11] : memref<1x128xf32, #tpu.memory_space<vmem>>, vector<1x128xf32>
    %22 = vector.broadcast %21 : vector<1x128xf32> to vector<512x128xf32>
    %23 = arith.addf %20, %22 : vector<512x128xf32>
    %cst_12 = arith.constant 0.000000e+00 : f32
    %24 = vector.broadcast %cst_12 : f32 to vector<512x128xf32>
    %25 = arith.cmpf oge, %23, %24 : vector<512x128xf32>
    %cst_13 = arith.constant 2.000000e-01 : f32
    %26 = vector.broadcast %cst_13 : f32 to vector<512x128xf32>
    %27 = arith.mulf %26, %23 : vector<512x128xf32>
    %28 = arith.select %25, %23, %27 : vector<512x128xi1>, vector<512x128xf32>
    %c0_14 = arith.constant 0 : index
    %c0_15 = arith.constant 0 : index
    %29 = vector.load %arg5[%c0_14, %c0_15] : memref<512x128xf32, #tpu.memory_space<vmem>>, vector<512x128xf32>
    tpu.vector_store %arg5[%c0_14, %c0_15], %28 {strides = array<i32>} : memref<512x128xf32, #tpu.memory_space<vmem>>, vector<512x128xf32>,
    return
  }
  func.func @transform_0(%arg0: i32) -> (i32, i32) {
    %c0_i32 = arith.constant 0 : i32
    %c0_i32_0 = arith.constant 0 : i32
    %c0_i32_1 = arith.constant 0 : i32
    return %c0_i32, %c0_i32_0 : i32, i32
  }
  func.func @transform_1(%arg0: i32) -> (i32, i32) {
    %c0_i32 = arith.constant 0 : i32
    %c0_i32_0 = arith.constant 0 : i32
    %c0_i32_1 = arith.constant 0 : i32
    return %c0_i32, %c0_i32_0 : i32, i32
  }
  func.func @transform_2(%arg0: i32) -> (i32, i32) {
    %c0_i32 = arith.constant 0 : i32
    %c0_i32_0 = arith.constant 0 : i32
    %c0_i32_1 = arith.constant 0 : i32
    return %c0_i32, %c0_i32_0 : i32, i32
  }
  func.func @transform_3(%arg0: i32) -> (i32, i32) {
    %c0_i32 = arith.constant 0 : i32
    %c0_i32_0 = arith.constant 0 : i32
    %c0_i32_1 = arith.constant 0 : i32
    return %c0_i32, %c0_i32_0 : i32, i32
  }
  func.func @transform_4(%arg0: i32) -> (i32, i32) {
    %c0_i32 = arith.constant 0 : i32
    %c0_i32_0 = arith.constant 0 : i32
    %c0_i32_1 = arith.constant 0 : i32
    return %c0_i32, %c0_i32_0 : i32, i32
  }
}

module attributes {stable_mosaic.version = 11 : i64} {
  func.func @conv_bn_lrelu_kernel(%arg0: i32, %arg1: memref<128x256xbf16, #tpu.memory_space<vmem>>, %arg2: memref<256x128xbf16, #tpu.memory_space<vmem>>, %arg3: memref<1x128xf32, #tpu.memory_space<vmem>>, %arg4: memref<1x128xf32, #tpu.memory_space<vmem>>, %arg5: memref<128x128xf32, #tpu.memory_space<vmem>>) attributes {dimension_semantics = [#tpu.dimension_semantics<arbitrary>], iteration_bounds = array<i64: 1>, scalar_prefetch = 0 : i64, scratch_operands = 0 : i64, tpu.core_type = #tpu.core_type<tc>, window_params = [{pipeline_mode = #tpu.pipeline_mode<synchronous>, transform_indices = @transform_0, window_bounds = array<i64: 128, 256>}, {pipeline_mode = #tpu.pipeline_mode<synchronous>, transform_indices = @transform_1, window_bounds = array<i64: 256, 128>}, {pipeline_mode = #tpu.pipeline_mode<synchronous>, transform_indices = @transform_2, window_bounds = array<i64: 1, 128>}, {pipeline_mode = #tpu.pipeline_mode<synchronous>, transform_indices = @transform_3, window_bounds = array<i64: 1, 128>}, {pipeline_mode = #tpu.pipeline_mode<synchronous>, transform_indices = @transform_4, window_bounds = array<i64: 128, 128>}]} {
    %c0 = arith.constant 0 : index
    %c0_0 = arith.constant 0 : index
    %0 = vector.load %arg1[%c0, %c0_0] : memref<128x256xbf16, #tpu.memory_space<vmem>>, vector<128x256xbf16>
    %c0_1 = arith.constant 0 : index
    %c0_2 = arith.constant 0 : index
    %1 = vector.load %arg2[%c0_1, %c0_2] : memref<256x128xbf16, #tpu.memory_space<vmem>>, vector<256x128xbf16>
    %cst = arith.constant dense<0.000000e+00> : vector<128x128xf32>
    %2 = tpu.matmul %0, %1, %cst {dimension_numbers = #tpu.dot_dimension_numbers<[1], [0], [0], [1], [0, 0, 1, 1], [], []>} : vector<128x256xbf16>, vector<256x128xbf16>, vector<128x128xf32> -> vector<128x128xf32>
    %cst_3 = arith.constant dense<0.000000e+00> : vector<128xf32>
    %3 = vector.multi_reduction <add>, %2, %cst_3 [0] : vector<128x128xf32> to vector<128xf32>
    %4 = vector.shape_cast %3 : vector<128xf32> to vector<1x128xf32>
    %cst_4 = arith.constant 7.812500e-03 : f32
    %5 = vector.broadcast %cst_4 : f32 to vector<1x128xf32>
    %6 = arith.mulf %4, %5 : vector<1x128xf32>
    %7 = vector.broadcast %6 : vector<1x128xf32> to vector<128x128xf32>
    %8 = arith.subf %2, %7 : vector<128x128xf32>
    %9 = arith.mulf %8, %8 : vector<128x128xf32>
    %cst_5 = arith.constant dense<0.000000e+00> : vector<128xf32>
    %10 = vector.multi_reduction <add>, %9, %cst_5 [0] : vector<128x128xf32> to vector<128xf32>
    %11 = vector.shape_cast %10 : vector<128xf32> to vector<1x128xf32>
    %cst_6 = arith.constant 7.812500e-03 : f32
    %12 = vector.broadcast %cst_6 : f32 to vector<1x128xf32>
    %13 = arith.mulf %11, %12 : vector<1x128xf32>
    %c0_7 = arith.constant 0 : index
    %c0_8 = arith.constant 0 : index
    %14 = vector.load %arg3[%c0_7, %c0_8] : memref<1x128xf32, #tpu.memory_space<vmem>>, vector<1x128xf32>
    %cst_9 = arith.constant 9.99999974E-6 : f32
    %15 = vector.broadcast %cst_9 : f32 to vector<1x128xf32>
    %16 = arith.addf %13, %15 : vector<1x128xf32>
    %17 = math.rsqrt %16 : vector<1x128xf32>
    %18 = arith.mulf %14, %17 : vector<1x128xf32>
    %19 = vector.broadcast %18 : vector<1x128xf32> to vector<128x128xf32>
    %20 = arith.mulf %8, %19 : vector<128x128xf32>
    %c0_10 = arith.constant 0 : index
    %c0_11 = arith.constant 0 : index
    %21 = vector.load %arg4[%c0_10, %c0_11] : memref<1x128xf32, #tpu.memory_space<vmem>>, vector<1x128xf32>
    %22 = vector.broadcast %21 : vector<1x128xf32> to vector<128x128xf32>
    %23 = arith.addf %20, %22 : vector<128x128xf32>
    %cst_12 = arith.constant 0.000000e+00 : f32
    %24 = vector.broadcast %cst_12 : f32 to vector<128x128xf32>
    %25 = arith.cmpf oge, %23, %24 : vector<128x128xf32>
    %cst_13 = arith.constant 2.000000e-01 : f32
    %26 = vector.broadcast %cst_13 : f32 to vector<128x128xf32>
    %27 = arith.mulf %26, %23 : vector<128x128xf32>
    %28 = arith.select %25, %23, %27 : vector<128x128xi1>, vector<128x128xf32>
    %c0_14 = arith.constant 0 : index
    %c0_15 = arith.constant 0 : index
    %29 = vector.load %arg5[%c0_14, %c0_15] : memref<128x128xf32, #tpu.memory_space<vmem>>, vector<128x128xf32>
    tpu.vector_store %arg5[%c0_14, %c0_15], %28 {strides = array<i32>} : memref<128x128xf32, #tpu.memory_space<vmem>>, vector<128x128xf32>,
    return
  }
  func.func @transform_0(%arg0: i32) -> (i32, i32) {
    %c0_i32 = arith.constant 0 : i32
    %c0_i32_0 = arith.constant 0 : i32
    %c0_i32_1 = arith.constant 0 : i32
    return %c0_i32, %c0_i32_0 : i32, i32
  }
  func.func @transform_1(%arg0: i32) -> (i32, i32) {
    %c0_i32 = arith.constant 0 : i32
    %c0_i32_0 = arith.constant 0 : i32
    %c0_i32_1 = arith.constant 0 : i32
    return %c0_i32, %c0_i32_0 : i32, i32
  }
  func.func @transform_2(%arg0: i32) -> (i32, i32) {
    %c0_i32 = arith.constant 0 : i32
    %c0_i32_0 = arith.constant 0 : i32
    %c0_i32_1 = arith.constant 0 : i32
    return %c0_i32, %c0_i32_0 : i32, i32
  }
  func.func @transform_3(%arg0: i32) -> (i32, i32) {
    %c0_i32 = arith.constant 0 : i32
    %c0_i32_0 = arith.constant 0 : i32
    %c0_i32_1 = arith.constant 0 : i32
    return %c0_i32, %c0_i32_0 : i32, i32
  }
  func.func @transform_4(%arg0: i32) -> (i32, i32) {
    %c0_i32 = arith.constant 0 : i32
    %c0_i32_0 = arith.constant 0 : i32
    %c0_i32_1 = arith.constant 0 : i32
    return %c0_i32, %c0_i32_0 : i32, i32
  }
}

module attributes {stable_mosaic.version = 11 : i64} {
  func.func @conv_bn_lrelu_kernel(%arg0: i32, %arg1: memref<32x512xbf16, #tpu.memory_space<vmem>>, %arg2: memref<512x128xbf16, #tpu.memory_space<vmem>>, %arg3: memref<1x128xf32, #tpu.memory_space<vmem>>, %arg4: memref<1x128xf32, #tpu.memory_space<vmem>>, %arg5: memref<32x128xf32, #tpu.memory_space<vmem>>) attributes {dimension_semantics = [#tpu.dimension_semantics<arbitrary>], iteration_bounds = array<i64: 1>, scalar_prefetch = 0 : i64, scratch_operands = 0 : i64, tpu.core_type = #tpu.core_type<tc>, window_params = [{pipeline_mode = #tpu.pipeline_mode<synchronous>, transform_indices = @transform_0, window_bounds = array<i64: 32, 512>}, {pipeline_mode = #tpu.pipeline_mode<synchronous>, transform_indices = @transform_1, window_bounds = array<i64: 512, 128>}, {pipeline_mode = #tpu.pipeline_mode<synchronous>, transform_indices = @transform_2, window_bounds = array<i64: 1, 128>}, {pipeline_mode = #tpu.pipeline_mode<synchronous>, transform_indices = @transform_3, window_bounds = array<i64: 1, 128>}, {pipeline_mode = #tpu.pipeline_mode<synchronous>, transform_indices = @transform_4, window_bounds = array<i64: 32, 128>}]} {
    %c0 = arith.constant 0 : index
    %c0_0 = arith.constant 0 : index
    %0 = vector.load %arg1[%c0, %c0_0] : memref<32x512xbf16, #tpu.memory_space<vmem>>, vector<32x512xbf16>
    %c0_1 = arith.constant 0 : index
    %c0_2 = arith.constant 0 : index
    %1 = vector.load %arg2[%c0_1, %c0_2] : memref<512x128xbf16, #tpu.memory_space<vmem>>, vector<512x128xbf16>
    %cst = arith.constant dense<0.000000e+00> : vector<32x128xf32>
    %2 = tpu.matmul %0, %1, %cst {dimension_numbers = #tpu.dot_dimension_numbers<[1], [0], [0], [1], [0, 0, 1, 1], [], []>} : vector<32x512xbf16>, vector<512x128xbf16>, vector<32x128xf32> -> vector<32x128xf32>
    %cst_3 = arith.constant dense<0.000000e+00> : vector<128xf32>
    %3 = vector.multi_reduction <add>, %2, %cst_3 [0] : vector<32x128xf32> to vector<128xf32>
    %4 = vector.shape_cast %3 : vector<128xf32> to vector<1x128xf32>
    %cst_4 = arith.constant 3.125000e-02 : f32
    %5 = vector.broadcast %cst_4 : f32 to vector<1x128xf32>
    %6 = arith.mulf %4, %5 : vector<1x128xf32>
    %7 = vector.broadcast %6 : vector<1x128xf32> to vector<32x128xf32>
    %8 = arith.subf %2, %7 : vector<32x128xf32>
    %9 = arith.mulf %8, %8 : vector<32x128xf32>
    %cst_5 = arith.constant dense<0.000000e+00> : vector<128xf32>
    %10 = vector.multi_reduction <add>, %9, %cst_5 [0] : vector<32x128xf32> to vector<128xf32>
    %11 = vector.shape_cast %10 : vector<128xf32> to vector<1x128xf32>
    %cst_6 = arith.constant 3.125000e-02 : f32
    %12 = vector.broadcast %cst_6 : f32 to vector<1x128xf32>
    %13 = arith.mulf %11, %12 : vector<1x128xf32>
    %c0_7 = arith.constant 0 : index
    %c0_8 = arith.constant 0 : index
    %14 = vector.load %arg3[%c0_7, %c0_8] : memref<1x128xf32, #tpu.memory_space<vmem>>, vector<1x128xf32>
    %cst_9 = arith.constant 9.99999974E-6 : f32
    %15 = vector.broadcast %cst_9 : f32 to vector<1x128xf32>
    %16 = arith.addf %13, %15 : vector<1x128xf32>
    %17 = math.rsqrt %16 : vector<1x128xf32>
    %18 = arith.mulf %14, %17 : vector<1x128xf32>
    %19 = vector.broadcast %18 : vector<1x128xf32> to vector<32x128xf32>
    %20 = arith.mulf %8, %19 : vector<32x128xf32>
    %c0_10 = arith.constant 0 : index
    %c0_11 = arith.constant 0 : index
    %21 = vector.load %arg4[%c0_10, %c0_11] : memref<1x128xf32, #tpu.memory_space<vmem>>, vector<1x128xf32>
    %22 = vector.broadcast %21 : vector<1x128xf32> to vector<32x128xf32>
    %23 = arith.addf %20, %22 : vector<32x128xf32>
    %cst_12 = arith.constant 0.000000e+00 : f32
    %24 = vector.broadcast %cst_12 : f32 to vector<32x128xf32>
    %25 = arith.cmpf oge, %23, %24 : vector<32x128xf32>
    %cst_13 = arith.constant 2.000000e-01 : f32
    %26 = vector.broadcast %cst_13 : f32 to vector<32x128xf32>
    %27 = arith.mulf %26, %23 : vector<32x128xf32>
    %28 = arith.select %25, %23, %27 : vector<32x128xi1>, vector<32x128xf32>
    %c0_14 = arith.constant 0 : index
    %c0_15 = arith.constant 0 : index
    %29 = vector.load %arg5[%c0_14, %c0_15] : memref<32x128xf32, #tpu.memory_space<vmem>>, vector<32x128xf32>
    tpu.vector_store %arg5[%c0_14, %c0_15], %28 {strides = array<i32>} : memref<32x128xf32, #tpu.memory_space<vmem>>, vector<32x128xf32>,
    return
  }
  func.func @transform_0(%arg0: i32) -> (i32, i32) {
    %c0_i32 = arith.constant 0 : i32
    %c0_i32_0 = arith.constant 0 : i32
    %c0_i32_1 = arith.constant 0 : i32
    return %c0_i32, %c0_i32_0 : i32, i32
  }
  func.func @transform_1(%arg0: i32) -> (i32, i32) {
    %c0_i32 = arith.constant 0 : i32
    %c0_i32_0 = arith.constant 0 : i32
    %c0_i32_1 = arith.constant 0 : i32
    return %c0_i32, %c0_i32_0 : i32, i32
  }
  func.func @transform_2(%arg0: i32) -> (i32, i32) {
    %c0_i32 = arith.constant 0 : i32
    %c0_i32_0 = arith.constant 0 : i32
    %c0_i32_1 = arith.constant 0 : i32
    return %c0_i32, %c0_i32_0 : i32, i32
  }
  func.func @transform_3(%arg0: i32) -> (i32, i32) {
    %c0_i32 = arith.constant 0 : i32
    %c0_i32_0 = arith.constant 0 : i32
    %c0_i32_1 = arith.constant 0 : i32
    return %c0_i32, %c0_i32_0 : i32, i32
  }
  func.func @transform_4(%arg0: i32) -> (i32, i32) {
    %c0_i32 = arith.constant 0 : i32
    %c0_i32_0 = arith.constant 0 : i32
    %c0_i32_1 = arith.constant 0 : i32
    return %c0_i32, %c0_i32_0 : i32, i32
  }
}

module attributes {stable_mosaic.version = 11 : i64} {
  func.func @conv_bn_lrelu_kernel(%arg0: i32, %arg1: memref<2x1024xbf16, #tpu.memory_space<vmem>>, %arg2: memref<1024x128xbf16, #tpu.memory_space<vmem>>, %arg3: memref<1x128xf32, #tpu.memory_space<vmem>>, %arg4: memref<1x128xf32, #tpu.memory_space<vmem>>, %arg5: memref<2x128xf32, #tpu.memory_space<vmem>>) attributes {dimension_semantics = [#tpu.dimension_semantics<arbitrary>], iteration_bounds = array<i64: 1>, scalar_prefetch = 0 : i64, scratch_operands = 0 : i64, tpu.core_type = #tpu.core_type<tc>, window_params = [{pipeline_mode = #tpu.pipeline_mode<synchronous>, transform_indices = @transform_0, window_bounds = array<i64: 2, 1024>}, {pipeline_mode = #tpu.pipeline_mode<synchronous>, transform_indices = @transform_1, window_bounds = array<i64: 1024, 128>}, {pipeline_mode = #tpu.pipeline_mode<synchronous>, transform_indices = @transform_2, window_bounds = array<i64: 1, 128>}, {pipeline_mode = #tpu.pipeline_mode<synchronous>, transform_indices = @transform_3, window_bounds = array<i64: 1, 128>}, {pipeline_mode = #tpu.pipeline_mode<synchronous>, transform_indices = @transform_4, window_bounds = array<i64: 2, 128>}]} {
    %c0 = arith.constant 0 : index
    %c0_0 = arith.constant 0 : index
    %0 = vector.load %arg1[%c0, %c0_0] : memref<2x1024xbf16, #tpu.memory_space<vmem>>, vector<2x1024xbf16>
    %c0_1 = arith.constant 0 : index
    %c0_2 = arith.constant 0 : index
    %1 = vector.load %arg2[%c0_1, %c0_2] : memref<1024x128xbf16, #tpu.memory_space<vmem>>, vector<1024x128xbf16>
    %cst = arith.constant dense<0.000000e+00> : vector<2x128xf32>
    %2 = tpu.matmul %0, %1, %cst {dimension_numbers = #tpu.dot_dimension_numbers<[1], [0], [0], [1], [0, 0, 1, 1], [], []>} : vector<2x1024xbf16>, vector<1024x128xbf16>, vector<2x128xf32> -> vector<2x128xf32>
    %c0_3 = arith.constant 0 : index
    %c0_4 = arith.constant 0 : index
    %3 = vector.load %arg5[%c0_3, %c0_4] : memref<2x128xf32, #tpu.memory_space<vmem>>, vector<2x128xf32>
    tpu.vector_store %arg5[%c0_3, %c0_4], %2 {strides = array<i32>} : memref<2x128xf32, #tpu.memory_space<vmem>>, vector<2x128xf32>,
    return
  }
  func.func @transform_0(%arg0: i32) -> (i32, i32) {
    %c0_i32 = arith.constant 0 : i32
    %c0_i32_0 = arith.constant 0 : i32
    %c0_i32_1 = arith.constant 0 : i32
    return %c0_i32, %c0_i32_0 : i32, i32
  }
  func.func @transform_1(%arg0: i32) -> (i32, i32) {
    %c0_i32 = arith.constant 0 : i32
    %c0_i32_0 = arith.constant 0 : i32
    %c0_i32_1 = arith.constant 0 : i32
    return %c0_i32, %c0_i32_0 : i32, i32
  }
  func.func @transform_2(%arg0: i32) -> (i32, i32) {
    %c0_i32 = arith.constant 0 : i32
    %c0_i32_0 = arith.constant 0 : i32
    %c0_i32_1 = arith.constant 0 : i32
    return %c0_i32, %c0_i32_0 : i32, i32
  }
  func.func @transform_3(%arg0: i32) -> (i32, i32) {
    %c0_i32 = arith.constant 0 : i32
    %c0_i32_0 = arith.constant 0 : i32
    %c0_i32_1 = arith.constant 0 : i32
    return %c0_i32, %c0_i32_0 : i32, i32
  }
  func.func @transform_4(%arg0: i32) -> (i32, i32) {
    %c0_i32 = arith.constant 0 : i32
    %c0_i32_0 = arith.constant 0 : i32
    %c0_i32_1 = arith.constant 0 : i32
    return %c0_i32, %c0_i32_0 : i32, i32
  }
}

</mosaic_0001>

<llo_original>
// kernel: critic_forward.5
$region0: #{critic_forward.5}
  #allocation0 [shape = 'u32[]', space=smem, size = 0x4, offset = 0x4, fixed_abs, tag = 'smem constant byte address 0x4 - core index']
  #allocation1 [shape = 'u32[144,128]{1,0:T(1,128)}', space=vmem, size = 0x12000, scoped, tag = 'internal scratch']
  %s0 = inlined_call_operand.vmem [shape: bf16[2048,64], index: 0, kind: input, shape index: {}]
  %s1 = inlined_call_operand.vmem [shape: bf16[64,128], index: 1, kind: input, shape index: {}]
  %s2 = inlined_call_operand.vmem [shape: f32[1,128], index: 2, kind: input, shape index: {}]
  %s3 = inlined_call_operand.vmem [shape: f32[1,128], index: 3, kind: input, shape index: {}]
  %s4 = inlined_call_operand.vmem [shape: f32[2048,128], index: 4, kind: output, shape index: {}]
  %s5 = sld [smem:[#allocation0]]
  $region26: #{critic_forward.5} parent=0
    _
  %s7 = ssub.s32 1, %s5
  %s8 = scalar_select 0, %s7, %s5
  // Predicated region
  $region2: #{critic_forward.5} parent=0 // pred_check
    _
  $region3: #{critic_forward.5} parent=0 // pred_check_branch
    %10 = sbr.rel (0) target = $region5
  $region4: #{critic_forward.5} parent=0 // pred_region
    _
  $region5: #{critic_forward.5} parent=0 // pred_fallthru
    _
  // Predicated region
  $region6: #{critic_forward.5} parent=0 // pred_check
    _
  $region7: #{critic_forward.5} parent=0 // pred_check_branch
    %12 = sbr.rel (0) target = $region9
  $region8: #{critic_forward.5} parent=0 // pred_region
    _
  $region9: #{critic_forward.5} parent=0 // pred_fallthru
    _
  // Predicated region
  $region10: #{critic_forward.5} parent=0 // pred_check
    _
  $region11: #{critic_forward.5} parent=0 // pred_check_branch
    %14 = sbr.rel (0) target = $region13
  $region12: #{critic_forward.5} parent=0 // pred_region
    _
  $region13: #{critic_forward.5} parent=0 // pred_fallthru
    _
  // Predicated region
  $region14: #{critic_forward.5} parent=0 // pred_check
    _
  $region15: #{critic_forward.5} parent=0 // pred_check_branch
    %16 = sbr.rel (0) target = $region17
  $region16: #{critic_forward.5} parent=0 // pred_region
    _
  $region17: #{critic_forward.5} parent=0 // pred_fallthru
    _
  %v18 = vld [vmem:[%s0] sm:$0xf]
  %v19 = vld [vmem:[%s0 + $0x4] sm:$0xf]
  %v20 = vld [vmem:[%s0 + $0x8] sm:$0xf]
  %v21 = vld [vmem:[%s0 + $0xc] sm:$0xf]
  %v22 = vld [vmem:[%s0 + $0x10] sm:$0xf]
  %v23 = vld [vmem:[%s0 + $0x14] sm:$0xf]
  %v24 = vld [vmem:[%s0 + $0x18] sm:$0xf]
  %v25 = vld [vmem:[%s0 + $0x1c] sm:$0xf]
  %v26 = vld [vmem:[%s0 + $0x20] sm:$0xf]
  %v27 = vld [vmem:[%s0 + $0x24] sm:$0xf]
  %v28 = vld [vmem:[%s0 + $0x28] sm:$0xf]
  %v29 = vld [vmem:[%s0 + $0x2c] sm:$0xf]
  %v30 = vld [vmem:[%s0 + $0x30] sm:$0xf]
  %v31 = vld [vmem:[%s0 + $0x34] sm:$0xf]
  %v32 = vld [vmem:[%s0 + $0x38] sm:$0xf]
  %v33 = vld [vmem:[%s0 + $0x3c] sm:$0xf]
  %v34 = vld [vmem:[%s0 + $0x40] sm:$0xf]
  %v35 = vld [vmem:[%s0 + $0x44] sm:$0xf]
  %v36 = vld [vmem:[%s0 + $0x48] sm:$0xf]
  %v37 = vld [vmem:[%s0 + $0x4c] sm:$0xf]
  %v38 = vld [vmem:[%s0 + $0x50] sm:$0xf]
  %v39 = vld [vmem:[%s0 + $0x54] sm:$0xf]
  %v40 = vld [vmem:[%s0 + $0x58] sm:$0xf]
  %v41 = vld [vmem:[%s0 + $0x5c] sm:$0xf]
  %v42 = vld [vmem:[%s0 + $0x60] sm:$0xf]
  %v43 = vld [vmem:[%s0 + $0x64] sm:$0xf]
  %v44 = vld [vmem:[%s0 + $0x68] sm:$0xf]
  %v45 = vld [vmem:[%s0 + $0x6c] sm:$0xf]
  %v46 = vld [vmem:[%s0 + $0x70] sm:$0xf]
  %v47 = vld [vmem:[%s0 + $0x74] sm:$0xf]
  %v48 = vld [vmem:[%s0 + $0x78] sm:$0xf]
  %v49 = vld [vmem:[%s0 + $0x7c] sm:$0xf]
  %v50 = vld [vmem:[%s0 + $0x80] sm:$0xf]
  %v51 = vld [vmem:[%s0 + $0x84] sm:$0xf]
  %v52 = vld [vmem:[%s0 + $0x88] sm:$0xf]
  %v53 = vld [vmem:[%s0 + $0x8c] sm:$0xf]
  %v54 = vld [vmem:[%s0 + $0x90] sm:$0xf]
  %v55 = vld [vmem:[%s0 + $0x94] sm:$0xf]
  %v56 = vld [vmem:[%s0 + $0x98] sm:$0xf]
  %v57 = vld [vmem:[%s0 + $0x9c] sm:$0xf]
  %v58 = vld [vmem:[%s0 + $0xa0] sm:$0xf]
  %v59 = vld [vmem:[%s0 + $0xa4] sm:$0xf]
  %v60 = vld [vmem:[%s0 + $0xa8] sm:$0xf]
  %v61 = vld [vmem:[%s0 + $0xac] sm:$0xf]
  %v62 = vld [vmem:[%s0 + $0xb0] sm:$0xf]
  %v63 = vld [vmem:[%s0 + $0xb4] sm:$0xf]
  %v64 = vld [vmem:[%s0 + $0xb8] sm:$0xf]
  %v65 = vld [vmem:[%s0 + $0xbc] sm:$0xf]
  %v66 = vld [vmem:[%s0 + $0xc0] sm:$0xf]
  %v67 = vld [vmem:[%s0 + $0xc4] sm:$0xf]
  %v68 = vld [vmem:[%s0 + $0xc8] sm:$0xf]
  %v69 = vld [vmem:[%s0 + $0xcc] sm:$0xf]
  %v70 = vld [vmem:[%s0 + $0xd0] sm:$0xf]
  %v71 = vld [vmem:[%s0 + $0xd4] sm:$0xf]
  %v72 = vld [vmem:[%s0 + $0xd8] sm:$0xf]
  %v73 = vld [vmem:[%s0 + $0xdc] sm:$0xf]
  %v74 = vld [vmem:[%s0 + $0xe0] sm:$0xf]
  %v75 = vld [vmem:[%s0 + $0xe4] sm:$0xf]
  %v76 = vld [vmem:[%s0 + $0xe8] sm:$0xf]
  %v77 = vld [vmem:[%s0 + $0xec] sm:$0xf]
  %v78 = vld [vmem:[%s0 + $0xf0] sm:$0xf]
  %v79 = vld [vmem:[%s0 + $0xf4] sm:$0xf]
  %v80 = vld [vmem:[%s0 + $0xf8] sm:$0xf]
  %v81 = vld [vmem:[%s0 + $0xfc] sm:$0xf]
  %v82 = vld [vmem:[%s0 + $0x100] sm:$0xf]
  %v83 = vld [vmem:[%s0 + $0x104] sm:$0xf]
  %v84 = vld [vmem:[%s0 + $0x108] sm:$0xf]
  %v85 = vld [vmem:[%s0 + $0x10c] sm:$0xf]
  %v86 = vld [vmem:[%s0 + $0x110] sm:$0xf]
  %v87 = vld [vmem:[%s0 + $0x114] sm:$0xf]
  %v88 = vld [vmem:[%s0 + $0x118] sm:$0xf]
  %v89 = vld [vmem:[%s0 + $0x11c] sm:$0xf]
  %v90 = vld [vmem:[%s0 + $0x120] sm:$0xf]
  %v91 = vld [vmem:[%s0 + $0x124] sm:$0xf]
  %v92 = vld [vmem:[%s0 + $0x128] sm:$0xf]
  %v93 = vld [vmem:[%s0 + $0x12c] sm:$0xf]
  %v94 = vld [vmem:[%s0 + $0x130] sm:$0xf]
  %v95 = vld [vmem:[%s0 + $0x134] sm:$0xf]
  %v96 = vld [vmem:[%s0 + $0x138] sm:$0xf]
  %v97 = vld [vmem:[%s0 + $0x13c] sm:$0xf]
  %v98 = vld [vmem:[%s0 + $0x140] sm:$0xf]
  %v99 = vld [vmem:[%s0 + $0x144] sm:$0xf]
  %v100 = vld [vmem:[%s0 + $0x148] sm:$0xf]
  %v101 = vld [vmem:[%s0 + $0x14c] sm:$0xf]
  %v102 = vld [vmem:[%s0 + $0x150] sm:$0xf]
  %v103 = vld [vmem:[%s0 + $0x154] sm:$0xf]
  %v104 = vld [vmem:[%s0 + $0x158] sm:$0xf]
  %v105 = vld [vmem:[%s0 + $0x15c] sm:$0xf]
  %v106 = vld [vmem:[%s0 + $0x160] sm:$0xf]
  %v107 = vld [vmem:[%s0 + $0x164] sm:$0xf]
  %v108 = vld [vmem:[%s0 + $0x168] sm:$0xf]
  %v109 = vld [vmem:[%s0 + $0x16c] sm:$0xf]
  %v110 = vld [vmem:[%s0 + $0x170] sm:$0xf]
  %v111 = vld [vmem:[%s0 + $0x174] sm:$0xf]
  %v112 = vld [vmem:[%s0 + $0x178] sm:$0xf]
  %v113 = vld [vmem:[%s0 + $0x17c] sm:$0xf]
  %v114 = vld [vmem:[%s0 + $0x180] sm:$0xf]
  %v115 = vld [vmem:[%s0 + $0x184] sm:$0xf]
  %v116 = vld [vmem:[%s0 + $0x188] sm:$0xf]
  %v117 = vld [vmem:[%s0 + $0x18c] sm:$0xf]
  %v118 = vld [vmem:[%s0 + $0x190] sm:$0xf]
  %v119 = vld [vmem:[%s0 + $0x194] sm:$0xf]
  %v120 = vld [vmem:[%s0 + $0x198] sm:$0xf]
  %v121 = vld [vmem:[%s0 + $0x19c] sm:$0xf]
  %v122 = vld [vmem:[%s0 + $0x1a0] sm:$0xf]
  %v123 = vld [vmem:[%s0 + $0x1a4] sm:$0xf]
  %v124 = vld [vmem:[%s0 + $0x1a8] sm:$0xf]
  %v125 = vld [vmem:[%s0 + $0x1ac] sm:$0xf]
  %v126 = vld [vmem:[%s0 + $0x1b0] sm:$0xf]
  %v127 = vld [vmem:[%s0 + $0x1b4] sm:$0xf]
  %v128 = vld [vmem:[%s0 + $0x1b8] sm:$0xf]
  %v129 = vld [vmem:[%s0 + $0x1bc] sm:$0xf]
  %v130 = vld [vmem:[%s0 + $0x1c0] sm:$0xf]
  %v131 = vld [vmem:[%s0 + $0x1c4] sm:$0xf]
  %v132 = vld [vmem:[%s0 + $0x1c8] sm:$0xf]
  %v133 = vld [vmem:[%s0 + $0x1cc] sm:$0xf]
  %v134 = vld [vmem:[%s0 + $0x1d0] sm:$0xf]
  %v135 = vld [vmem:[%s0 + $0x1d4] sm:$0xf]
  %v136 = vld [vmem:[%s0 + $0x1d8] sm:$0xf]
  %v137 = vld [vmem:[%s0 + $0x1dc] sm:$0xf]
  %v138 = vld [vmem:[%s0 + $0x1e0] sm:$0xf]
  %v139 = vld [vmem:[%s0 + $0x1e4] sm:$0xf]
  %v140 = vld [vmem:[%s0 + $0x1e8] sm:$0xf]
  %v141 = vld [vmem:[%s0 + $0x1ec] sm:$0xf]
  %v142 = vld [vmem:[%s0 + $0x1f0] sm:$0xf]
  %v143 = vld [vmem:[%s0 + $0x1f4] sm:$0xf]
  %v144 = vld [vmem:[%s0 + $0x1f8] sm:$0xf]
  %v145 = vld [vmem:[%s0 + $0x1fc] sm:$0xf]
  %v146 = vld [vmem:[%s0 + $0x200] sm:$0xf]
  %v147 = vld [vmem:[%s0 + $0x204] sm:$0xf]
  %v148 = vld [vmem:[%s0 + $0x208] sm:$0xf]
  %v149 = vld [vmem:[%s0 + $0x20c] sm:$0xf]
  %v150 = vld [vmem:[%s0 + $0x210] sm:$0xf]
  %v151 = vld [vmem:[%s0 + $0x214] sm:$0xf]
  %v152 = vld [vmem:[%s0 + $0x218] sm:$0xf]
  %v153 = vld [vmem:[%s0 + $0x21c] sm:$0xf]
  %v154 = vld [vmem:[%s0 + $0x220] sm:$0xf]
  %v155 = vld [vmem:[%s0 + $0x224] sm:$0xf]
  %v156 = vld [vmem:[%s0 + $0x228] sm:$0xf]
  %v157 = vld [vmem:[%s0 + $0x22c] sm:$0xf]
  %v158 = vld [vmem:[%s0 + $0x230] sm:$0xf]
  %v159 = vld [vmem:[%s0 + $0x234] sm:$0xf]
  %v160 = vld [vmem:[%s0 + $0x238] sm:$0xf]
  %v161 = vld [vmem:[%s0 + $0x23c] sm:$0xf]
  %v162 = vld [vmem:[%s0 + $0x240] sm:$0xf]
  %v163 = vld [vmem:[%s0 + $0x244] sm:$0xf]
  %v164 = vld [vmem:[%s0 + $0x248] sm:$0xf]
  %v165 = vld [vmem:[%s0 + $0x24c] sm:$0xf]
  %v166 = vld [vmem:[%s0 + $0x250] sm:$0xf]
  %v167 = vld [vmem:[%s0 + $0x254] sm:$0xf]
  %v168 = vld [vmem:[%s0 + $0x258] sm:$0xf]
  %v169 = vld [vmem:[%s0 + $0x25c] sm:$0xf]
  %v170 = vld [vmem:[%s0 + $0x260] sm:$0xf]
  %v171 = vld [vmem:[%s0 + $0x264] sm:$0xf]
  %v172 = vld [vmem:[%s0 + $0x268] sm:$0xf]
  %v173 = vld [vmem:[%s0 + $0x26c] sm:$0xf]
  %v174 = vld [vmem:[%s0 + $0x270] sm:$0xf]
  %v175 = vld [vmem:[%s0 + $0x274] sm:$0xf]
  %v176 = vld [vmem:[%s0 + $0x278] sm:$0xf]
  %v177 = vld [vmem:[%s0 + $0x27c] sm:$0xf]
  %v178 = vld [vmem:[%s0 + $0x280] sm:$0xf]
  %v179 = vld [vmem:[%s0 + $0x284] sm:$0xf]
  %v180 = vld [vmem:[%s0 + $0x288] sm:$0xf]
  %v181 = vld [vmem:[%s0 + $0x28c] sm:$0xf]
  %v182 = vld [vmem:[%s0 + $0x290] sm:$0xf]
  %v183 = vld [vmem:[%s0 + $0x294] sm:$0xf]
  %v184 = vld [vmem:[%s0 + $0x298] sm:$0xf]
  %v185 = vld [vmem:[%s0 + $0x29c] sm:$0xf]
  %v186 = vld [vmem:[%s0 + $0x2a0] sm:$0xf]
  %v187 = vld [vmem:[%s0 + $0x2a4] sm:$0xf]
  %v188 = vld [vmem:[%s0 + $0x2a8] sm:$0xf]
  %v189 = vld [vmem:[%s0 + $0x2ac] sm:$0xf]
  %v190 = vld [vmem:[%s0 + $0x2b0] sm:$0xf]
  %v191 = vld [vmem:[%s0 + $0x2b4] sm:$0xf]
  %v192 = vld [vmem:[%s0 + $0x2b8] sm:$0xf]
  %v193 = vld [vmem:[%s0 + $0x2bc] sm:$0xf]
  %v194 = vld [vmem:[%s0 + $0x2c0] sm:$0xf]
  %v195 = vld [vmem:[%s0 + $0x2c4] sm:$0xf]
  %v196 = vld [vmem:[%s0 + $0x2c8] sm:$0xf]
  %v197 = vld [vmem:[%s0 + $0x2cc] sm:$0xf]
  %v198 = vld [vmem:[%s0 + $0x2d0] sm:$0xf]
  %v199 = vld [vmem:[%s0 + $0x2d4] sm:$0xf]
  %v200 = vld [vmem:[%s0 + $0x2d8] sm:$0xf]
  %v201 = vld [vmem:[%s0 + $0x2dc] sm:$0xf]
  %v202 = vld [vmem:[%s0 + $0x2e0] sm:$0xf]
  %v203 = vld [vmem:[%s0 + $0x2e4] sm:$0xf]
  %v204 = vld [vmem:[%s0 + $0x2e8] sm:$0xf]
  %v205 = vld [vmem:[%s0 + $0x2ec] sm:$0xf]
  %v206 = vld [vmem:[%s0 + $0x2f0] sm:$0xf]
  %v207 = vld [vmem:[%s0 + $0x2f4] sm:$0xf]
  %v208 = vld [vmem:[%s0 + $0x2f8] sm:$0xf]
  %v209 = vld [vmem:[%s0 + $0x2fc] sm:$0xf]
  %v210 = vld [vmem:[%s0 + $0x300] sm:$0xf]
  %v211 = vld [vmem:[%s0 + $0x304] sm:$0xf]
  %v212 = vld [vmem:[%s0 + $0x308] sm:$0xf]
  %v213 = vld [vmem:[%s0 + $0x30c] sm:$0xf]
  %v214 = vld [vmem:[%s0 + $0x310] sm:$0xf]
  %v215 = vld [vmem:[%s0 + $0x314] sm:$0xf]
  %v216 = vld [vmem:[%s0 + $0x318] sm:$0xf]
  %v217 = vld [vmem:[%s0 + $0x31c] sm:$0xf]
  %v218 = vld [vmem:[%s0 + $0x320] sm:$0xf]
  %v219 = vld [vmem:[%s0 + $0x324] sm:$0xf]
  %v220 = vld [vmem:[%s0 + $0x328] sm:$0xf]
  %v221 = vld [vmem:[%s0 + $0x32c] sm:$0xf]
  %v222 = vld [vmem:[%s0 + $0x330] sm:$0xf]
  %v223 = vld [vmem:[%s0 + $0x334] sm:$0xf]
  %v224 = vld [vmem:[%s0 + $0x338] sm:$0xf]
  %v225 = vld [vmem:[%s0 + $0x33c] sm:$0xf]
  %v226 = vld [vmem:[%s0 + $0x340] sm:$0xf]
  %v227 = vld [vmem:[%s0 + $0x344] sm:$0xf]
  %v228 = vld [vmem:[%s0 + $0x348] sm:$0xf]
  %v229 = vld [vmem:[%s0 + $0x34c] sm:$0xf]
  %v230 = vld [vmem:[%s0 + $0x350] sm:$0xf]
  %v231 = vld [vmem:[%s0 + $0x354] sm:$0xf]
  %v232 = vld [vmem:[%s0 + $0x358] sm:$0xf]
  %v233 = vld [vmem:[%s0 + $0x35c] sm:$0xf]
  %v234 = vld [vmem:[%s0 + $0x360] sm:$0xf]
  %v235 = vld [vmem:[%s0 + $0x364] sm:$0xf]
  %v236 = vld [vmem:[%s0 + $0x368] sm:$0xf]
  %v237 = vld [vmem:[%s0 + $0x36c] sm:$0xf]
  %v238 = vld [vmem:[%s0 + $0x370] sm:$0xf]
  %v239 = vld [vmem:[%s0 + $0x374] sm:$0xf]
  %v240 = vld [vmem:[%s0 + $0x378] sm:$0xf]
  %v241 = vld [vmem:[%s0 + $0x37c] sm:$0xf]
  %v242 = vld [vmem:[%s0 + $0x380] sm:$0xf]
  %v243 = vld [vmem:[%s0 + $0x384] sm:$0xf]
  %v244 = vld [vmem:[%s0 + $0x388] sm:$0xf]
  %v245 = vld [vmem:[%s0 + $0x38c] sm:$0xf]
  %v246 = vld [vmem:[%s0 + $0x390] sm:$0xf]
  %v247 = vld [vmem:[%s0 + $0x394] sm:$0xf]
  %v248 = vld [vmem:[%s0 + $0x398] sm:$0xf]
  %v249 = vld [vmem:[%s0 + $0x39c] sm:$0xf]
  %v250 = vld [vmem:[%s0 + $0x3a0] sm:$0xf]
  %v251 = vld [vmem:[%s0 + $0x3a4] sm:$0xf]
  %v252 = vld [vmem:[%s0 + $0x3a8] sm:$0xf]
  %v253 = vld [vmem:[%s0 + $0x3ac] sm:$0xf]
  %v254 = vld [vmem:[%s0 + $0x3b0] sm:$0xf]
  %v255 = vld [vmem:[%s0 + $0x3b4] sm:$0xf]
  %v256 = vld [vmem:[%s0 + $0x3b8] sm:$0xf]
  %v257 = vld [vmem:[%s0 + $0x3bc] sm:$0xf]
  %v258 = vld [vmem:[%s0 + $0x3c0] sm:$0xf]
  %v259 = vld [vmem:[%s0 + $0x3c4] sm:$0xf]
  %v260 = vld [vmem:[%s0 + $0x3c8] sm:$0xf]
  %v261 = vld [vmem:[%s0 + $0x3cc] sm:$0xf]
  %v262 = vld [vmem:[%s0 + $0x3d0] sm:$0xf]
  %v263 = vld [vmem:[%s0 + $0x3d4] sm:$0xf]
  %v264 = vld [vmem:[%s0 + $0x3d8] sm:$0xf]
  %v265 = vld [vmem:[%s0 + $0x3dc] sm:$0xf]
  %v266 = vld [vmem:[%s0 + $0x3e0] sm:$0xf]
  %v267 = vld [vmem:[%s0 + $0x3e4] sm:$0xf]
  %v268 = vld [vmem:[%s0 + $0x3e8] sm:$0xf]
  %v269 = vld [vmem:[%s0 + $0x3ec] sm:$0xf]
  %v270 = vld [vmem:[%s0 + $0x3f0] sm:$0xf]
  %v271 = vld [vmem:[%s0 + $0x3f4] sm:$0xf]
  %v272 = vld [vmem:[%s0 + $0x3f8] sm:$0xf]
  %v273 = vld [vmem:[%s0 + $0x3fc] sm:$0xf]
  %v274 = vld [vmem:[%s1] sm:$0xf]
  %v275 = vld [vmem:[%s1 + $0x4] sm:$0xf]
  %v276 = vld [vmem:[%s1 + $0x8] sm:$0xf]
  %v277 = vld [vmem:[%s1 + $0xc] sm:$0xf]
  %v278 = vld [vmem:[%s1 + $0x10] sm:$0xf]
  %v279 = vld [vmem:[%s1 + $0x14] sm:$0xf]
  %v280 = vld [vmem:[%s1 + $0x18] sm:$0xf]
  %v281 = vld [vmem:[%s1 + $0x1c] sm:$0xf]
  %v538 = vunpack.c.l.b16 %v18
  %v539 = vunpack.c.l.b16 %v19
  %v540 = vunpack.c.l.b16 %v20
  %v541 = vunpack.c.l.b16 %v21
  %v542 = vunpack.c.l.b16 %v22
  %v543 = vunpack.c.l.b16 %v23
  %v544 = vunpack.c.l.b16 %v24
  %v545 = vunpack.c.l.b16 %v25
  %v546 = vunpack.c.l.b16 %v26
  %v547 = vunpack.c.l.b16 %v27
  %v548 = vunpack.c.l.b16 %v28
  %v549 = vunpack.c.l.b16 %v29
  %v550 = vunpack.c.l.b16 %v30
  %v551 = vunpack.c.l.b16 %v31
  %v552 = vunpack.c.l.b16 %v32
  %v553 = vunpack.c.l.b16 %v33
  %v554 = vunpack.c.l.b16 %v34
  %v555 = vunpack.c.l.b16 %v35
  %v556 = vunpack.c.l.b16 %v36
  %v557 = vunpack.c.l.b16 %v37
  %v558 = vunpack.c.l.b16 %v38
  %v559 = vunpack.c.l.b16 %v39
  %v560 = vunpack.c.l.b16 %v40
  %v561 = vunpack.c.l.b16 %v41
  %v562 = vunpack.c.l.b16 %v42
  %v563 = vunpack.c.l.b16 %v43
  %v564 = vunpack.c.l.b16 %v44
  %v565 = vunpack.c.l.b16 %v45
  %v566 = vunpack.c.l.b16 %v46
  %v567 = vunpack.c.l.b16 %v47
  %v568 = vunpack.c.l.b16 %v48
  %v569 = vunpack.c.l.b16 %v49
  %v570 = vunpack.c.l.b16 %v50
  %v571 = vunpack.c.l.b16 %v51
  %v572 = vunpack.c.l.b16 %v52
  %v573 = vunpack.c.l.b16 %v53
  %v574 = vunpack.c.l.b16 %v54
  %v575 = vunpack.c.l.b16 %v55
  %v576 = vunpack.c.l.b16 %v56
  %v577 = vunpack.c.l.b16 %v57
  %v578 = vunpack.c.l.b16 %v58
  %v579 = vunpack.c.l.b16 %v59
  %v580 = vunpack.c.l.b16 %v60
  %v581 = vunpack.c.l.b16 %v61
  %v582 = vunpack.c.l.b16 %v62
  %v583 = vunpack.c.l.b16 %v63
  %v584 = vunpack.c.l.b16 %v64
  %v585 = vunpack.c.l.b16 %v65
  %v586 = vunpack.c.l.b16 %v66
  %v587 = vunpack.c.l.b16 %v67
  %v588 = vunpack.c.l.b16 %v68
  %v589 = vunpack.c.l.b16 %v69
  %v590 = vunpack.c.l.b16 %v70
  %v591 = vunpack.c.l.b16 %v71
  %v592 = vunpack.c.l.b16 %v72
  %v593 = vunpack.c.l.b16 %v73
  %v594 = vunpack.c.l.b16 %v74
  %v595 = vunpack.c.l.b16 %v75
  %v596 = vunpack.c.l.b16 %v76
  %v597 = vunpack.c.l.b16 %v77
  %v598 = vunpack.c.l.b16 %v78
  %v599 = vunpack.c.l.b16 %v79
  %v600 = vunpack.c.l.b16 %v80
  %v601 = vunpack.c.l.b16 %v81
  %v602 = vunpack.c.l.b16 %v82
  %v603 = vunpack.c.l.b16 %v83
  %v604 = vunpack.c.l.b16 %v84
  %v605 = vunpack.c.l.b16 %v85
  %v606 = vunpack.c.l.b16 %v86
  %v607 = vunpack.c.l.b16 %v87
  %v608 = vunpack.c.l.b16 %v88
  %v609 = vunpack.c.l.b16 %v89
  %v610 = vunpack.c.l.b16 %v90
  %v611 = vunpack.c.l.b16 %v91
  %v612 = vunpack.c.l.b16 %v92
  %v613 = vunpack.c.l.b16 %v93
  %v614 = vunpack.c.l.b16 %v94
  %v615 = vunpack.c.l.b16 %v95
  %v616 = vunpack.c.l.b16 %v96
  %v617 = vunpack.c.l.b16 %v97
  %v618 = vunpack.c.l.b16 %v98
  %v619 = vunpack.c.l.b16 %v99
  %v620 = vunpack.c.l.b16 %v100
  %v621 = vunpack.c.l.b16 %v101
  %v622 = vunpack.c.l.b16 %v102
  %v623 = vunpack.c.l.b16 %v103
  %v624 = vunpack.c.l.b16 %v104
  %v625 = vunpack.c.l.b16 %v105
  %v626 = vunpack.c.l.b16 %v106
  %v627 = vunpack.c.l.b16 %v107
  %v628 = vunpack.c.l.b16 %v108
  %v629 = vunpack.c.l.b16 %v109
  %v630 = vunpack.c.l.b16 %v110
  %v631 = vunpack.c.l.b16 %v111
  %v632 = vunpack.c.l.b16 %v112
  %v633 = vunpack.c.l.b16 %v113
  %v634 = vunpack.c.l.b16 %v114
  %v635 = vunpack.c.l.b16 %v115
  %v636 = vunpack.c.l.b16 %v116
  %v637 = vunpack.c.l.b16 %v117
  %v638 = vunpack.c.l.b16 %v118
  %v639 = vunpack.c.l.b16 %v119
  %v640 = vunpack.c.l.b16 %v120
  %v641 = vunpack.c.l.b16 %v121
  %v642 = vunpack.c.l.b16 %v122
  %v643 = vunpack.c.l.b16 %v123
  %v644 = vunpack.c.l.b16 %v124
  %v645 = vunpack.c.l.b16 %v125
  %v646 = vunpack.c.l.b16 %v126
  %v647 = vunpack.c.l.b16 %v127
  %v648 = vunpack.c.l.b16 %v128
  %v649 = vunpack.c.l.b16 %v129
  %v650 = vunpack.c.l.b16 %v130
  %v651 = vunpack.c.l.b16 %v131
  %v652 = vunpack.c.l.b16 %v132
  %v653 = vunpack.c.l.b16 %v133
  %v654 = vunpack.c.l.b16 %v134
  %v655 = vunpack.c.l.b16 %v135
  %v656 = vunpack.c.l.b16 %v136
  %v657 = vunpack.c.l.b16 %v137
  %v658 = vunpack.c.l.b16 %v138
  %v659 = vunpack.c.l.b16 %v139
  %v660 = vunpack.c.l.b16 %v140
  %v661 = vunpack.c.l.b16 %v141
  %v662 = vunpack.c.l.b16 %v142
  %v663 = vunpack.c.l.b16 %v143
  %v664 = vunpack.c.l.b16 %v144
  %v665 = vunpack.c.l.b16 %v145
  %v666 = vunpack.c.l.b16 %v146
  %v667 = vunpack.c.l.b16 %v147
  %v668 = vunpack.c.l.b16 %v148
  %v669 = vunpack.c.l.b16 %v149
  %v670 = vunpack.c.l.b16 %v150
  %v671 = vunpack.c.l.b16 %v151
  %v672 = vunpack.c.l.b16 %v152
  %v673 = vunpack.c.l.b16 %v153
  %v674 = vunpack.c.l.b16 %v154
  %v675 = vunpack.c.l.b16 %v155
  %v676 = vunpack.c.l.b16 %v156
  %v677 = vunpack.c.l.b16 %v157
  %v678 = vunpack.c.l.b16 %v158
  %v679 = vunpack.c.l.b16 %v159
  %v680 = vunpack.c.l.b16 %v160
  %v681 = vunpack.c.l.b16 %v161
  %v682 = vunpack.c.l.b16 %v162
  %v683 = vunpack.c.l.b16 %v163
  %v684 = vunpack.c.l.b16 %v164
  %v685 = vunpack.c.l.b16 %v165
  %v686 = vunpack.c.l.b16 %v166
  %v687 = vunpack.c.l.b16 %v167
  %v688 = vunpack.c.l.b16 %v168
  %v689 = vunpack.c.l.b16 %v169
  %v690 = vunpack.c.l.b16 %v170
  %v691 = vunpack.c.l.b16 %v171
  %v692 = vunpack.c.l.b16 %v172
  %v693 = vunpack.c.l.b16 %v173
  %v694 = vunpack.c.l.b16 %v174
  %v695 = vunpack.c.l.b16 %v175
  %v696 = vunpack.c.l.b16 %v176
  %v697 = vunpack.c.l.b16 %v177
  %v698 = vunpack.c.l.b16 %v178
  %v699 = vunpack.c.l.b16 %v179
  %v700 = vunpack.c.l.b16 %v180
  %v701 = vunpack.c.l.b16 %v181
  %v702 = vunpack.c.l.b16 %v182
  %v703 = vunpack.c.l.b16 %v183
  %v704 = vunpack.c.l.b16 %v184
  %v705 = vunpack.c.l.b16 %v185
  %v706 = vunpack.c.l.b16 %v186
  %v707 = vunpack.c.l.b16 %v187
  %v708 = vunpack.c.l.b16 %v188
  %v709 = vunpack.c.l.b16 %v189
  %v710 = vunpack.c.l.b16 %v190
  %v711 = vunpack.c.l.b16 %v191
  %v712 = vunpack.c.l.b16 %v192
  %v713 = vunpack.c.l.b16 %v193
  %v714 = vunpack.c.l.b16 %v194
  %v715 = vunpack.c.l.b16 %v195
  %v716 = vunpack.c.l.b16 %v196
  %v717 = vunpack.c.l.b16 %v197
  %v718 = vunpack.c.l.b16 %v198
  %v719 = vunpack.c.l.b16 %v199
  %v720 = vunpack.c.l.b16 %v200
  %v721 = vunpack.c.l.b16 %v201
  %v722 = vunpack.c.l.b16 %v202
  %v723 = vunpack.c.l.b16 %v203
  %v724 = vunpack.c.l.b16 %v204
  %v725 = vunpack.c.l.b16 %v205
  %v726 = vunpack.c.l.b16 %v206
  %v727 = vunpack.c.l.b16 %v207
  %v728 = vunpack.c.l.b16 %v208
  %v729 = vunpack.c.l.b16 %v209
  %v730 = vunpack.c.l.b16 %v210
  %v731 = vunpack.c.l.b16 %v211
  %v732 = vunpack.c.l.b16 %v212
  %v733 = vunpack.c.l.b16 %v213
  %v734 = vunpack.c.l.b16 %v214
  %v735 = vunpack.c.l.b16 %v215
  %v736 = vunpack.c.l.b16 %v216
  %v737 = vunpack.c.l.b16 %v217
  %v738 = vunpack.c.l.b16 %v218
  %v739 = vunpack.c.l.b16 %v219
  %v740 = vunpack.c.l.b16 %v220
  %v741 = vunpack.c.l.b16 %v221
  %v742 = vunpack.c.l.b16 %v222
  %v743 = vunpack.c.l.b16 %v223
  %v744 = vunpack.c.l.b16 %v224
  %v745 = vunpack.c.l.b16 %v225
  %v746 = vunpack.c.l.b16 %v226
  %v747 = vunpack.c.l.b16 %v227
  %v748 = vunpack.c.l.b16 %v228
  %v749 = vunpack.c.l.b16 %v229
  %v750 = vunpack.c.l.b16 %v230
  %v751 = vunpack.c.l.b16 %v231
  %v752 = vunpack.c.l.b16 %v232
  %v753 = vunpack.c.l.b16 %v233
  %v754 = vunpack.c.l.b16 %v234
  %v755 = vunpack.c.l.b16 %v235
  %v756 = vunpack.c.l.b16 %v236
  %v757 = vunpack.c.l.b16 %v237
  %v758 = vunpack.c.l.b16 %v238
  %v759 = vunpack.c.l.b16 %v239
  %v760 = vunpack.c.l.b16 %v240
  %v761 = vunpack.c.l.b16 %v241
  %v762 = vunpack.c.l.b16 %v242
  %v763 = vunpack.c.l.b16 %v243
  %v764 = vunpack.c.l.b16 %v244
  %v765 = vunpack.c.l.b16 %v245
  %v766 = vunpack.c.l.b16 %v246
  %v767 = vunpack.c.l.b16 %v247
  %v768 = vunpack.c.l.b16 %v248
  %v769 = vunpack.c.l.b16 %v249
  %v770 = vunpack.c.l.b16 %v250
  %v771 = vunpack.c.l.b16 %v251
  %v772 = vunpack.c.l.b16 %v252
  %v773 = vunpack.c.l.b16 %v253
  %v774 = vunpack.c.l.b16 %v254
  %v775 = vunpack.c.l.b16 %v255
  %v776 = vunpack.c.l.b16 %v256
  %v777 = vunpack.c.l.b16 %v257
  %v778 = vunpack.c.l.b16 %v258
  %v779 = vunpack.c.l.b16 %v259
  %v780 = vunpack.c.l.b16 %v260
  %v781 = vunpack.c.l.b16 %v261
  %v782 = vunpack.c.l.b16 %v262
  %v783 = vunpack.c.l.b16 %v263
  %v784 = vunpack.c.l.b16 %v264
  %v785 = vunpack.c.l.b16 %v265
  %v786 = vunpack.c.l.b16 %v266
  %v787 = vunpack.c.l.b16 %v267
  %v788 = vunpack.c.l.b16 %v268
  %v789 = vunpack.c.l.b16 %v269
  %v790 = vunpack.c.l.b16 %v270
  %v791 = vunpack.c.l.b16 %v271
  %v792 = vunpack.c.l.b16 %v272
  %v793 = vunpack.c.l.b16 %v273
  %v794 = vpack.c.b16 %v539, %v538
  %v795 = vpack.c.b16 %v541, %v540
  %v796 = vpack.c.b16 %v543, %v542
  %v797 = vpack.c.b16 %v545, %v544
  %v798 = vpack.c.b16 %v547, %v546
  %v799 = vpack.c.b16 %v549, %v548
  %v800 = vpack.c.b16 %v551, %v550
  %v801 = vpack.c.b16 %v553, %v552
  %v802 = vpack.c.b16 %v555, %v554
  %v803 = vpack.c.b16 %v557, %v556
  %v804 = vpack.c.b16 %v559, %v558
  %v805 = vpack.c.b16 %v561, %v560
  %v806 = vpack.c.b16 %v563, %v562
  %v807 = vpack.c.b16 %v565, %v564
  %v808 = vpack.c.b16 %v567, %v566
  %v809 = vpack.c.b16 %v569, %v568
  %v810 = vpack.c.b16 %v571, %v570
  %v811 = vpack.c.b16 %v573, %v572
  %v812 = vpack.c.b16 %v575, %v574
  %v813 = vpack.c.b16 %v577, %v576
  %v814 = vpack.c.b16 %v579, %v578
  %v815 = vpack.c.b16 %v581, %v580
  %v816 = vpack.c.b16 %v583, %v582
  %v817 = vpack.c.b16 %v585, %v584
  %v818 = vpack.c.b16 %v587, %v586
  %v819 = vpack.c.b16 %v589, %v588
  %v820 = vpack.c.b16 %v591, %v590
  %v821 = vpack.c.b16 %v593, %v592
  %v822 = vpack.c.b16 %v595, %v594
  %v823 = vpack.c.b16 %v597, %v596
  %v824 = vpack.c.b16 %v599, %v598
  %v825 = vpack.c.b16 %v601, %v600
  %v826 = vpack.c.b16 %v603, %v602
  %v827 = vpack.c.b16 %v605, %v604
  %v828 = vpack.c.b16 %v607, %v606
  %v829 = vpack.c.b16 %v609, %v608
  %v830 = vpack.c.b16 %v611, %v610
  %v831 = vpack.c.b16 %v613, %v612
  %v832 = vpack.c.b16 %v615, %v614
  %v833 = vpack.c.b16 %v617, %v616
  %v834 = vpack.c.b16 %v619, %v618
  %v835 = vpack.c.b16 %v621, %v620
  %v836 = vpack.c.b16 %v623, %v622
  %v837 = vpack.c.b16 %v625, %v624
  %v838 = vpack.c.b16 %v627, %v626
  %v839 = vpack.c.b16 %v629, %v628
  %v840 = vpack.c.b16 %v631, %v630
  %v841 = vpack.c.b16 %v633, %v632
  %v842 = vpack.c.b16 %v635, %v634
  %v843 = vpack.c.b16 %v637, %v636
  %v844 = vpack.c.b16 %v639, %v638
  %v845 = vpack.c.b16 %v641, %v640
  %v846 = vpack.c.b16 %v643, %v642
  %v847 = vpack.c.b16 %v645, %v644
  %v848 = vpack.c.b16 %v647, %v646
  %v849 = vpack.c.b16 %v649, %v648
  %v850 = vpack.c.b16 %v651, %v650
  %v851 = vpack.c.b16 %v653, %v652
  %v852 = vpack.c.b16 %v655, %v654
  %v853 = vpack.c.b16 %v657, %v656
  %v854 = vpack.c.b16 %v659, %v658
  %v855 = vpack.c.b16 %v661, %v660
  %v856 = vpack.c.b16 %v663, %v662
  %v857 = vpack.c.b16 %v665, %v664
  %v858 = vpack.c.b16 %v667, %v666
  %v859 = vpack.c.b16 %v669, %v668
  %v860 = vpack.c.b16 %v671, %v670
  %v861 = vpack.c.b16 %v673, %v672
  %v862 = vpack.c.b16 %v675, %v674
  %v863 = vpack.c.b16 %v677, %v676
  %v864 = vpack.c.b16 %v679, %v678
  %v865 = vpack.c.b16 %v681, %v680
  %v866 = vpack.c.b16 %v683, %v682
  %v867 = vpack.c.b16 %v685, %v684
  %v868 = vpack.c.b16 %v687, %v686
  %v869 = vpack.c.b16 %v689, %v688
  %v870 = vpack.c.b16 %v691, %v690
  %v871 = vpack.c.b16 %v693, %v692
  %v872 = vpack.c.b16 %v695, %v694
  %v873 = vpack.c.b16 %v697, %v696
  %v874 = vpack.c.b16 %v699, %v698
  %v875 = vpack.c.b16 %v701, %v700
  %v876 = vpack.c.b16 %v703, %v702
  %v877 = vpack.c.b16 %v705, %v704
  %v878 = vpack.c.b16 %v707, %v706
  %v879 = vpack.c.b16 %v709, %v708
  %v880 = vpack.c.b16 %v711, %v710
  %v881 = vpack.c.b16 %v713, %v712
  %v882 = vpack.c.b16 %v715, %v714
  %v883 = vpack.c.b16 %v717, %v716
  %v884 = vpack.c.b16 %v719, %v718
  %v885 = vpack.c.b16 %v721, %v720
  %v886 = vpack.c.b16 %v723, %v722
  %v887 = vpack.c.b16 %v725, %v724
  %v888 = vpack.c.b16 %v727, %v726
  %v889 = vpack.c.b16 %v729, %v728
  %v890 = vpack.c.b16 %v731, %v730
  %v891 = vpack.c.b16 %v733, %v732
  %v892 = vpack.c.b16 %v735, %v734
  %v893 = vpack.c.b16 %v737, %v736
  %v894 = vpack.c.b16 %v739, %v738
  %v895 = vpack.c.b16 %v741, %v740
  %v896 = vpack.c.b16 %v743, %v742
  %v897 = vpack.c.b16 %v745, %v744
  %v898 = vpack.c.b16 %v747, %v746
  %v899 = vpack.c.b16 %v749, %v748
  %v900 = vpack.c.b16 %v751, %v750
  %v901 = vpack.c.b16 %v753, %v752
  %v902 = vpack.c.b16 %v755, %v754
  %v903 = vpack.c.b16 %v757, %v756
  %v904 = vpack.c.b16 %v759, %v758
  %v905 = vpack.c.b16 %v761, %v760
  %v906 = vpack.c.b16 %v763, %v762
  %v907 = vpack.c.b16 %v765, %v764
  %v908 = vpack.c.b16 %v767, %v766
  %v909 = vpack.c.b16 %v769, %v768
  %v910 = vpack.c.b16 %v771, %v770
  %v911 = vpack.c.b16 %v773, %v772
  %v912 = vpack.c.b16 %v775, %v774
  %v913 = vpack.c.b16 %v777, %v776
  %v914 = vpack.c.b16 %v779, %v778
  %v915 = vpack.c.b16 %v781, %v780
  %v916 = vpack.c.b16 %v783, %v782
  %v917 = vpack.c.b16 %v785, %v784
  %v918 = vpack.c.b16 %v787, %v786
  %v919 = vpack.c.b16 %v789, %v788
  %v920 = vpack.c.b16 %v791, %v790
  %v921 = vpack.c.b16 %v793, %v792
  %v930 = vunpack.c.l.b16 %v274
  %v931 = vunpack.c.l.b16 %v275
  %v932 = vunpack.c.l.b16 %v276
  %v933 = vunpack.c.l.b16 %v277
  %v934 = vunpack.c.l.b16 %v278
  %v935 = vunpack.c.l.b16 %v279
  %v936 = vunpack.c.l.b16 %v280
  %v937 = vunpack.c.l.b16 %v281
  %v938 = vpack.c.b16 %v931, %v930
  %v939 = vpack.c.b16 %v933, %v932
  %v940 = vpack.c.b16 %v935, %v934
  %v941 = vpack.c.b16 %v937, %v936
  %vm946 = vcmask 523264
  %v948 = vsel %vm946, %v794, 0
  %v951 = vsel %vm946, %v795, 0
  %v954 = vsel %vm946, %v796, 0
  %v957 = vsel %vm946, %v797, 0
  %v960 = vsel %vm946, %v798, 0
  %v963 = vsel %vm946, %v799, 0
  %v966 = vsel %vm946, %v800, 0
  %v969 = vsel %vm946, %v801, 0
  %v972 = vsel %vm946, %v802, 0
  %v975 = vsel %vm946, %v803, 0
  %v978 = vsel %vm946, %v804, 0
  %v981 = vsel %vm946, %v805, 0
  %v984 = vsel %vm946, %v806, 0
  %v987 = vsel %vm946, %v807, 0
  %v990 = vsel %vm946, %v808, 0
  %v993 = vsel %vm946, %v809, 0
  %v996 = vsel %vm946, %v810, 0
  %v999 = vsel %vm946, %v811, 0
  %v1002 = vsel %vm946, %v812, 0
  %v1005 = vsel %vm946, %v813, 0
  %v1008 = vsel %vm946, %v814, 0
  %v1011 = vsel %vm946, %v815, 0
  %v1014 = vsel %vm946, %v816, 0
  %v1017 = vsel %vm946, %v817, 0
  %v1020 = vsel %vm946, %v818, 0
  %v1023 = vsel %vm946, %v819, 0
  %v1026 = vsel %vm946, %v820, 0
  %v1029 = vsel %vm946, %v821, 0
  %v1032 = vsel %vm946, %v822, 0
  %v1035 = vsel %vm946, %v823, 0
  %v1038 = vsel %vm946, %v824, 0
  %v1041 = vsel %vm946, %v825, 0
  %v1044 = vsel %vm946, %v826, 0
  %v1047 = vsel %vm946, %v827, 0
  %v1050 = vsel %vm946, %v828, 0
  %v1053 = vsel %vm946, %v829, 0
  %v1056 = vsel %vm946, %v830, 0
  %v1059 = vsel %vm946, %v831, 0
  %v1062 = vsel %vm946, %v832, 0
  %v1065 = vsel %vm946, %v833, 0
  %v1068 = vsel %vm946, %v834, 0
  %v1071 = vsel %vm946, %v835, 0
  %v1074 = vsel %vm946, %v836, 0
  %v1077 = vsel %vm946, %v837, 0
  %v1080 = vsel %vm946, %v838, 0
  %v1083 = vsel %vm946, %v839, 0
  %v1086 = vsel %vm946, %v840, 0
  %v1089 = vsel %vm946, %v841, 0
  %v1092 = vsel %vm946, %v842, 0
  %v1095 = vsel %vm946, %v843, 0
  %v1098 = vsel %vm946, %v844, 0
  %v1101 = vsel %vm946, %v845, 0
  %v1104 = vsel %vm946, %v846, 0
  %v1107 = vsel %vm946, %v847, 0
  %v1110 = vsel %vm946, %v848, 0
  %v1113 = vsel %vm946, %v849, 0
  %v1116 = vsel %vm946, %v850, 0
  %v1119 = vsel %vm946, %v851, 0
  %v1122 = vsel %vm946, %v852, 0
  %v1125 = vsel %vm946, %v853, 0
  %v1128 = vsel %vm946, %v854, 0
  %v1131 = vsel %vm946, %v855, 0
  %v1134 = vsel %vm946, %v856, 0
  %v1137 = vsel %vm946, %v857, 0
  %v1140 = vsel %vm946, %v858, 0
  %v1143 = vsel %vm946, %v859, 0
  %v1146 = vsel %vm946, %v860, 0
  %v1149 = vsel %vm946, %v861, 0
  %v1152 = vsel %vm946, %v862, 0
  %v1155 = vsel %vm946, %v863, 0
  %v1158 = vsel %vm946, %v864, 0
  %v1161 = vsel %vm946, %v865, 0
  %v1164 = vsel %vm946, %v866, 0
  %v1167 = vsel %vm946, %v867, 0
  %v1170 = vsel %vm946, %v868, 0
  %v1173 = vsel %vm946, %v869, 0
  %v1176 = vsel %vm946, %v870, 0
  %v1179 = vsel %vm946, %v871, 0
  %v1182 = vsel %vm946, %v872, 0
  %v1185 = vsel %vm946, %v873, 0
  %v1188 = vsel %vm946, %v874, 0
  %v1191 = vsel %vm946, %v875, 0
  %v1194 = vsel %vm946, %v876, 0
  %v1197 = vsel %vm946, %v877, 0
  %v1200 = vsel %vm946, %v878, 0
  %v1203 = vsel %vm946, %v879, 0
  %v1206 = vsel %vm946, %v880, 0
  %v1209 = vsel %vm946, %v881, 0
  %v1212 = vsel %vm946, %v882, 0
  %v1215 = vsel %vm946, %v883, 0
  %v1218 = vsel %vm946, %v884, 0
  %v1221 = vsel %vm946, %v885, 0
  %v1224 = vsel %vm946, %v886, 0
  %v1227 = vsel %vm946, %v887, 0
  %v1230 = vsel %vm946, %v888, 0
  %v1233 = vsel %vm946, %v889, 0
  %v1236 = vsel %vm946, %v890, 0
  %v1239 = vsel %vm946, %v891, 0
  %v1242 = vsel %vm946, %v892, 0
  %v1245 = vsel %vm946, %v893, 0
  %v1248 = vsel %vm946, %v894, 0
  %v1251 = vsel %vm946, %v895, 0
  %v1254 = vsel %vm946, %v896, 0
  %v1257 = vsel %vm946, %v897, 0
  %v1260 = vsel %vm946, %v898, 0
  %v1263 = vsel %vm946, %v899, 0
  %v1266 = vsel %vm946, %v900, 0
  %v1269 = vsel %vm946, %v901, 0
  %v1272 = vsel %vm946, %v902, 0
  %v1275 = vsel %vm946, %v903, 0
  %v1278 = vsel %vm946, %v904, 0
  %v1281 = vsel %vm946, %v905, 0
  %v1284 = vsel %vm946, %v906, 0
  %v1287 = vsel %vm946, %v907, 0
  %v1290 = vsel %vm946, %v908, 0
  %v1293 = vsel %vm946, %v909, 0
  %v1296 = vsel %vm946, %v910, 0
  %v1299 = vsel %vm946, %v911, 0
  %v1302 = vsel %vm946, %v912, 0
  %v1305 = vsel %vm946, %v913, 0
  %v1308 = vsel %vm946, %v914, 0
  %v1311 = vsel %vm946, %v915, 0
  %v1314 = vsel %vm946, %v916, 0
  %v1317 = vsel %vm946, %v917, 0
  %v1320 = vsel %vm946, %v918, 0
  %v1323 = vsel %vm946, %v919, 0
  %v1326 = vsel %vm946, %v920, 0
  %v1329 = vsel %vm946, %v921, 0
  %1331 = vmatprep.subr.bf16.mxu0 0
  %1332 = vmatpush1.bf16.msra.mxu0 %v938
  %1333 = vmatprep.subr.bf16.mxu0 0
  %1334 = vmatpush1.bf16.msra.mxu0 %v939
  %1335 = vmatprep.subr.bf16.mxu0 0
  %1336 = vmatpush1.bf16.msra.mxu0 %v940
  %1337 = vmatprep.subr.bf16.mxu0 0
  %1338 = vmatpush1.bf16.msra.mxu0 %v941
  %1339 = vmatprep.subr.bf16.mxu0 0
  %1340 = vmatpush1.bf16.msra.mxu0 0
  %1341 = vmatprep.subr.bf16.mxu0 0
  %1342 = vmatpush1.bf16.msra.mxu0 0
  %1343 = vmatprep.subr.bf16.mxu0 0
  %1344 = vmatpush1.bf16.msra.mxu0 0
  %1345 = vmatprep.subr.bf16.mxu0 0
  %1346 = vmatpush1.bf16.msra.mxu0 0
  %1347 = vmatprep.subr.bf16.mxu0 0
  %1348 = vmatpush1.bf16.msra.mxu0 0
  %1349 = vmatprep.subr.bf16.mxu0 0
  %1350 = vmatpush1.bf16.msra.mxu0 0
  %1351 = vmatprep.subr.bf16.mxu0 0
  %1352 = vmatpush1.bf16.msra.mxu0 0
  %1353 = vmatprep.subr.bf16.mxu0 0
  %1354 = vmatpush1.bf16.msra.mxu0 0
  %1355 = vmatprep.subr.bf16.mxu0 0
  %1356 = vmatpush1.bf16.msra.mxu0 0
  %1357 = vmatprep.subr.bf16.mxu0 0
  %1358 = vmatpush1.bf16.msra.mxu0 0
  %1359 = vmatprep.subr.bf16.mxu0 0
  %1360 = vmatpush1.bf16.msra.mxu0 0
  %1361 = vmatprep.subr.bf16.mxu0 0
  %1362 = vmatpush1.bf16.msra.mxu0 0
  %1363 = vmatprep.mubr.bf16.mxu0 0
  %1364 = vmatmul.mubr.bf16.gmra.mrb[0].mxu0 %v948
  %v1365 = vpop.f32.mrb[0].mxu0
  %v1366 = vadd.f32 0.0, %v1365
  %v1367 = vpop.f32.mrb[0].mxu0
  %v1368 = vpop.f32.mrb[0].mxu0
  %v1369 = vadd.f32 0.0, %v1368
  %v1370 = vpop.f32.mrb[0].mxu0
  %1371 = vmatprep.mubr.bf16.mxu0 0
  %1372 = vmatmul.mubr.bf16.gmra.mrb[0].mxu0 %v951
  %v1373 = vpop.f32.mrb[0].mxu0
  %v1374 = vadd.f32 0.0, %v1373
  %v1375 = vpop.f32.mrb[0].mxu0
  %v1376 = vpop.f32.mrb[0].mxu0
  %v1377 = vadd.f32 0.0, %v1376
  %v1378 = vpop.f32.mrb[0].mxu0
  %1379 = vmatprep.mubr.bf16.mxu0 0
  %1380 = vmatmul.mubr.bf16.gmra.mrb[0].mxu0 %v954
  %v1381 = vpop.f32.mrb[0].mxu0
  %v1382 = vadd.f32 0.0, %v1381
  %v1383 = vpop.f32.mrb[0].mxu0
  %v1384 = vpop.f32.mrb[0].mxu0
  %v1385 = vadd.f32 0.0, %v1384
  %v1386 = vpop.f32.mrb[0].mxu0
  %1387 = vmatprep.mubr.bf16.mxu0 0
  %1388 = vmatmul.mubr.bf16.gmra.mrb[0].mxu0 %v957
  %v1389 = vpop.f32.mrb[0].mxu0
  %v1390 = vadd.f32 0.0, %v1389
  %v1391 = vpop.f32.mrb[0].mxu0
  %v1392 = vpop.f32.mrb[0].mxu0
  %v1393 = vadd.f32 0.0, %v1392
  %v1394 = vpop.f32.mrb[0].mxu0
  %1395 = vmatprep.mubr.bf16.mxu0 0
  %1396 = vmatmul.mubr.bf16.gmra.mrb[0].mxu0 %v960
  %v1397 = vpop.f32.mrb[0].mxu0
  %v1398 = vadd.f32 0.0, %v1397
  %v1399 = vpop.f32.mrb[0].mxu0
  %v1400 = vpop.f32.mrb[0].mxu0
  %v1401 = vadd.f32 0.0, %v1400
  %v1402 = vpop.f32.mrb[0].mxu0
  %1403 = vmatprep.mubr.bf16.mxu0 0
  %1404 = vmatmul.mubr.bf16.gmra.mrb[0].mxu0 %v963
  %v1405 = vpop.f32.mrb[0].mxu0
  %v1406 = vadd.f32 0.0, %v1405
  %v1407 = vpop.f32.mrb[0].mxu0
  %v1408 = vpop.f32.mrb[0].mxu0
  %v1409 = vadd.f32 0.0, %v1408
  %v1410 = vpop.f32.mrb[0].mxu0
  %1411 = vmatprep.mubr.bf16.mxu0 0
  %1412 = vmatmul.mubr.bf16.gmra.mrb[0].mxu0 %v966
  %v1413 = vpop.f32.mrb[0].mxu0
  %v1414 = vadd.f32 0.0, %v1413
  %v1415 = vpop.f32.mrb[0].mxu0
  %v1416 = vpop.f32.mrb[0].mxu0
  %v1417 = vadd.f32 0.0, %v1416
  %v1418 = vpop.f32.mrb[0].mxu0
  %1419 = vmatprep.mubr.bf16.mxu0 0
  %1420 = vmatmul.mubr.bf16.gmra.mrb[0].mxu0 %v969
  %v1421 = vpop.f32.mrb[0].mxu0
  %v1422 = vadd.f32 0.0, %v1421
  %v1423 = vpop.f32.mrb[0].mxu0
  %v1424 = vpop.f32.mrb[0].mxu0
  %v1425 = vadd.f32 0.0, %v1424
  %v1426 = vpop.f32.mrb[0].mxu0
  %1427 = vmatprep.mubr.bf16.mxu0 0
  %1428 = vmatmul.mubr.bf16.gmra.mrb[0].mxu0 %v972
  %v1429 = vpop.f32.mrb[0].mxu0
  %v1430 = vadd.f32 0.0, %v1429
  %v1431 = vpop.f32.mrb[0].mxu0
  %v1432 = vpop.f32.mrb[0].mxu0
  %v1433 = vadd.f32 0.0, %v1432
  %v1434 = vpop.f32.mrb[0].mxu0
  %1435 = vmatprep.mubr.bf16.mxu0 0
  %1436 = vmatmul.mubr.bf16.gmra.mrb[0].mxu0 %v975
  %v1437 = vpop.f32.mrb[0].mxu0
  %v1438 = vadd.f32 0.0, %v1437
  %v1439 = vpop.f32.mrb[0].mxu0
  %v1440 = vpop.f32.mrb[0].mxu0
  %v1441 = vadd.f32 0.0, %v1440
  %v1442 = vpop.f32.mrb[0].mxu0
  %1443 = vmatprep.mubr.bf16.mxu0 0
  %1444 = vmatmul.mubr.bf16.gmra.mrb[0].mxu0 %v978
  %v1445 = vpop.f32.mrb[0].mxu0
  %v1446 = vadd.f32 0.0, %v1445
  %v1447 = vpop.f32.mrb[0].mxu0
  %v1448 = vpop.f32.mrb[0].mxu0
  %v1449 = vadd.f32 0.0, %v1448
  %v1450 = vpop.f32.mrb[0].mxu0
  %1451 = vmatprep.mubr.bf16.mxu0 0
  %1452 = vmatmul.mubr.bf16.gmra.mrb[0].mxu0 %v981
  %v1453 = vpop.f32.mrb[0].mxu0
  %v1454 = vadd.f32 0.0, %v1453
  %v1455 = vpop.f32.mrb[0].mxu0
  %v1456 = vpop.f32.mrb[0].mxu0
  %v1457 = vadd.f32 0.0, %v1456
  %v1458 = vpop.f32.mrb[0].mxu0
  %1459 = vmatprep.mubr.bf16.mxu0 0
  %1460 = vmatmul.mubr.bf16.gmra.mrb[0].mxu0 %v984
  %v1461 = vpop.f32.mrb[0].mxu0
  %v1462 = vadd.f32 0.0, %v1461
  %v1463 = vpop.f32.mrb[0].mxu0
  %v1464 = vpop.f32.mrb[0].mxu0
  %v1465 = vadd.f32 0.0, %v1464
  %v1466 = vpop.f32.mrb[0].mxu0
  %1467 = vmatprep.mubr.bf16.mxu0 0
  %1468 = vmatmul.mubr.bf16.gmra.mrb[0].mxu0 %v987
  %v1469 = vpop.f32.mrb[0].mxu0
  %v1470 = vadd.f32 0.0, %v1469
  %v1471 = vpop.f32.mrb[0].mxu0
  %v1472 = vpop.f32.mrb[0].mxu0
  %v1473 = vadd.f32 0.0, %v1472
  %v1474 = vpop.f32.mrb[0].mxu0
  %1475 = vmatprep.mubr.bf16.mxu0 0
  %1476 = vmatmul.mubr.bf16.gmra.mrb[0].mxu0 %v990
  %v1477 = vpop.f32.mrb[0].mxu0
  %v1478 = vadd.f32 0.0, %v1477
  %v1479 = vpop.f32.mrb[0].mxu0
  %v1480 = vpop.f32.mrb[0].mxu0
  %v1481 = vadd.f32 0.0, %v1480
  %v1482 = vpop.f32.mrb[0].mxu0
  %1483 = vmatprep.mubr.bf16.mxu0 0
  %1484 = vmatmul.mubr.bf16.gmra.mrb[0].mxu0 %v993
  %v1485 = vpop.f32.mrb[0].mxu0
  %v1486 = vadd.f32 0.0, %v1485
  %v1487 = vpop.f32.mrb[0].mxu0
  %v1488 = vpop.f32.mrb[0].mxu0
  %v1489 = vadd.f32 0.0, %v1488
  %v1490 = vpop.f32.mrb[0].mxu0
  %1491 = vmatprep.mubr.bf16.mxu0 0
  %1492 = vmatmul.mubr.bf16.gmra.mrb[0].mxu0 %v996
  %v1493 = vpop.f32.mrb[0].mxu0
  %v1494 = vadd.f32 0.0, %v1493
  %v1495 = vpop.f32.mrb[0].mxu0
  %v1496 = vpop.f32.mrb[0].mxu0
  %v1497 = vadd.f32 0.0, %v1496
  %v1498 = vpop.f32.mrb[0].mxu0
  %1499 = vmatprep.mubr.bf16.mxu0 0
  %1500 = vmatmul.mubr.bf16.gmra.mrb[0].mxu0 %v999
  %v1501 = vpop.f32.mrb[0].mxu0
  %v1502 = vadd.f32 0.0, %v1501
  %v1503 = vpop.f32.mrb[0].mxu0
  %v1504 = vpop.f32.mrb[0].mxu0
  %v1505 = vadd.f32 0.0, %v1504
  %v1506 = vpop.f32.mrb[0].mxu0
  %1507 = vmatprep.mubr.bf16.mxu0 0
  %1508 = vmatmul.mubr.bf16.gmra.mrb[0].mxu0 %v1002
  %v1509 = vpop.f32.mrb[0].mxu0
  %v1510 = vadd.f32 0.0, %v1509
  %v1511 = vpop.f32.mrb[0].mxu0
  %v1512 = vpop.f32.mrb[0].mxu0
  %v1513 = vadd.f32 0.0, %v1512
  %v1514 = vpop.f32.mrb[0].mxu0
  %1515 = vmatprep.mubr.bf16.mxu0 0
  %1516 = vmatmul.mubr.bf16.gmra.mrb[0].mxu0 %v1005
  %v1517 = vpop.f32.mrb[0].mxu0
  %v1518 = vadd.f32 0.0, %v1517
  %v1519 = vpop.f32.mrb[0].mxu0
  %v1520 = vpop.f32.mrb[0].mxu0
  %v1521 = vadd.f32 0.0, %v1520
  %v1522 = vpop.f32.mrb[0].mxu0
  %1523 = vmatprep.mubr.bf16.mxu0 0
  %1524 = vmatmul.mubr.bf16.gmra.mrb[0].mxu0 %v1008
  %v1525 = vpop.f32.mrb[0].mxu0
  %v1526 = vadd.f32 0.0, %v1525
  %v1527 = vpop.f32.mrb[0].mxu0
  %v1528 = vpop.f32.mrb[0].mxu0
  %v1529 = vadd.f32 0.0, %v1528
  %v1530 = vpop.f32.mrb[0].mxu0
  %1531 = vmatprep.mubr.bf16.mxu0 0
  %1532 = vmatmul.mubr.bf16.gmra.mrb[0].mxu0 %v1011
  %v1533 = vpop.f32.mrb[0].mxu0
  %v1534 = vadd.f32 0.0, %v1533
  %v1535 = vpop.f32.mrb[0].mxu0
  %v1536 = vpop.f32.mrb[0].mxu0
  %v1537 = vadd.f32 0.0, %v1536
  %v1538 = vpop.f32.mrb[0].mxu0
  %1539 = vmatprep.mubr.bf16.mxu0 0
  %1540 = vmatmul.mubr.bf16.gmra.mrb[0].mxu0 %v1014
  %v1541 = vpop.f32.mrb[0].mxu0
  %v1542 = vadd.f32 0.0, %v1541
  %v1543 = vpop.f32.mrb[0].mxu0
  %v1544 = vpop.f32.mrb[0].mxu0
  %v1545 = vadd.f32 0.0, %v1544
  %v1546 = vpop.f32.mrb[0].mxu0
  %1547 = vmatprep.mubr.bf16.mxu0 0
  %1548 = vmatmul.mubr.bf16.gmra.mrb[0].mxu0 %v1017
  %v1549 = vpop.f32.mrb[0].mxu0
  %v1550 = vadd.f32 0.0, %v1549
  %v1551 = vpop.f32.mrb[0].mxu0
  %v1552 = vpop.f32.mrb[0].mxu0
  %v1553 = vadd.f32 0.0, %v1552
  %v1554 = vpop.f32.mrb[0].mxu0
  %1555 = vmatprep.mubr.bf16.mxu0 0
  %1556 = vmatmul.mubr.bf16.gmra.mrb[0].mxu0 %v1020
  %v1557 = vpop.f32.mrb[0].mxu0
  %v1558 = vadd.f32 0.0, %v1557
  %v1559 = vpop.f32.mrb[0].mxu0
  %v1560 = vpop.f32.mrb[0].mxu0
  %v1561 = vadd.f32 0.0, %v1560
  %v1562 = vpop.f32.mrb[0].mxu0
  %1563 = vmatprep.mubr.bf16.mxu0 0
  %1564 = vmatmul.mubr.bf16.gmra.mrb[0].mxu0 %v1023
  %v1565 = vpop.f32.mrb[0].mxu0
  %v1566 = vadd.f32 0.0, %v1565
  %v1567 = vpop.f32.mrb[0].mxu0
  %v1568 = vpop.f32.mrb[0].mxu0
  %v1569 = vadd.f32 0.0, %v1568
  %v1570 = vpop.f32.mrb[0].mxu0
  %1571 = vmatprep.mubr.bf16.mxu0 0
  %1572 = vmatmul.mubr.bf16.gmra.mrb[0].mxu0 %v1026
  %v1573 = vpop.f32.mrb[0].mxu0
  %v1574 = vadd.f32 0.0, %v1573
  %v1575 = vpop.f32.mrb[0].mxu0
  %v1576 = vpop.f32.mrb[0].mxu0
  %v1577 = vadd.f32 0.0, %v1576
  %v1578 = vpop.f32.mrb[0].mxu0
  %1579 = vmatprep.mubr.bf16.mxu0 0
  %1580 = vmatmul.mubr.bf16.gmra.mrb[0].mxu0 %v1029
  %v1581 = vpop.f32.mrb[0].mxu0
  %v1582 = vadd.f32 0.0, %v1581
  %v1583 = vpop.f32.mrb[0].mxu0
  %v1584 = vpop.f32.mrb[0].mxu0
  %v1585 = vadd.f32 0.0, %v1584
  %v1586 = vpop.f32.mrb[0].mxu0
  %1587 = vmatprep.mubr.bf16.mxu0 0
  %1588 = vmatmul.mubr.bf16.gmra.mrb[0].mxu0 %v1032
  %v1589 = vpop.f32.mrb[0].mxu0
  %v1590 = vadd.f32 0.0, %v1589
  %v1591 = vpop.f32.mrb[0].mxu0
  %v1592 = vpop.f32.mrb[0].mxu0
  %v1593 = vadd.f32 0.0, %v1592
  %v1594 = vpop.f32.mrb[0].mxu0
  %1595 = vmatprep.mubr.bf16.mxu0 0
  %1596 = vmatmul.mubr.bf16.gmra.mrb[0].mxu0 %v1035
  %v1597 = vpop.f32.mrb[0].mxu0
  %v1598 = vadd.f32 0.0, %v1597
  %v1599 = vpop.f32.mrb[0].mxu0
  %v1600 = vpop.f32.mrb[0].mxu0
  %v1601 = vadd.f32 0.0, %v1600
  %v1602 = vpop.f32.mrb[0].mxu0
  %1603 = vmatprep.mubr.bf16.mxu0 0
  %1604 = vmatmul.mubr.bf16.gmra.mrb[0].mxu0 %v1038
  %v1605 = vpop.f32.mrb[0].mxu0
  %v1606 = vadd.f32 0.0, %v1605
  %v1607 = vpop.f32.mrb[0].mxu0
  %v1608 = vpop.f32.mrb[0].mxu0
  %v1609 = vadd.f32 0.0, %v1608
  %v1610 = vpop.f32.mrb[0].mxu0
  %1611 = vmatprep.mubr.bf16.mxu0 0
  %1612 = vmatmul.mubr.bf16.gmra.mrb[0].mxu0 %v1041
  %v1613 = vpop.f32.mrb[0].mxu0
  %v1614 = vadd.f32 0.0, %v1613
  %v1615 = vpop.f32.mrb[0].mxu0
  %v1616 = vpop.f32.mrb[0].mxu0
  %v1617 = vadd.f32 0.0, %v1616
  %v1618 = vpop.f32.mrb[0].mxu0
  %1619 = vmatprep.mubr.bf16.mxu0 0
  %1620 = vmatmul.mubr.bf16.gmra.mrb[0].mxu0 %v1044
  %v1621 = vpop.f32.mrb[0].mxu0
  %v1622 = vadd.f32 0.0, %v1621
  %v1623 = vpop.f32.mrb[0].mxu0
  %v1624 = vpop.f32.mrb[0].mxu0
  %v1625 = vadd.f32 0.0, %v1624
  %v1626 = vpop.f32.mrb[0].mxu0
  %1627 = vmatprep.mubr.bf16.mxu0 0
  %1628 = vmatmul.mubr.bf16.gmra.mrb[0].mxu0 %v1047
  %v1629 = vpop.f32.mrb[0].mxu0
  %v1630 = vadd.f32 0.0, %v1629
  %v1631 = vpop.f32.mrb[0].mxu0
  %v1632 = vpop.f32.mrb[0].mxu0
  %v1633 = vadd.f32 0.0, %v1632
  %v1634 = vpop.f32.mrb[0].mxu0
  %1635 = vmatprep.mubr.bf16.mxu0 0
  %1636 = vmatmul.mubr.bf16.gmra.mrb[0].mxu0 %v1050
  %v1637 = vpop.f32.mrb[0].mxu0
  %v1638 = vadd.f32 0.0, %v1637
  %v1639 = vpop.f32.mrb[0].mxu0
  %v1640 = vpop.f32.mrb[0].mxu0
  %v1641 = vadd.f32 0.0, %v1640
  %v1642 = vpop.f32.mrb[0].mxu0
  %1643 = vmatprep.mubr.bf16.mxu0 0
  %1644 = vmatmul.mubr.bf16.gmra.mrb[0].mxu0 %v1053
  %v1645 = vpop.f32.mrb[0].mxu0
  %v1646 = vadd.f32 0.0, %v1645
  %v1647 = vpop.f32.mrb[0].mxu0
  %v1648 = vpop.f32.mrb[0].mxu0
  %v1649 = vadd.f32 0.0, %v1648
  %v1650 = vpop.f32.mrb[0].mxu0
  %1651 = vmatprep.mubr.bf16.mxu0 0
  %1652 = vmatmul.mubr.bf16.gmra.mrb[0].mxu0 %v1056
  %v1653 = vpop.f32.mrb[0].mxu0
  %v1654 = vadd.f32 0.0, %v1653
  %v1655 = vpop.f32.mrb[0].mxu0
  %v1656 = vpop.f32.mrb[0].mxu0
  %v1657 = vadd.f32 0.0, %v1656
  %v1658 = vpop.f32.mrb[0].mxu0
  %1659 = vmatprep.mubr.bf16.mxu0 0
  %1660 = vmatmul.mubr.bf16.gmra.mrb[0].mxu0 %v1059
  %v1661 = vpop.f32.mrb[0].mxu0
  %v1662 = vadd.f32 0.0, %v1661
  %v1663 = vpop.f32.mrb[0].mxu0
  %v1664 = vpop.f32.mrb[0].mxu0
  %v1665 = vadd.f32 0.0, %v1664
  %v1666 = vpop.f32.mrb[0].mxu0
  %1667 = vmatprep.mubr.bf16.mxu0 0
  %1668 = vmatmul.mubr.bf16.gmra.mrb[0].mxu0 %v1062
  %v1669 = vpop.f32.mrb[0].mxu0
  %v1670 = vadd.f32 0.0, %v1669
  %v1671 = vpop.f32.mrb[0].mxu0
  %v1672 = vpop.f32.mrb[0].mxu0
  %v1673 = vadd.f32 0.0, %v1672
  %v1674 = vpop.f32.mrb[0].mxu0
  %1675 = vmatprep.mubr.bf16.mxu0 0
  %1676 = vmatmul.mubr.bf16.gmra.mrb[0].mxu0 %v1065
  %v1677 = vpop.f32.mrb[0].mxu0
  %v1678 = vadd.f32 0.0, %v1677
  %v1679 = vpop.f32.mrb[0].mxu0
  %v1680 = vpop.f32.mrb[0].mxu0
  %v1681 = vadd.f32 0.0, %v1680
  %v1682 = vpop.f32.mrb[0].mxu0
  %1683 = vmatprep.mubr.bf16.mxu0 0
  %1684 = vmatmul.mubr.bf16.gmra.mrb[0].mxu0 %v1068
  %v1685 = vpop.f32.mrb[0].mxu0
  %v1686 = vadd.f32 0.0, %v1685
  %v1687 = vpop.f32.mrb[0].mxu0
  %v1688 = vpop.f32.mrb[0].mxu0
  %v1689 = vadd.f32 0.0, %v1688
  %v1690 = vpop.f32.mrb[0].mxu0
  %1691 = vmatprep.mubr.bf16.mxu0 0
  %1692 = vmatmul.mubr.bf16.gmra.mrb[0].mxu0 %v1071
  %v1693 = vpop.f32.mrb[0].mxu0
  %v1694 = vadd.f32 0.0, %v1693
  %v1695 = vpop.f32.mrb[0].mxu0
  %v1696 = vpop.f32.mrb[0].mxu0
  %v1697 = vadd.f32 0.0, %v1696
  %v1698 = vpop.f32.mrb[0].mxu0
  %1699 = vmatprep.mubr.bf16.mxu0 0
  %1700 = vmatmul.mubr.bf16.gmra.mrb[0].mxu0 %v1074
  %v1701 = vpop.f32.mrb[0].mxu0
  %v1702 = vadd.f32 0.0, %v1701
  %v1703 = vpop.f32.mrb[0].mxu0
  %v1704 = vpop.f32.mrb[0].mxu0
  %v1705 = vadd.f32 0.0, %v1704
  %v1706 = vpop.f32.mrb[0].mxu0
  %1707 = vmatprep.mubr.bf16.mxu0 0
  %1708 = vmatmul.mubr.bf16.gmra.mrb[0].mxu0 %v1077
  %v1709 = vpop.f32.mrb[0].mxu0
  %v1710 = vadd.f32 0.0, %v1709
  %v1711 = vpop.f32.mrb[0].mxu0
  %v1712 = vpop.f32.mrb[0].mxu0
  %v1713 = vadd.f32 0.0, %v1712
  %v1714 = vpop.f32.mrb[0].mxu0
  %1715 = vmatprep.mubr.bf16.mxu0 0
  %1716 = vmatmul.mubr.bf16.gmra.mrb[0].mxu0 %v1080
  %v1717 = vpop.f32.mrb[0].mxu0
  %v1718 = vadd.f32 0.0, %v1717
  %v1719 = vpop.f32.mrb[0].mxu0
  %v1720 = vpop.f32.mrb[0].mxu0
  %v1721 = vadd.f32 0.0, %v1720
  %v1722 = vpop.f32.mrb[0].mxu0
  %1723 = vmatprep.mubr.bf16.mxu0 0
  %1724 = vmatmul.mubr.bf16.gmra.mrb[0].mxu0 %v1083
  %v1725 = vpop.f32.mrb[0].mxu0
  %v1726 = vadd.f32 0.0, %v1725
  %v1727 = vpop.f32.mrb[0].mxu0
  %v1728 = vpop.f32.mrb[0].mxu0
  %v1729 = vadd.f32 0.0, %v1728
  %v1730 = vpop.f32.mrb[0].mxu0
  %1731 = vmatprep.mubr.bf16.mxu0 0
  %1732 = vmatmul.mubr.bf16.gmra.mrb[0].mxu0 %v1086
  %v1733 = vpop.f32.mrb[0].mxu0
  %v1734 = vadd.f32 0.0, %v1733
  %v1735 = vpop.f32.mrb[0].mxu0
  %v1736 = vpop.f32.mrb[0].mxu0
  %v1737 = vadd.f32 0.0, %v1736
  %v1738 = vpop.f32.mrb[0].mxu0
  %1739 = vmatprep.mubr.bf16.mxu0 0
  %1740 = vmatmul.mubr.bf16.gmra.mrb[0].mxu0 %v1089
  %v1741 = vpop.f32.mrb[0].mxu0
  %v1742 = vadd.f32 0.0, %v1741
  %v1743 = vpop.f32.mrb[0].mxu0
  %v1744 = vpop.f32.mrb[0].mxu0
  %v1745 = vadd.f32 0.0, %v1744
  %v1746 = vpop.f32.mrb[0].mxu0
  %1747 = vmatprep.mubr.bf16.mxu0 0
  %1748 = vmatmul.mubr.bf16.gmra.mrb[0].mxu0 %v1092
  %v1749 = vpop.f32.mrb[0].mxu0
  %v1750 = vadd.f32 0.0, %v1749
  %v1751 = vpop.f32.mrb[0].mxu0
  %v1752 = vpop.f32.mrb[0].mxu0
  %v1753 = vadd.f32 0.0, %v1752
  %v1754 = vpop.f32.mrb[0].mxu0
  %1755 = vmatprep.mubr.bf16.mxu0 0
  %1756 = vmatmul.mubr.bf16.gmra.mrb[0].mxu0 %v1095
  %v1757 = vpop.f32.mrb[0].mxu0
  %v1758 = vadd.f32 0.0, %v1757
  %v1759 = vpop.f32.mrb[0].mxu0
  %v1760 = vpop.f32.mrb[0].mxu0
  %v1761 = vadd.f32 0.0, %v1760
  %v1762 = vpop.f32.mrb[0].mxu0
  %1763 = vmatprep.mubr.bf16.mxu0 0
  %1764 = vmatmul.mubr.bf16.gmra.mrb[0].mxu0 %v1098
  %v1765 = vpop.f32.mrb[0].mxu0
  %v1766 = vadd.f32 0.0, %v1765
  %v1767 = vpop.f32.mrb[0].mxu0
  %v1768 = vpop.f32.mrb[0].mxu0
  %v1769 = vadd.f32 0.0, %v1768
  %v1770 = vpop.f32.mrb[0].mxu0
  %1771 = vmatprep.mubr.bf16.mxu0 0
  %1772 = vmatmul.mubr.bf16.gmra.mrb[0].mxu0 %v1101
  %v1773 = vpop.f32.mrb[0].mxu0
  %v1774 = vadd.f32 0.0, %v1773
  %v1775 = vpop.f32.mrb[0].mxu0
  %v1776 = vpop.f32.mrb[0].mxu0
  %v1777 = vadd.f32 0.0, %v1776
  %v1778 = vpop.f32.mrb[0].mxu0
  %1779 = vmatprep.mubr.bf16.mxu0 0
  %1780 = vmatmul.mubr.bf16.gmra.mrb[0].mxu0 %v1104
  %v1781 = vpop.f32.mrb[0].mxu0
  %v1782 = vadd.f32 0.0, %v1781
  %v1783 = vpop.f32.mrb[0].mxu0
  %v1784 = vpop.f32.mrb[0].mxu0
  %v1785 = vadd.f32 0.0, %v1784
  %v1786 = vpop.f32.mrb[0].mxu0
  %1787 = vmatprep.mubr.bf16.mxu0 0
  %1788 = vmatmul.mubr.bf16.gmra.mrb[0].mxu0 %v1107
  %v1789 = vpop.f32.mrb[0].mxu0
  %v1790 = vadd.f32 0.0, %v1789
  %v1791 = vpop.f32.mrb[0].mxu0
  %v1792 = vpop.f32.mrb[0].mxu0
  %v1793 = vadd.f32 0.0, %v1792
  %v1794 = vpop.f32.mrb[0].mxu0
  %1795 = vmatprep.mubr.bf16.mxu0 0
  %1796 = vmatmul.mubr.bf16.gmra.mrb[0].mxu0 %v1110
  %v1797 = vpop.f32.mrb[0].mxu0
  %v1798 = vadd.f32 0.0, %v1797
  %v1799 = vpop.f32.mrb[0].mxu0
  %v1800 = vpop.f32.mrb[0].mxu0
  %v1801 = vadd.f32 0.0, %v1800
  %v1802 = vpop.f32.mrb[0].mxu0
  %1803 = vmatprep.mubr.bf16.mxu0 0
  %1804 = vmatmul.mubr.bf16.gmra.mrb[0].mxu0 %v1113
  %v1805 = vpop.f32.mrb[0].mxu0
  %v1806 = vadd.f32 0.0, %v1805
  %v1807 = vpop.f32.mrb[0].mxu0
  %v1808 = vpop.f32.mrb[0].mxu0
  %v1809 = vadd.f32 0.0, %v1808
  %v1810 = vpop.f32.mrb[0].mxu0
  %1811 = vmatprep.mubr.bf16.mxu0 0
  %1812 = vmatmul.mubr.bf16.gmra.mrb[0].mxu0 %v1116
  %v1813 = vpop.f32.mrb[0].mxu0
  %v1814 = vadd.f32 0.0, %v1813
  %v1815 = vpop.f32.mrb[0].mxu0
  %v1816 = vpop.f32.mrb[0].mxu0
  %v1817 = vadd.f32 0.0, %v1816
  %v1818 = vpop.f32.mrb[0].mxu0
  %1819 = vmatprep.mubr.bf16.mxu0 0
  %1820 = vmatmul.mubr.bf16.gmra.mrb[0].mxu0 %v1119
  %v1821 = vpop.f32.mrb[0].mxu0
  %v1822 = vadd.f32 0.0, %v1821
  %v1823 = vpop.f32.mrb[0].mxu0
  %v1824 = vpop.f32.mrb[0].mxu0
  %v1825 = vadd.f32 0.0, %v1824
  %v1826 = vpop.f32.mrb[0].mxu0
  %1827 = vmatprep.mubr.bf16.mxu0 0
  %1828 = vmatmul.mubr.bf16.gmra.mrb[0].mxu0 %v1122
  %v1829 = vpop.f32.mrb[0].mxu0
  %v1830 = vadd.f32 0.0, %v1829
  %v1831 = vpop.f32.mrb[0].mxu0
  %v1832 = vpop.f32.mrb[0].mxu0
  %v1833 = vadd.f32 0.0, %v1832
  %v1834 = vpop.f32.mrb[0].mxu0
  %1835 = vmatprep.mubr.bf16.mxu0 0
  %1836 = vmatmul.mubr.bf16.gmra.mrb[0].mxu0 %v1125
  %v1837 = vpop.f32.mrb[0].mxu0
  %v1838 = vadd.f32 0.0, %v1837
  %v1839 = vpop.f32.mrb[0].mxu0
  %v1840 = vpop.f32.mrb[0].mxu0
  %v1841 = vadd.f32 0.0, %v1840
  %v1842 = vpop.f32.mrb[0].mxu0
  %1843 = vmatprep.mubr.bf16.mxu0 0
  %1844 = vmatmul.mubr.bf16.gmra.mrb[0].mxu0 %v1128
  %v1845 = vpop.f32.mrb[0].mxu0
  %v1846 = vadd.f32 0.0, %v1845
  %v1847 = vpop.f32.mrb[0].mxu0
  %v1848 = vpop.f32.mrb[0].mxu0
  %v1849 = vadd.f32 0.0, %v1848
  %v1850 = vpop.f32.mrb[0].mxu0
  %1851 = vmatprep.mubr.bf16.mxu0 0
  %1852 = vmatmul.mubr.bf16.gmra.mrb[0].mxu0 %v1131
  %v1853 = vpop.f32.mrb[0].mxu0
  %v1854 = vadd.f32 0.0, %v1853
  %v1855 = vpop.f32.mrb[0].mxu0
  %v1856 = vpop.f32.mrb[0].mxu0
  %v1857 = vadd.f32 0.0, %v1856
  %v1858 = vpop.f32.mrb[0].mxu0
  %1859 = vmatprep.mubr.bf16.mxu0 0
  %1860 = vmatmul.mubr.bf16.gmra.mrb[0].mxu0 %v1134
  %v1861 = vpop.f32.mrb[0].mxu0
  %v1862 = vadd.f32 0.0, %v1861
  %v1863 = vpop.f32.mrb[0].mxu0
  %v1864 = vpop.f32.mrb[0].mxu0
  %v1865 = vadd.f32 0.0, %v1864
  %v1866 = vpop.f32.mrb[0].mxu0
  %1867 = vmatprep.mubr.bf16.mxu0 0
  %1868 = vmatmul.mubr.bf16.gmra.mrb[0].mxu0 %v1137
  %v1869 = vpop.f32.mrb[0].mxu0
  %v1870 = vadd.f32 0.0, %v1869
  %v1871 = vpop.f32.mrb[0].mxu0
  %v1872 = vpop.f32.mrb[0].mxu0
  %v1873 = vadd.f32 0.0, %v1872
  %v1874 = vpop.f32.mrb[0].mxu0
  %1875 = vmatprep.mubr.bf16.mxu0 0
  %1876 = vmatmul.mubr.bf16.gmra.mrb[0].mxu0 %v1140
  %v1877 = vpop.f32.mrb[0].mxu0
  %v1878 = vadd.f32 0.0, %v1877
  %v1879 = vpop.f32.mrb[0].mxu0
  %v1880 = vpop.f32.mrb[0].mxu0
  %v1881 = vadd.f32 0.0, %v1880
  %v1882 = vpop.f32.mrb[0].mxu0
  %1883 = vmatprep.mubr.bf16.mxu0 0
  %1884 = vmatmul.mubr.bf16.gmra.mrb[0].mxu0 %v1143
  %v1885 = vpop.f32.mrb[0].mxu0
  %v1886 = vadd.f32 0.0, %v1885
  %v1887 = vpop.f32.mrb[0].mxu0
  %v1888 = vpop.f32.mrb[0].mxu0
  %v1889 = vadd.f32 0.0, %v1888
  %v1890 = vpop.f32.mrb[0].mxu0
  %1891 = vmatprep.mubr.bf16.mxu0 0
  %1892 = vmatmul.mubr.bf16.gmra.mrb[0].mxu0 %v1146
  %v1893 = vpop.f32.mrb[0].mxu0
  %v1894 = vadd.f32 0.0, %v1893
  %v1895 = vpop.f32.mrb[0].mxu0
  %v1896 = vpop.f32.mrb[0].mxu0
  %v1897 = vadd.f32 0.0, %v1896
  %v1898 = vpop.f32.mrb[0].mxu0
  %1899 = vmatprep.mubr.bf16.mxu0 0
  %1900 = vmatmul.mubr.bf16.gmra.mrb[0].mxu0 %v1149
  %v1901 = vpop.f32.mrb[0].mxu0
  %v1902 = vadd.f32 0.0, %v1901
  %v1903 = vpop.f32.mrb[0].mxu0
  %v1904 = vpop.f32.mrb[0].mxu0
  %v1905 = vadd.f32 0.0, %v1904
  %v1906 = vpop.f32.mrb[0].mxu0
  %1907 = vmatprep.mubr.bf16.mxu0 0
  %1908 = vmatmul.mubr.bf16.gmra.mrb[0].mxu0 %v1152
  %v1909 = vpop.f32.mrb[0].mxu0
  %v1910 = vadd.f32 0.0, %v1909
  %v1911 = vpop.f32.mrb[0].mxu0
  %v1912 = vpop.f32.mrb[0].mxu0
  %v1913 = vadd.f32 0.0, %v1912
  %v1914 = vpop.f32.mrb[0].mxu0
  %1915 = vmatprep.mubr.bf16.mxu0 0
  %1916 = vmatmul.mubr.bf16.gmra.mrb[0].mxu0 %v1155
  %v1917 = vpop.f32.mrb[0].mxu0
  %v1918 = vadd.f32 0.0, %v1917
  %v1919 = vpop.f32.mrb[0].mxu0
  %v1920 = vpop.f32.mrb[0].mxu0
  %v1921 = vadd.f32 0.0, %v1920
  %v1922 = vpop.f32.mrb[0].mxu0
  %1923 = vmatprep.mubr.bf16.mxu0 0
  %1924 = vmatmul.mubr.bf16.gmra.mrb[0].mxu0 %v1158
  %v1925 = vpop.f32.mrb[0].mxu0
  %v1926 = vadd.f32 0.0, %v1925
  %v1927 = vpop.f32.mrb[0].mxu0
  %v1928 = vpop.f32.mrb[0].mxu0
  %v1929 = vadd.f32 0.0, %v1928
  %v1930 = vpop.f32.mrb[0].mxu0
  %1931 = vmatprep.mubr.bf16.mxu0 0
  %1932 = vmatmul.mubr.bf16.gmra.mrb[0].mxu0 %v1161
  %v1933 = vpop.f32.mrb[0].mxu0
  %v1934 = vadd.f32 0.0, %v1933
  %v1935 = vpop.f32.mrb[0].mxu0
  %v1936 = vpop.f32.mrb[0].mxu0
  %v1937 = vadd.f32 0.0, %v1936
  %v1938 = vpop.f32.mrb[0].mxu0
  %1939 = vmatprep.mubr.bf16.mxu0 0
  %1940 = vmatmul.mubr.bf16.gmra.mrb[0].mxu0 %v1164
  %v1941 = vpop.f32.mrb[0].mxu0
  %v1942 = vadd.f32 0.0, %v1941
  %v1943 = vpop.f32.mrb[0].mxu0
  %v1944 = vpop.f32.mrb[0].mxu0
  %v1945 = vadd.f32 0.0, %v1944
  %v1946 = vpop.f32.mrb[0].mxu0
  %1947 = vmatprep.mubr.bf16.mxu0 0
  %1948 = vmatmul.mubr.bf16.gmra.mrb[0].mxu0 %v1167
  %v1949 = vpop.f32.mrb[0].mxu0
  %v1950 = vadd.f32 0.0, %v1949
  %v1951 = vpop.f32.mrb[0].mxu0
  %v1952 = vpop.f32.mrb[0].mxu0
  %v1953 = vadd.f32 0.0, %v1952
  %v1954 = vpop.f32.mrb[0].mxu0
  %1955 = vmatprep.mubr.bf16.mxu0 0
  %1956 = vmatmul.mubr.bf16.gmra.mrb[0].mxu0 %v1170
  %v1957 = vpop.f32.mrb[0].mxu0
  %v1958 = vadd.f32 0.0, %v1957
  %v1959 = vpop.f32.mrb[0].mxu0
  %v1960 = vpop.f32.mrb[0].mxu0
  %v1961 = vadd.f32 0.0, %v1960
  %v1962 = vpop.f32.mrb[0].mxu0
  %1963 = vmatprep.mubr.bf16.mxu0 0
  %1964 = vmatmul.mubr.bf16.gmra.mrb[0].mxu0 %v1173
  %v1965 = vpop.f32.mrb[0].mxu0
  %v1966 = vadd.f32 0.0, %v1965
  %v1967 = vpop.f32.mrb[0].mxu0
  %v1968 = vpop.f32.mrb[0].mxu0
  %v1969 = vadd.f32 0.0, %v1968
  %v1970 = vpop.f32.mrb[0].mxu0
  %1971 = vmatprep.mubr.bf16.mxu0 0
  %1972 = vmatmul.mubr.bf16.gmra.mrb[0].mxu0 %v1176
  %v1973 = vpop.f32.mrb[0].mxu0
  %v1974 = vadd.f32 0.0, %v1973
  %v1975 = vpop.f32.mrb[0].mxu0
  %v1976 = vpop.f32.mrb[0].mxu0
  %v1977 = vadd.f32 0.0, %v1976
  %v1978 = vpop.f32.mrb[0].mxu0
  %1979 = vmatprep.mubr.bf16.mxu0 0
  %1980 = vmatmul.mubr.bf16.gmra.mrb[0].mxu0 %v1179
  %v1981 = vpop.f32.mrb[0].mxu0
  %v1982 = vadd.f32 0.0, %v1981
  %v1983 = vpop.f32.mrb[0].mxu0
  %v1984 = vpop.f32.mrb[0].mxu0
  %v1985 = vadd.f32 0.0, %v1984
  %v1986 = vpop.f32.mrb[0].mxu0
  %1987 = vmatprep.mubr.bf16.mxu0 0
  %1988 = vmatmul.mubr.bf16.gmra.mrb[0].mxu0 %v1182
  %v1989 = vpop.f32.mrb[0].mxu0
  %v1990 = vadd.f32 0.0, %v1989
  %v1991 = vpop.f32.mrb[0].mxu0
  %v1992 = vpop.f32.mrb[0].mxu0
  %v1993 = vadd.f32 0.0, %v1992
  %v1994 = vpop.f32.mrb[0].mxu0
  %1995 = vmatprep.mubr.bf16.mxu0 0
  %1996 = vmatmul.mubr.bf16.gmra.mrb[0].mxu0 %v1185
  %v1997 = vpop.f32.mrb[0].mxu0
  %v1998 = vadd.f32 0.0, %v1997
  %v1999 = vpop.f32.mrb[0].mxu0
  %v2000 = vpop.f32.mrb[0].mxu0
  %v2001 = vadd.f32 0.0, %v2000
  %v2002 = vpop.f32.mrb[0].mxu0
  %2003 = vmatprep.mubr.bf16.mxu0 0
  %2004 = vmatmul.mubr.bf16.gmra.mrb[0].mxu0 %v1188
  %v2005 = vpop.f32.mrb[0].mxu0
  %v2006 = vadd.f32 0.0, %v2005
  %v2007 = vpop.f32.mrb[0].mxu0
  %v2008 = vpop.f32.mrb[0].mxu0
  %v2009 = vadd.f32 0.0, %v2008
  %v2010 = vpop.f32.mrb[0].mxu0
  %2011 = vmatprep.mubr.bf16.mxu0 0
  %2012 = vmatmul.mubr.bf16.gmra.mrb[0].mxu0 %v1191
  %v2013 = vpop.f32.mrb[0].mxu0
  %v2014 = vadd.f32 0.0, %v2013
  %v2015 = vpop.f32.mrb[0].mxu0
  %v2016 = vpop.f32.mrb[0].mxu0
  %v2017 = vadd.f32 0.0, %v2016
  %v2018 = vpop.f32.mrb[0].mxu0
  %2019 = vmatprep.mubr.bf16.mxu0 0
  %2020 = vmatmul.mubr.bf16.gmra.mrb[0].mxu0 %v1194
  %v2021 = vpop.f32.mrb[0].mxu0
  %v2022 = vadd.f32 0.0, %v2021
  %v2023 = vpop.f32.mrb[0].mxu0
  %v2024 = vpop.f32.mrb[0].mxu0
  %v2025 = vadd.f32 0.0, %v2024
  %v2026 = vpop.f32.mrb[0].mxu0
  %2027 = vmatprep.mubr.bf16.mxu0 0
  %2028 = vmatmul.mubr.bf16.gmra.mrb[0].mxu0 %v1197
  %v2029 = vpop.f32.mrb[0].mxu0
  %v2030 = vadd.f32 0.0, %v2029
  %v2031 = vpop.f32.mrb[0].mxu0
  %v2032 = vpop.f32.mrb[0].mxu0
  %v2033 = vadd.f32 0.0, %v2032
  %v2034 = vpop.f32.mrb[0].mxu0
  %2035 = vmatprep.mubr.bf16.mxu0 0
  %2036 = vmatmul.mubr.bf16.gmra.mrb[0].mxu0 %v1200
  %v2037 = vpop.f32.mrb[0].mxu0
  %v2038 = vadd.f32 0.0, %v2037
  %v2039 = vpop.f32.mrb[0].mxu0
  %v2040 = vpop.f32.mrb[0].mxu0
  %v2041 = vadd.f32 0.0, %v2040
  %v2042 = vpop.f32.mrb[0].mxu0
  %2043 = vmatprep.mubr.bf16.mxu0 0
  %2044 = vmatmul.mubr.bf16.gmra.mrb[0].mxu0 %v1203
  %v2045 = vpop.f32.mrb[0].mxu0
  %v2046 = vadd.f32 0.0, %v2045
  %v2047 = vpop.f32.mrb[0].mxu0
  %v2048 = vpop.f32.mrb[0].mxu0
  %v2049 = vadd.f32 0.0, %v2048
  %v2050 = vpop.f32.mrb[0].mxu0
  %2051 = vmatprep.mubr.bf16.mxu0 0
  %2052 = vmatmul.mubr.bf16.gmra.mrb[0].mxu0 %v1206
  %v2053 = vpop.f32.mrb[0].mxu0
  %v2054 = vadd.f32 0.0, %v2053
  %v2055 = vpop.f32.mrb[0].mxu0
  %v2056 = vpop.f32.mrb[0].mxu0
  %v2057 = vadd.f32 0.0, %v2056
  %v2058 = vpop.f32.mrb[0].mxu0
  %2059 = vmatprep.mubr.bf16.mxu0 0
  %2060 = vmatmul.mubr.bf16.gmra.mrb[0].mxu0 %v1209
  %v2061 = vpop.f32.mrb[0].mxu0
  %v2062 = vadd.f32 0.0, %v2061
  %v2063 = vpop.f32.mrb[0].mxu0
  %v2064 = vpop.f32.mrb[0].mxu0
  %v2065 = vadd.f32 0.0, %v2064
  %v2066 = vpop.f32.mrb[0].mxu0
  %2067 = vmatprep.mubr.bf16.mxu0 0
  %2068 = vmatmul.mubr.bf16.gmra.mrb[0].mxu0 %v1212
  %v2069 = vpop.f32.mrb[0].mxu0
  %v2070 = vadd.f32 0.0, %v2069
  %v2071 = vpop.f32.mrb[0].mxu0
  %v2072 = vpop.f32.mrb[0].mxu0
  %v2073 = vadd.f32 0.0, %v2072
  %v2074 = vpop.f32.mrb[0].mxu0
  %2075 = vmatprep.mubr.bf16.mxu0 0
  %2076 = vmatmul.mubr.bf16.gmra.mrb[0].mxu0 %v1215
  %v2077 = vpop.f32.mrb[0].mxu0
  %v2078 = vadd.f32 0.0, %v2077
  %v2079 = vpop.f32.mrb[0].mxu0
  %v2080 = vpop.f32.mrb[0].mxu0
  %v2081 = vadd.f32 0.0, %v2080
  %v2082 = vpop.f32.mrb[0].mxu0
  %2083 = vmatprep.mubr.bf16.mxu0 0
  %2084 = vmatmul.mubr.bf16.gmra.mrb[0].mxu0 %v1218
  %v2085 = vpop.f32.mrb[0].mxu0
  %v2086 = vadd.f32 0.0, %v2085
  %v2087 = vpop.f32.mrb[0].mxu0
  %v2088 = vpop.f32.mrb[0].mxu0
  %v2089 = vadd.f32 0.0, %v2088
  %v2090 = vpop.f32.mrb[0].mxu0
  %2091 = vmatprep.mubr.bf16.mxu0 0
  %2092 = vmatmul.mubr.bf16.gmra.mrb[0].mxu0 %v1221
  %v2093 = vpop.f32.mrb[0].mxu0
  %v2094 = vadd.f32 0.0, %v2093
  %v2095 = vpop.f32.mrb[0].mxu0
  %v2096 = vpop.f32.mrb[0].mxu0
  %v2097 = vadd.f32 0.0, %v2096
  %v2098 = vpop.f32.mrb[0].mxu0
  %2099 = vmatprep.mubr.bf16.mxu0 0
  %2100 = vmatmul.mubr.bf16.gmra.mrb[0].mxu0 %v1224
  %v2101 = vpop.f32.mrb[0].mxu0
  %v2102 = vadd.f32 0.0, %v2101
  %v2103 = vpop.f32.mrb[0].mxu0
  %v2104 = vpop.f32.mrb[0].mxu0
  %v2105 = vadd.f32 0.0, %v2104
  %v2106 = vpop.f32.mrb[0].mxu0
  %2107 = vmatprep.mubr.bf16.mxu0 0
  %2108 = vmatmul.mubr.bf16.gmra.mrb[0].mxu0 %v1227
  %v2109 = vpop.f32.mrb[0].mxu0
  %v2110 = vadd.f32 0.0, %v2109
  %v2111 = vpop.f32.mrb[0].mxu0
  %v2112 = vpop.f32.mrb[0].mxu0
  %v2113 = vadd.f32 0.0, %v2112
  %v2114 = vpop.f32.mrb[0].mxu0
  %2115 = vmatprep.mubr.bf16.mxu0 0
  %2116 = vmatmul.mubr.bf16.gmra.mrb[0].mxu0 %v1230
  %v2117 = vpop.f32.mrb[0].mxu0
  %v2118 = vadd.f32 0.0, %v2117
  %v2119 = vpop.f32.mrb[0].mxu0
  %v2120 = vpop.f32.mrb[0].mxu0
  %v2121 = vadd.f32 0.0, %v2120
  %v2122 = vpop.f32.mrb[0].mxu0
  %2123 = vmatprep.mubr.bf16.mxu0 0
  %2124 = vmatmul.mubr.bf16.gmra.mrb[0].mxu0 %v1233
  %v2125 = vpop.f32.mrb[0].mxu0
  %v2126 = vadd.f32 0.0, %v2125
  %v2127 = vpop.f32.mrb[0].mxu0
  %v2128 = vpop.f32.mrb[0].mxu0
  %v2129 = vadd.f32 0.0, %v2128
  %v2130 = vpop.f32.mrb[0].mxu0
  %2131 = vmatprep.mubr.bf16.mxu0 0
  %2132 = vmatmul.mubr.bf16.gmra.mrb[0].mxu0 %v1236
  %v2133 = vpop.f32.mrb[0].mxu0
  %v2134 = vadd.f32 0.0, %v2133
  %v2135 = vpop.f32.mrb[0].mxu0
  %v2136 = vpop.f32.mrb[0].mxu0
  %v2137 = vadd.f32 0.0, %v2136
  %v2138 = vpop.f32.mrb[0].mxu0
  %2139 = vmatprep.mubr.bf16.mxu0 0
  %2140 = vmatmul.mubr.bf16.gmra.mrb[0].mxu0 %v1239
  %v2141 = vpop.f32.mrb[0].mxu0
  %v2142 = vadd.f32 0.0, %v2141
  %v2143 = vpop.f32.mrb[0].mxu0
  %v2144 = vpop.f32.mrb[0].mxu0
  %v2145 = vadd.f32 0.0, %v2144
  %v2146 = vpop.f32.mrb[0].mxu0
  %2147 = vmatprep.mubr.bf16.mxu0 0
  %2148 = vmatmul.mubr.bf16.gmra.mrb[0].mxu0 %v1242
  %v2149 = vpop.f32.mrb[0].mxu0
  %v2150 = vadd.f32 0.0, %v2149
  %v2151 = vpop.f32.mrb[0].mxu0
  %v2152 = vpop.f32.mrb[0].mxu0
  %v2153 = vadd.f32 0.0, %v2152
  %v2154 = vpop.f32.mrb[0].mxu0
  %2155 = vmatprep.mubr.bf16.mxu0 0
  %2156 = vmatmul.mubr.bf16.gmra.mrb[0].mxu0 %v1245
  %v2157 = vpop.f32.mrb[0].mxu0
  %v2158 = vadd.f32 0.0, %v2157
  %v2159 = vpop.f32.mrb[0].mxu0
  %v2160 = vpop.f32.mrb[0].mxu0
  %v2161 = vadd.f32 0.0, %v2160
  %v2162 = vpop.f32.mrb[0].mxu0
  %2163 = vmatprep.mubr.bf16.mxu0 0
  %2164 = vmatmul.mubr.bf16.gmra.mrb[0].mxu0 %v1248
  %v2165 = vpop.f32.mrb[0].mxu0
  %v2166 = vadd.f32 0.0, %v2165
  %v2167 = vpop.f32.mrb[0].mxu0
  %v2168 = vpop.f32.mrb[0].mxu0
  %v2169 = vadd.f32 0.0, %v2168
  %v2170 = vpop.f32.mrb[0].mxu0
  %2171 = vmatprep.mubr.bf16.mxu0 0
  %2172 = vmatmul.mubr.bf16.gmra.mrb[0].mxu0 %v1251
  %v2173 = vpop.f32.mrb[0].mxu0
  %v2174 = vadd.f32 0.0, %v2173
  %v2175 = vpop.f32.mrb[0].mxu0
  %v2176 = vpop.f32.mrb[0].mxu0
  %v2177 = vadd.f32 0.0, %v2176
  %v2178 = vpop.f32.mrb[0].mxu0
  %2179 = vmatprep.mubr.bf16.mxu0 0
  %2180 = vmatmul.mubr.bf16.gmra.mrb[0].mxu0 %v1254
  %v2181 = vpop.f32.mrb[0].mxu0
  %v2182 = vadd.f32 0.0, %v2181
  %v2183 = vpop.f32.mrb[0].mxu0
  %v2184 = vpop.f32.mrb[0].mxu0
  %v2185 = vadd.f32 0.0, %v2184
  %v2186 = vpop.f32.mrb[0].mxu0
  %2187 = vmatprep.mubr.bf16.mxu0 0
  %2188 = vmatmul.mubr.bf16.gmra.mrb[0].mxu0 %v1257
  %v2189 = vpop.f32.mrb[0].mxu0
  %v2190 = vadd.f32 0.0, %v2189
  %v2191 = vpop.f32.mrb[0].mxu0
  %v2192 = vpop.f32.mrb[0].mxu0
  %v2193 = vadd.f32 0.0, %v2192
  %v2194 = vpop.f32.mrb[0].mxu0
  %2195 = vmatprep.mubr.bf16.mxu0 0
  %2196 = vmatmul.mubr.bf16.gmra.mrb[0].mxu0 %v1260
  %v2197 = vpop.f32.mrb[0].mxu0
  %v2198 = vadd.f32 0.0, %v2197
  %v2199 = vpop.f32.mrb[0].mxu0
  %v2200 = vpop.f32.mrb[0].mxu0
  %v2201 = vadd.f32 0.0, %v2200
  %v2202 = vpop.f32.mrb[0].mxu0
  %2203 = vmatprep.mubr.bf16.mxu0 0
  %2204 = vmatmul.mubr.bf16.gmra.mrb[0].mxu0 %v1263
  %v2205 = vpop.f32.mrb[0].mxu0
  %v2206 = vadd.f32 0.0, %v2205
  %v2207 = vpop.f32.mrb[0].mxu0
  %v2208 = vpop.f32.mrb[0].mxu0
  %v2209 = vadd.f32 0.0, %v2208
  %v2210 = vpop.f32.mrb[0].mxu0
  %2211 = vmatprep.mubr.bf16.mxu0 0
  %2212 = vmatmul.mubr.bf16.gmra.mrb[0].mxu0 %v1266
  %v2213 = vpop.f32.mrb[0].mxu0
  %v2214 = vadd.f32 0.0, %v2213
  %v2215 = vpop.f32.mrb[0].mxu0
  %v2216 = vpop.f32.mrb[0].mxu0
  %v2217 = vadd.f32 0.0, %v2216
  %v2218 = vpop.f32.mrb[0].mxu0
  %2219 = vmatprep.mubr.bf16.mxu0 0
  %2220 = vmatmul.mubr.bf16.gmra.mrb[0].mxu0 %v1269
  %v2221 = vpop.f32.mrb[0].mxu0
  %v2222 = vadd.f32 0.0, %v2221
  %v2223 = vpop.f32.mrb[0].mxu0
  %v2224 = vpop.f32.mrb[0].mxu0
  %v2225 = vadd.f32 0.0, %v2224
  %v2226 = vpop.f32.mrb[0].mxu0
  %2227 = vmatprep.mubr.bf16.mxu0 0
  %2228 = vmatmul.mubr.bf16.gmra.mrb[0].mxu0 %v1272
  %v2229 = vpop.f32.mrb[0].mxu0
  %v2230 = vadd.f32 0.0, %v2229
  %v2231 = vpop.f32.mrb[0].mxu0
  %v2232 = vpop.f32.mrb[0].mxu0
  %v2233 = vadd.f32 0.0, %v2232
  %v2234 = vpop.f32.mrb[0].mxu0
  %2235 = vmatprep.mubr.bf16.mxu0 0
  %2236 = vmatmul.mubr.bf16.gmra.mrb[0].mxu0 %v1275
  %v2237 = vpop.f32.mrb[0].mxu0
  %v2238 = vadd.f32 0.0, %v2237
  %v2239 = vpop.f32.mrb[0].mxu0
  %v2240 = vpop.f32.mrb[0].mxu0
  %v2241 = vadd.f32 0.0, %v2240
  %v2242 = vpop.f32.mrb[0].mxu0
  %2243 = vmatprep.mubr.bf16.mxu0 0
  %2244 = vmatmul.mubr.bf16.gmra.mrb[0].mxu0 %v1278
  %v2245 = vpop.f32.mrb[0].mxu0
  %v2246 = vadd.f32 0.0, %v2245
  %v2247 = vpop.f32.mrb[0].mxu0
  %v2248 = vpop.f32.mrb[0].mxu0
  %v2249 = vadd.f32 0.0, %v2248
  %v2250 = vpop.f32.mrb[0].mxu0
  %2251 = vmatprep.mubr.bf16.mxu0 0
  %2252 = vmatmul.mubr.bf16.gmra.mrb[0].mxu0 %v1281
  %v2253 = vpop.f32.mrb[0].mxu0
  %v2254 = vadd.f32 0.0, %v2253
  %v2255 = vpop.f32.mrb[0].mxu0
  %v2256 = vpop.f32.mrb[0].mxu0
  %v2257 = vadd.f32 0.0, %v2256
  %v2258 = vpop.f32.mrb[0].mxu0
  %2259 = vmatprep.mubr.bf16.mxu0 0
  %2260 = vmatmul.mubr.bf16.gmra.mrb[0].mxu0 %v1284
  %v2261 = vpop.f32.mrb[0].mxu0
  %v2262 = vadd.f32 0.0, %v2261
  %v2263 = vpop.f32.mrb[0].mxu0
  %v2264 = vpop.f32.mrb[0].mxu0
  %v2265 = vadd.f32 0.0, %v2264
  %v2266 = vpop.f32.mrb[0].mxu0
  %2267 = vmatprep.mubr.bf16.mxu0 0
  %2268 = vmatmul.mubr.bf16.gmra.mrb[0].mxu0 %v1287
  %v2269 = vpop.f32.mrb[0].mxu0
  %v2270 = vadd.f32 0.0, %v2269
  %v2271 = vpop.f32.mrb[0].mxu0
  %v2272 = vpop.f32.mrb[0].mxu0
  %v2273 = vadd.f32 0.0, %v2272
  %v2274 = vpop.f32.mrb[0].mxu0
  %2275 = vmatprep.mubr.bf16.mxu0 0
  %2276 = vmatmul.mubr.bf16.gmra.mrb[0].mxu0 %v1290
  %v2277 = vpop.f32.mrb[0].mxu0
  %v2278 = vadd.f32 0.0, %v2277
  %v2279 = vpop.f32.mrb[0].mxu0
  %v2280 = vpop.f32.mrb[0].mxu0
  %v2281 = vadd.f32 0.0, %v2280
  %v2282 = vpop.f32.mrb[0].mxu0
  %2283 = vmatprep.mubr.bf16.mxu0 0
  %2284 = vmatmul.mubr.bf16.gmra.mrb[0].mxu0 %v1293
  %v2285 = vpop.f32.mrb[0].mxu0
  %v2286 = vadd.f32 0.0, %v2285
  %v2287 = vpop.f32.mrb[0].mxu0
  %v2288 = vpop.f32.mrb[0].mxu0
  %v2289 = vadd.f32 0.0, %v2288
  %v2290 = vpop.f32.mrb[0].mxu0
  %2291 = vmatprep.mubr.bf16.mxu0 0
  %2292 = vmatmul.mubr.bf16.gmra.mrb[0].mxu0 %v1296
  %v2293 = vpop.f32.mrb[0].mxu0
  %v2294 = vadd.f32 0.0, %v2293
  %v2295 = vpop.f32.mrb[0].mxu0
  %v2296 = vpop.f32.mrb[0].mxu0
  %v2297 = vadd.f32 0.0, %v2296
  %v2298 = vpop.f32.mrb[0].mxu0
  %2299 = vmatprep.mubr.bf16.mxu0 0
  %2300 = vmatmul.mubr.bf16.gmra.mrb[0].mxu0 %v1299
  %v2301 = vpop.f32.mrb[0].mxu0
  %v2302 = vadd.f32 0.0, %v2301
  %v2303 = vpop.f32.mrb[0].mxu0
  %v2304 = vpop.f32.mrb[0].mxu0
  %v2305 = vadd.f32 0.0, %v2304
  %v2306 = vpop.f32.mrb[0].mxu0
  %2307 = vmatprep.mubr.bf16.mxu0 0
  %2308 = vmatmul.mubr.bf16.gmra.mrb[0].mxu0 %v1302
  %v2309 = vpop.f32.mrb[0].mxu0
  %v2310 = vadd.f32 0.0, %v2309
  %v2311 = vpop.f32.mrb[0].mxu0
  %v2312 = vpop.f32.mrb[0].mxu0
  %v2313 = vadd.f32 0.0, %v2312
  %v2314 = vpop.f32.mrb[0].mxu0
  %2315 = vmatprep.mubr.bf16.mxu0 0
  %2316 = vmatmul.mubr.bf16.gmra.mrb[0].mxu0 %v1305
  %v2317 = vpop.f32.mrb[0].mxu0
  %v2318 = vadd.f32 0.0, %v2317
  %v2319 = vpop.f32.mrb[0].mxu0
  %v2320 = vpop.f32.mrb[0].mxu0
  %v2321 = vadd.f32 0.0, %v2320
  %v2322 = vpop.f32.mrb[0].mxu0
  %2323 = vmatprep.mubr.bf16.mxu0 0
  %2324 = vmatmul.mubr.bf16.gmra.mrb[0].mxu0 %v1308
  %v2325 = vpop.f32.mrb[0].mxu0
  %v2326 = vadd.f32 0.0, %v2325
  %v2327 = vpop.f32.mrb[0].mxu0
  %v2328 = vpop.f32.mrb[0].mxu0
  %v2329 = vadd.f32 0.0, %v2328
  %v2330 = vpop.f32.mrb[0].mxu0
  %2331 = vmatprep.mubr.bf16.mxu0 0
  %2332 = vmatmul.mubr.bf16.gmra.mrb[0].mxu0 %v1311
  %v2333 = vpop.f32.mrb[0].mxu0
  %v2334 = vadd.f32 0.0, %v2333
  %v2335 = vpop.f32.mrb[0].mxu0
  %v2336 = vpop.f32.mrb[0].mxu0
  %v2337 = vadd.f32 0.0, %v2336
  %v2338 = vpop.f32.mrb[0].mxu0
  %2339 = vmatprep.mubr.bf16.mxu0 0
  %2340 = vmatmul.mubr.bf16.gmra.mrb[0].mxu0 %v1314
  %v2341 = vpop.f32.mrb[0].mxu0
  %v2342 = vadd.f32 0.0, %v2341
  %v2343 = vpop.f32.mrb[0].mxu0
  %v2344 = vpop.f32.mrb[0].mxu0
  %v2345 = vadd.f32 0.0, %v2344
  %v2346 = vpop.f32.mrb[0].mxu0
  %2347 = vmatprep.mubr.bf16.mxu0 0
  %2348 = vmatmul.mubr.bf16.gmra.mrb[0].mxu0 %v1317
  %v2349 = vpop.f32.mrb[0].mxu0
  %v2350 = vadd.f32 0.0, %v2349
  %v2351 = vpop.f32.mrb[0].mxu0
  %v2352 = vpop.f32.mrb[0].mxu0
  %v2353 = vadd.f32 0.0, %v2352
  %v2354 = vpop.f32.mrb[0].mxu0
  %2355 = vmatprep.mubr.bf16.mxu0 0
  %2356 = vmatmul.mubr.bf16.gmra.mrb[0].mxu0 %v1320
  %v2357 = vpop.f32.mrb[0].mxu0
  %v2358 = vadd.f32 0.0, %v2357
  %v2359 = vpop.f32.mrb[0].mxu0
  %v2360 = vpop.f32.mrb[0].mxu0
  %v2361 = vadd.f32 0.0, %v2360
  %v2362 = vpop.f32.mrb[0].mxu0
  %2363 = vmatprep.mubr.bf16.mxu0 0
  %2364 = vmatmul.mubr.bf16.gmra.mrb[0].mxu0 %v1323
  %v2365 = vpop.f32.mrb[0].mxu0
  %v2366 = vadd.f32 0.0, %v2365
  %v2367 = vpop.f32.mrb[0].mxu0
  %v2368 = vpop.f32.mrb[0].mxu0
  %v2369 = vadd.f32 0.0, %v2368
  %v2370 = vpop.f32.mrb[0].mxu0
  %2371 = vmatprep.mubr.bf16.mxu0 0
  %2372 = vmatmul.mubr.bf16.gmra.mrb[0].mxu0 %v1326
  %v2373 = vpop.f32.mrb[0].mxu0
  %v2374 = vadd.f32 0.0, %v2373
  %v2375 = vpop.f32.mrb[0].mxu0
  %v2376 = vpop.f32.mrb[0].mxu0
  %v2377 = vadd.f32 0.0, %v2376
  %v2378 = vpop.f32.mrb[0].mxu0
  %2379 = vmatprep.mubr.bf16.mxu0 0
  %2380 = vmatmul.mubr.bf16.gmra.mrb[0].mxu0 %v1329
  %v2381 = vpop.f32.mrb[0].mxu0
  %v2382 = vadd.f32 0.0, %v2381
  %v2383 = vpop.f32.mrb[0].mxu0
  %v2384 = vpop.f32.mrb[0].mxu0
  %v2385 = vadd.f32 0.0, %v2384
  %v2386 = vpop.f32.mrb[0].mxu0
  %2387 = vdwg.mxu0
  %vm2388 = vcmp.ge.f32.partialorder %v1366, 0.0
  %vm2389 = vcmp.ge.f32.partialorder %v1369, 0.0
  %vm2390 = vcmp.ge.f32.partialorder %v1374, 0.0
  %vm2391 = vcmp.ge.f32.partialorder %v1377, 0.0
  %vm2392 = vcmp.ge.f32.partialorder %v1382, 0.0
  %vm2393 = vcmp.ge.f32.partialorder %v1385, 0.0
  %vm2394 = vcmp.ge.f32.partialorder %v1390, 0.0
  %vm2395 = vcmp.ge.f32.partialorder %v1393, 0.0
  %vm2396 = vcmp.ge.f32.partialorder %v1398, 0.0
  %vm2397 = vcmp.ge.f32.partialorder %v1401, 0.0
  %vm2398 = vcmp.ge.f32.partialorder %v1406, 0.0
  %vm2399 = vcmp.ge.f32.partialorder %v1409, 0.0
  %vm2400 = vcmp.ge.f32.partialorder %v1414, 0.0
  %vm2401 = vcmp.ge.f32.partialorder %v1417, 0.0
  %vm2402 = vcmp.ge.f32.partialorder %v1422, 0.0
  %vm2403 = vcmp.ge.f32.partialorder %v1425, 0.0
  %vm2404 = vcmp.ge.f32.partialorder %v1430, 0.0
  %vm2405 = vcmp.ge.f32.partialorder %v1433, 0.0
  %vm2406 = vcmp.ge.f32.partialorder %v1438, 0.0
  %vm2407 = vcmp.ge.f32.partialorder %v1441, 0.0
  %vm2408 = vcmp.ge.f32.partialorder %v1446, 0.0
  %vm2409 = vcmp.ge.f32.partialorder %v1449, 0.0
  %vm2410 = vcmp.ge.f32.partialorder %v1454, 0.0
  %vm2411 = vcmp.ge.f32.partialorder %v1457, 0.0
  %vm2412 = vcmp.ge.f32.partialorder %v1462, 0.0
  %vm2413 = vcmp.ge.f32.partialorder %v1465, 0.0
  %vm2414 = vcmp.ge.f32.partialorder %v1470, 0.0
  %vm2415 = vcmp.ge.f32.partialorder %v1473, 0.0
  %vm2416 = vcmp.ge.f32.partialorder %v1478, 0.0
  %vm2417 = vcmp.ge.f32.partialorder %v1481, 0.0
  %vm2418 = vcmp.ge.f32.partialorder %v1486, 0.0
  %vm2419 = vcmp.ge.f32.partialorder %v1489, 0.0
  %vm2420 = vcmp.ge.f32.partialorder %v1494, 0.0
  %vm2421 = vcmp.ge.f32.partialorder %v1497, 0.0
  %vm2422 = vcmp.ge.f32.partialorder %v1502, 0.0
  %vm2423 = vcmp.ge.f32.partialorder %v1505, 0.0
  %vm2424 = vcmp.ge.f32.partialorder %v1510, 0.0
  %vm2425 = vcmp.ge.f32.partialorder %v1513, 0.0
  %vm2426 = vcmp.ge.f32.partialorder %v1518, 0.0
  %vm2427 = vcmp.ge.f32.partialorder %v1521, 0.0
  %vm2428 = vcmp.ge.f32.partialorder %v1526, 0.0
  %vm2429 = vcmp.ge.f32.partialorder %v1529, 0.0
  %vm2430 = vcmp.ge.f32.partialorder %v1534, 0.0
  %vm2431 = vcmp.ge.f32.partialorder %v1537, 0.0
  %vm2432 = vcmp.ge.f32.partialorder %v1542, 0.0
  %vm2433 = vcmp.ge.f32.partialorder %v1545, 0.0
  %vm2434 = vcmp.ge.f32.partialorder %v1550, 0.0
  %vm2435 = vcmp.ge.f32.partialorder %v1553, 0.0
  %vm2436 = vcmp.ge.f32.partialorder %v1558, 0.0
  %vm2437 = vcmp.ge.f32.partialorder %v1561, 0.0
  %vm2438 = vcmp.ge.f32.partialorder %v1566, 0.0
  %vm2439 = vcmp.ge.f32.partialorder %v1569, 0.0
  %vm2440 = vcmp.ge.f32.partialorder %v1574, 0.0
  %vm2441 = vcmp.ge.f32.partialorder %v1577, 0.0
  %vm2442 = vcmp.ge.f32.partialorder %v1582, 0.0
  %vm2443 = vcmp.ge.f32.partialorder %v1585, 0.0
  %vm2444 = vcmp.ge.f32.partialorder %v1590, 0.0
  %vm2445 = vcmp.ge.f32.partialorder %v1593, 0.0
  %vm2446 = vcmp.ge.f32.partialorder %v1598, 0.0
  %vm2447 = vcmp.ge.f32.partialorder %v1601, 0.0
  %vm2448 = vcmp.ge.f32.partialorder %v1606, 0.0
  %vm2449 = vcmp.ge.f32.partialorder %v1609, 0.0
  %vm2450 = vcmp.ge.f32.partialorder %v1614, 0.0
  %vm2451 = vcmp.ge.f32.partialorder %v1617, 0.0
  %vm2452 = vcmp.ge.f32.partialorder %v1622, 0.0
  %vm2453 = vcmp.ge.f32.partialorder %v1625, 0.0
  %vm2454 = vcmp.ge.f32.partialorder %v1630, 0.0
  %vm2455 = vcmp.ge.f32.partialorder %v1633, 0.0
  %vm2456 = vcmp.ge.f32.partialorder %v1638, 0.0
  %vm2457 = vcmp.ge.f32.partialorder %v1641, 0.0
  %vm2458 = vcmp.ge.f32.partialorder %v1646, 0.0
  %vm2459 = vcmp.ge.f32.partialorder %v1649, 0.0
  %vm2460 = vcmp.ge.f32.partialorder %v1654, 0.0
  %vm2461 = vcmp.ge.f32.partialorder %v1657, 0.0
  %vm2462 = vcmp.ge.f32.partialorder %v1662, 0.0
  %vm2463 = vcmp.ge.f32.partialorder %v1665, 0.0
  %vm2464 = vcmp.ge.f32.partialorder %v1670, 0.0
  %vm2465 = vcmp.ge.f32.partialorder %v1673, 0.0
  %vm2466 = vcmp.ge.f32.partialorder %v1678, 0.0
  %vm2467 = vcmp.ge.f32.partialorder %v1681, 0.0
  %vm2468 = vcmp.ge.f32.partialorder %v1686, 0.0
  %vm2469 = vcmp.ge.f32.partialorder %v1689, 0.0
  %vm2470 = vcmp.ge.f32.partialorder %v1694, 0.0
  %vm2471 = vcmp.ge.f32.partialorder %v1697, 0.0
  %vm2472 = vcmp.ge.f32.partialorder %v1702, 0.0
  %vm2473 = vcmp.ge.f32.partialorder %v1705, 0.0
  %vm2474 = vcmp.ge.f32.partialorder %v1710, 0.0
  %vm2475 = vcmp.ge.f32.partialorder %v1713, 0.0
  %vm2476 = vcmp.ge.f32.partialorder %v1718, 0.0
  %vm2477 = vcmp.ge.f32.partialorder %v1721, 0.0
  %vm2478 = vcmp.ge.f32.partialorder %v1726, 0.0
  %vm2479 = vcmp.ge.f32.partialorder %v1729, 0.0
  %vm2480 = vcmp.ge.f32.partialorder %v1734, 0.0
  %vm2481 = vcmp.ge.f32.partialorder %v1737, 0.0
  %vm2482 = vcmp.ge.f32.partialorder %v1742, 0.0
  %vm2483 = vcmp.ge.f32.partialorder %v1745, 0.0
  %vm2484 = vcmp.ge.f32.partialorder %v1750, 0.0
  %vm2485 = vcmp.ge.f32.partialorder %v1753, 0.0
  %vm2486 = vcmp.ge.f32.partialorder %v1758, 0.0
  %vm2487 = vcmp.ge.f32.partialorder %v1761, 0.0
  %vm2488 = vcmp.ge.f32.partialorder %v1766, 0.0
  %vm2489 = vcmp.ge.f32.partialorder %v1769, 0.0
  %vm2490 = vcmp.ge.f32.partialorder %v1774, 0.0
  %vm2491 = vcmp.ge.f32.partialorder %v1777, 0.0
  %vm2492 = vcmp.ge.f32.partialorder %v1782, 0.0
  %vm2493 = vcmp.ge.f32.partialorder %v1785, 0.0
  %vm2494 = vcmp.ge.f32.partialorder %v1790, 0.0
  %vm2495 = vcmp.ge.f32.partialorder %v1793, 0.0
  %vm2496 = vcmp.ge.f32.partialorder %v1798, 0.0
  %vm2497 = vcmp.ge.f32.partialorder %v1801, 0.0
  %vm2498 = vcmp.ge.f32.partialorder %v1806, 0.0
  %vm2499 = vcmp.ge.f32.partialorder %v1809, 0.0
  %vm2500 = vcmp.ge.f32.partialorder %v1814, 0.0
  %vm2501 = vcmp.ge.f32.partialorder %v1817, 0.0
  %vm2502 = vcmp.ge.f32.partialorder %v1822, 0.0
  %vm2503 = vcmp.ge.f32.partialorder %v1825, 0.0
  %vm2504 = vcmp.ge.f32.partialorder %v1830, 0.0
  %vm2505 = vcmp.ge.f32.partialorder %v1833, 0.0
  %vm2506 = vcmp.ge.f32.partialorder %v1838, 0.0
  %vm2507 = vcmp.ge.f32.partialorder %v1841, 0.0
  %vm2508 = vcmp.ge.f32.partialorder %v1846, 0.0
  %vm2509 = vcmp.ge.f32.partialorder %v1849, 0.0
  %vm2510 = vcmp.ge.f32.partialorder %v1854, 0.0
  %vm2511 = vcmp.ge.f32.partialorder %v1857, 0.0
  %vm2512 = vcmp.ge.f32.partialorder %v1862, 0.0
  %vm2513 = vcmp.ge.f32.partialorder %v1865, 0.0
  %vm2514 = vcmp.ge.f32.partialorder %v1870, 0.0
  %vm2515 = vcmp.ge.f32.partialorder %v1873, 0.0
  %vm2516 = vcmp.ge.f32.partialorder %v1878, 0.0
  %vm2517 = vcmp.ge.f32.partialorder %v1881, 0.0
  %vm2518 = vcmp.ge.f32.partialorder %v1886, 0.0
  %vm2519 = vcmp.ge.f32.partialorder %v1889, 0.0
  %vm2520 = vcmp.ge.f32.partialorder %v1894, 0.0
  %vm2521 = vcmp.ge.f32.partialorder %v1897, 0.0
  %vm2522 = vcmp.ge.f32.partialorder %v1902, 0.0
  %vm2523 = vcmp.ge.f32.partialorder %v1905, 0.0
  %vm2524 = vcmp.ge.f32.partialorder %v1910, 0.0
  %vm2525 = vcmp.ge.f32.partialorder %v1913, 0.0
  %vm2526 = vcmp.ge.f32.partialorder %v1918, 0.0
  %vm2527 = vcmp.ge.f32.partialorder %v1921, 0.0
  %vm2528 = vcmp.ge.f32.partialorder %v1926, 0.0
  %vm2529 = vcmp.ge.f32.partialorder %v1929, 0.0
  %vm2530 = vcmp.ge.f32.partialorder %v1934, 0.0
  %vm2531 = vcmp.ge.f32.partialorder %v1937, 0.0
  %vm2532 = vcmp.ge.f32.partialorder %v1942, 0.0
  %vm2533 = vcmp.ge.f32.partialorder %v1945, 0.0
  %vm2534 = vcmp.ge.f32.partialorder %v1950, 0.0
  %vm2535 = vcmp.ge.f32.partialorder %v1953, 0.0
  %vm2536 = vcmp.ge.f32.partialorder %v1958, 0.0
  %vm2537 = vcmp.ge.f32.partialorder %v1961, 0.0
  %vm2538 = vcmp.ge.f32.partialorder %v1966, 0.0
  %vm2539 = vcmp.ge.f32.partialorder %v1969, 0.0
  %vm2540 = vcmp.ge.f32.partialorder %v1974, 0.0
  %vm2541 = vcmp.ge.f32.partialorder %v1977, 0.0
  %vm2542 = vcmp.ge.f32.partialorder %v1982, 0.0
  %vm2543 = vcmp.ge.f32.partialorder %v1985, 0.0
  %vm2544 = vcmp.ge.f32.partialorder %v1990, 0.0
  %vm2545 = vcmp.ge.f32.partialorder %v1993, 0.0
  %vm2546 = vcmp.ge.f32.partialorder %v1998, 0.0
  %vm2547 = vcmp.ge.f32.partialorder %v2001, 0.0
  %vm2548 = vcmp.ge.f32.partialorder %v2006, 0.0
  %vm2549 = vcmp.ge.f32.partialorder %v2009, 0.0
  %vm2550 = vcmp.ge.f32.partialorder %v2014, 0.0
  %vm2551 = vcmp.ge.f32.partialorder %v2017, 0.0
  %vm2552 = vcmp.ge.f32.partialorder %v2022, 0.0
  %vm2553 = vcmp.ge.f32.partialorder %v2025, 0.0
  %vm2554 = vcmp.ge.f32.partialorder %v2030, 0.0
  %vm2555 = vcmp.ge.f32.partialorder %v2033, 0.0
  %vm2556 = vcmp.ge.f32.partialorder %v2038, 0.0
  %vm2557 = vcmp.ge.f32.partialorder %v2041, 0.0
  %vm2558 = vcmp.ge.f32.partialorder %v2046, 0.0
  %vm2559 = vcmp.ge.f32.partialorder %v2049, 0.0
  %vm2560 = vcmp.ge.f32.partialorder %v2054, 0.0
  %vm2561 = vcmp.ge.f32.partialorder %v2057, 0.0
  %vm2562 = vcmp.ge.f32.partialorder %v2062, 0.0
  %vm2563 = vcmp.ge.f32.partialorder %v2065, 0.0
  %vm2564 = vcmp.ge.f32.partialorder %v2070, 0.0
  %vm2565 = vcmp.ge.f32.partialorder %v2073, 0.0
  %vm2566 = vcmp.ge.f32.partialorder %v2078, 0.0
  %vm2567 = vcmp.ge.f32.partialorder %v2081, 0.0
  %vm2568 = vcmp.ge.f32.partialorder %v2086, 0.0
  %vm2569 = vcmp.ge.f32.partialorder %v2089, 0.0
  %vm2570 = vcmp.ge.f32.partialorder %v2094, 0.0
  %vm2571 = vcmp.ge.f32.partialorder %v2097, 0.0
  %vm2572 = vcmp.ge.f32.partialorder %v2102, 0.0
  %vm2573 = vcmp.ge.f32.partialorder %v2105, 0.0
  %vm2574 = vcmp.ge.f32.partialorder %v2110, 0.0
  %vm2575 = vcmp.ge.f32.partialorder %v2113, 0.0
  %vm2576 = vcmp.ge.f32.partialorder %v2118, 0.0
  %vm2577 = vcmp.ge.f32.partialorder %v2121, 0.0
  %vm2578 = vcmp.ge.f32.partialorder %v2126, 0.0
  %vm2579 = vcmp.ge.f32.partialorder %v2129, 0.0
  %vm2580 = vcmp.ge.f32.partialorder %v2134, 0.0
  %vm2581 = vcmp.ge.f32.partialorder %v2137, 0.0
  %vm2582 = vcmp.ge.f32.partialorder %v2142, 0.0
  %vm2583 = vcmp.ge.f32.partialorder %v2145, 0.0
  %vm2584 = vcmp.ge.f32.partialorder %v2150, 0.0
  %vm2585 = vcmp.ge.f32.partialorder %v2153, 0.0
  %vm2586 = vcmp.ge.f32.partialorder %v2158, 0.0
  %vm2587 = vcmp.ge.f32.partialorder %v2161, 0.0
  %vm2588 = vcmp.ge.f32.partialorder %v2166, 0.0
  %vm2589 = vcmp.ge.f32.partialorder %v2169, 0.0
  %vm2590 = vcmp.ge.f32.partialorder %v2174, 0.0
  %vm2591 = vcmp.ge.f32.partialorder %v2177, 0.0
  %vm2592 = vcmp.ge.f32.partialorder %v2182, 0.0
  %vm2593 = vcmp.ge.f32.partialorder %v2185, 0.0
  %vm2594 = vcmp.ge.f32.partialorder %v2190, 0.0
  %vm2595 = vcmp.ge.f32.partialorder %v2193, 0.0
  %vm2596 = vcmp.ge.f32.partialorder %v2198, 0.0
  %vm2597 = vcmp.ge.f32.partialorder %v2201, 0.0
  %vm2598 = vcmp.ge.f32.partialorder %v2206, 0.0
  %vm2599 = vcmp.ge.f32.partialorder %v2209, 0.0
  %vm2600 = vcmp.ge.f32.partialorder %v2214, 0.0
  %vm2601 = vcmp.ge.f32.partialorder %v2217, 0.0
  %vm2602 = vcmp.ge.f32.partialorder %v2222, 0.0
  %vm2603 = vcmp.ge.f32.partialorder %v2225, 0.0
  %vm2604 = vcmp.ge.f32.partialorder %v2230, 0.0
  %vm2605 = vcmp.ge.f32.partialorder %v2233, 0.0
  %vm2606 = vcmp.ge.f32.partialorder %v2238, 0.0
  %vm2607 = vcmp.ge.f32.partialorder %v2241, 0.0
  %vm2608 = vcmp.ge.f32.partialorder %v2246, 0.0
  %vm2609 = vcmp.ge.f32.partialorder %v2249, 0.0
  %vm2610 = vcmp.ge.f32.partialorder %v2254, 0.0
  %vm2611 = vcmp.ge.f32.partialorder %v2257, 0.0
  %vm2612 = vcmp.ge.f32.partialorder %v2262, 0.0
  %vm2613 = vcmp.ge.f32.partialorder %v2265, 0.0
  %vm2614 = vcmp.ge.f32.partialorder %v2270, 0.0
  %vm2615 = vcmp.ge.f32.partialorder %v2273, 0.0
  %vm2616 = vcmp.ge.f32.partialorder %v2278, 0.0
  %vm2617 = vcmp.ge.f32.partialorder %v2281, 0.0
  %vm2618 = vcmp.ge.f32.partialorder %v2286, 0.0
  %vm2619 = vcmp.ge.f32.partialorder %v2289, 0.0
  %vm2620 = vcmp.ge.f32.partialorder %v2294, 0.0
  %vm2621 = vcmp.ge.f32.partialorder %v2297, 0.0
  %vm2622 = vcmp.ge.f32.partialorder %v2302, 0.0
  %vm2623 = vcmp.ge.f32.partialorder %v2305, 0.0
  %vm2624 = vcmp.ge.f32.partialorder %v2310, 0.0
  %vm2625 = vcmp.ge.f32.partialorder %v2313, 0.0
  %vm2626 = vcmp.ge.f32.partialorder %v2318, 0.0
  %vm2627 = vcmp.ge.f32.partialorder %v2321, 0.0
  %vm2628 = vcmp.ge.f32.partialorder %v2326, 0.0
  %vm2629 = vcmp.ge.f32.partialorder %v2329, 0.0
  %vm2630 = vcmp.ge.f32.partialorder %v2334, 0.0
  %vm2631 = vcmp.ge.f32.partialorder %v2337, 0.0
  %vm2632 = vcmp.ge.f32.partialorder %v2342, 0.0
  %vm2633 = vcmp.ge.f32.partialorder %v2345, 0.0
  %vm2634 = vcmp.ge.f32.partialorder %v2350, 0.0
  %vm2635 = vcmp.ge.f32.partialorder %v2353, 0.0
  %vm2636 = vcmp.ge.f32.partialorder %v2358, 0.0
  %vm2637 = vcmp.ge.f32.partialorder %v2361, 0.0
  %vm2638 = vcmp.ge.f32.partialorder %v2366, 0.0
  %vm2639 = vcmp.ge.f32.partialorder %v2369, 0.0
  %vm2640 = vcmp.ge.f32.partialorder %v2374, 0.0
  %vm2641 = vcmp.ge.f32.partialorder %v2377, 0.0
  %vm2642 = vcmp.ge.f32.partialorder %v2382, 0.0
  %vm2643 = vcmp.ge.f32.partialorder %v2385, 0.0
  %v2644 = vmul.f32 %v1366, 0.2
  %v2645 = vmul.f32 %v1369, 0.2
  %v2646 = vmul.f32 %v1374, 0.2
  %v2647 = vmul.f32 %v1377, 0.2
  %v2648 = vmul.f32 %v1382, 0.2
  %v2649 = vmul.f32 %v1385, 0.2
  %v2650 = vmul.f32 %v1390, 0.2
  %v2651 = vmul.f32 %v1393, 0.2
  %v2652 = vmul.f32 %v1398, 0.2
  %v2653 = vmul.f32 %v1401, 0.2
  %v2654 = vmul.f32 %v1406, 0.2
  %v2655 = vmul.f32 %v1409, 0.2
  %v2656 = vmul.f32 %v1414, 0.2
  %v2657 = vmul.f32 %v1417, 0.2
  %v2658 = vmul.f32 %v1422, 0.2
  %v2659 = vmul.f32 %v1425, 0.2
  %v2660 = vmul.f32 %v1430, 0.2
  %v2661 = vmul.f32 %v1433, 0.2
  %v2662 = vmul.f32 %v1438, 0.2
  %v2663 = vmul.f32 %v1441, 0.2
  %v2664 = vmul.f32 %v1446, 0.2
  %v2665 = vmul.f32 %v1449, 0.2
  %v2666 = vmul.f32 %v1454, 0.2
  %v2667 = vmul.f32 %v1457, 0.2
  %v2668 = vmul.f32 %v1462, 0.2
  %v2669 = vmul.f32 %v1465, 0.2
  %v2670 = vmul.f32 %v1470, 0.2
  %v2671 = vmul.f32 %v1473, 0.2
  %v2672 = vmul.f32 %v1478, 0.2
  %v2673 = vmul.f32 %v1481, 0.2
  %v2674 = vmul.f32 %v1486, 0.2
  %v2675 = vmul.f32 %v1489, 0.2
  %v2676 = vmul.f32 %v1494, 0.2
  %v2677 = vmul.f32 %v1497, 0.2
  %v2678 = vmul.f32 %v1502, 0.2
  %v2679 = vmul.f32 %v1505, 0.2
  %v2680 = vmul.f32 %v1510, 0.2
  %v2681 = vmul.f32 %v1513, 0.2
  %v2682 = vmul.f32 %v1518, 0.2
  %v2683 = vmul.f32 %v1521, 0.2
  %v2684 = vmul.f32 %v1526, 0.2
  %v2685 = vmul.f32 %v1529, 0.2
  %v2686 = vmul.f32 %v1534, 0.2
  %v2687 = vmul.f32 %v1537, 0.2
  %v2688 = vmul.f32 %v1542, 0.2
  %v2689 = vmul.f32 %v1545, 0.2
  %v2690 = vmul.f32 %v1550, 0.2
  %v2691 = vmul.f32 %v1553, 0.2
  %v2692 = vmul.f32 %v1558, 0.2
  %v2693 = vmul.f32 %v1561, 0.2
  %v2694 = vmul.f32 %v1566, 0.2
  %v2695 = vmul.f32 %v1569, 0.2
  %v2696 = vmul.f32 %v1574, 0.2
  %v2697 = vmul.f32 %v1577, 0.2
  %v2698 = vmul.f32 %v1582, 0.2
  %v2699 = vmul.f32 %v1585, 0.2
  %v2700 = vmul.f32 %v1590, 0.2
  %v2701 = vmul.f32 %v1593, 0.2
  %v2702 = vmul.f32 %v1598, 0.2
  %v2703 = vmul.f32 %v1601, 0.2
  %v2704 = vmul.f32 %v1606, 0.2
  %v2705 = vmul.f32 %v1609, 0.2
  %v2706 = vmul.f32 %v1614, 0.2
  %v2707 = vmul.f32 %v1617, 0.2
  %v2708 = vmul.f32 %v1622, 0.2
  %v2709 = vmul.f32 %v1625, 0.2
  %v2710 = vmul.f32 %v1630, 0.2
  %v2711 = vmul.f32 %v1633, 0.2
  %v2712 = vmul.f32 %v1638, 0.2
  %v2713 = vmul.f32 %v1641, 0.2
  %v2714 = vmul.f32 %v1646, 0.2
  %v2715 = vmul.f32 %v1649, 0.2
  %v2716 = vmul.f32 %v1654, 0.2
  %v2717 = vmul.f32 %v1657, 0.2
  %v2718 = vmul.f32 %v1662, 0.2
  %v2719 = vmul.f32 %v1665, 0.2
  %v2720 = vmul.f32 %v1670, 0.2
  %v2721 = vmul.f32 %v1673, 0.2
  %v2722 = vmul.f32 %v1678, 0.2
  %v2723 = vmul.f32 %v1681, 0.2
  %v2724 = vmul.f32 %v1686, 0.2
  %v2725 = vmul.f32 %v1689, 0.2
  %v2726 = vmul.f32 %v1694, 0.2
  %v2727 = vmul.f32 %v1697, 0.2
  %v2728 = vmul.f32 %v1702, 0.2
  %v2729 = vmul.f32 %v1705, 0.2
  %v2730 = vmul.f32 %v1710, 0.2
  %v2731 = vmul.f32 %v1713, 0.2
  %v2732 = vmul.f32 %v1718, 0.2
  %v2733 = vmul.f32 %v1721, 0.2
  %v2734 = vmul.f32 %v1726, 0.2
  %v2735 = vmul.f32 %v1729, 0.2
  %v2736 = vmul.f32 %v1734, 0.2
  %v2737 = vmul.f32 %v1737, 0.2
  %v2738 = vmul.f32 %v1742, 0.2
  %v2739 = vmul.f32 %v1745, 0.2
  %v2740 = vmul.f32 %v1750, 0.2
  %v2741 = vmul.f32 %v1753, 0.2
  %v2742 = vmul.f32 %v1758, 0.2
  %v2743 = vmul.f32 %v1761, 0.2
  %v2744 = vmul.f32 %v1766, 0.2
  %v2745 = vmul.f32 %v1769, 0.2
  %v2746 = vmul.f32 %v1774, 0.2
  %v2747 = vmul.f32 %v1777, 0.2
  %v2748 = vmul.f32 %v1782, 0.2
  %v2749 = vmul.f32 %v1785, 0.2
  %v2750 = vmul.f32 %v1790, 0.2
  %v2751 = vmul.f32 %v1793, 0.2
  %v2752 = vmul.f32 %v1798, 0.2
  %v2753 = vmul.f32 %v1801, 0.2
  %v2754 = vmul.f32 %v1806, 0.2
  %v2755 = vmul.f32 %v1809, 0.2
  %v2756 = vmul.f32 %v1814, 0.2
  %v2757 = vmul.f32 %v1817, 0.2
  %v2758 = vmul.f32 %v1822, 0.2
  %v2759 = vmul.f32 %v1825, 0.2
  %v2760 = vmul.f32 %v1830, 0.2
  %v2761 = vmul.f32 %v1833, 0.2
  %v2762 = vmul.f32 %v1838, 0.2
  %v2763 = vmul.f32 %v1841, 0.2
  %v2764 = vmul.f32 %v1846, 0.2
  %v2765 = vmul.f32 %v1849, 0.2
  %v2766 = vmul.f32 %v1854, 0.2
  %v2767 = vmul.f32 %v1857, 0.2
  %v2768 = vmul.f32 %v1862, 0.2
  %v2769 = vmul.f32 %v1865, 0.2
  %v2770 = vmul.f32 %v1870, 0.2
  %v2771 = vmul.f32 %v1873, 0.2
  %v2772 = vmul.f32 %v1878, 0.2
  %v2773 = vmul.f32 %v1881, 0.2
  %v2774 = vmul.f32 %v1886, 0.2
  %v2775 = vmul.f32 %v1889, 0.2
  %v2776 = vmul.f32 %v1894, 0.2
  %v2777 = vmul.f32 %v1897, 0.2
  %v2778 = vmul.f32 %v1902, 0.2
  %v2779 = vmul.f32 %v1905, 0.2
  %v2780 = vmul.f32 %v1910, 0.2
  %v2781 = vmul.f32 %v1913, 0.2
  %v2782 = vmul.f32 %v1918, 0.2
  %v2783 = vmul.f32 %v1921, 0.2
  %v2784 = vmul.f32 %v1926, 0.2
  %v2785 = vmul.f32 %v1929, 0.2
  %v2786 = vmul.f32 %v1934, 0.2
  %v2787 = vmul.f32 %v1937, 0.2
  %v2788 = vmul.f32 %v1942, 0.2
  %v2789 = vmul.f32 %v1945, 0.2
  %v2790 = vmul.f32 %v1950, 0.2
  %v2791 = vmul.f32 %v1953, 0.2
  %v2792 = vmul.f32 %v1958, 0.2
  %v2793 = vmul.f32 %v1961, 0.2
  %v2794 = vmul.f32 %v1966, 0.2
  %v2795 = vmul.f32 %v1969, 0.2
  %v2796 = vmul.f32 %v1974, 0.2
  %v2797 = vmul.f32 %v1977, 0.2
  %v2798 = vmul.f32 %v1982, 0.2
  %v2799 = vmul.f32 %v1985, 0.2
  %v2800 = vmul.f32 %v1990, 0.2
  %v2801 = vmul.f32 %v1993, 0.2
  %v2802 = vmul.f32 %v1998, 0.2
  %v2803 = vmul.f32 %v2001, 0.2
  %v2804 = vmul.f32 %v2006, 0.2
  %v2805 = vmul.f32 %v2009, 0.2
  %v2806 = vmul.f32 %v2014, 0.2
  %v2807 = vmul.f32 %v2017, 0.2
  %v2808 = vmul.f32 %v2022, 0.2
  %v2809 = vmul.f32 %v2025, 0.2
  %v2810 = vmul.f32 %v2030, 0.2
  %v2811 = vmul.f32 %v2033, 0.2
  %v2812 = vmul.f32 %v2038, 0.2
  %v2813 = vmul.f32 %v2041, 0.2
  %v2814 = vmul.f32 %v2046, 0.2
  %v2815 = vmul.f32 %v2049, 0.2
  %v2816 = vmul.f32 %v2054, 0.2
  %v2817 = vmul.f32 %v2057, 0.2
  %v2818 = vmul.f32 %v2062, 0.2
  %v2819 = vmul.f32 %v2065, 0.2
  %v2820 = vmul.f32 %v2070, 0.2
  %v2821 = vmul.f32 %v2073, 0.2
  %v2822 = vmul.f32 %v2078, 0.2
  %v2823 = vmul.f32 %v2081, 0.2
  %v2824 = vmul.f32 %v2086, 0.2
  %v2825 = vmul.f32 %v2089, 0.2
  %v2826 = vmul.f32 %v2094, 0.2
  %v2827 = vmul.f32 %v2097, 0.2
  %v2828 = vmul.f32 %v2102, 0.2
  %v2829 = vmul.f32 %v2105, 0.2
  %v2830 = vmul.f32 %v2110, 0.2
  %v2831 = vmul.f32 %v2113, 0.2
  %v2832 = vmul.f32 %v2118, 0.2
  %v2833 = vmul.f32 %v2121, 0.2
  %v2834 = vmul.f32 %v2126, 0.2
  %v2835 = vmul.f32 %v2129, 0.2
  %v2836 = vmul.f32 %v2134, 0.2
  %v2837 = vmul.f32 %v2137, 0.2
  %v2838 = vmul.f32 %v2142, 0.2
  %v2839 = vmul.f32 %v2145, 0.2
  %v2840 = vmul.f32 %v2150, 0.2
  %v2841 = vmul.f32 %v2153, 0.2
  %v2842 = vmul.f32 %v2158, 0.2
  %v2843 = vmul.f32 %v2161, 0.2
  %v2844 = vmul.f32 %v2166, 0.2
  %v2845 = vmul.f32 %v2169, 0.2
  %v2846 = vmul.f32 %v2174, 0.2
  %v2847 = vmul.f32 %v2177, 0.2
  %v2848 = vmul.f32 %v2182, 0.2
  %v2849 = vmul.f32 %v2185, 0.2
  %v2850 = vmul.f32 %v2190, 0.2
  %v2851 = vmul.f32 %v2193, 0.2
  %v2852 = vmul.f32 %v2198, 0.2
  %v2853 = vmul.f32 %v2201, 0.2
  %v2854 = vmul.f32 %v2206, 0.2
  %v2855 = vmul.f32 %v2209, 0.2
  %v2856 = vmul.f32 %v2214, 0.2
  %v2857 = vmul.f32 %v2217, 0.2
  %v2858 = vmul.f32 %v2222, 0.2
  %v2859 = vmul.f32 %v2225, 0.2
  %v2860 = vmul.f32 %v2230, 0.2
  %v2861 = vmul.f32 %v2233, 0.2
  %v2862 = vmul.f32 %v2238, 0.2
  %v2863 = vmul.f32 %v2241, 0.2
  %v2864 = vmul.f32 %v2246, 0.2
  %v2865 = vmul.f32 %v2249, 0.2
  %v2866 = vmul.f32 %v2254, 0.2
  %v2867 = vmul.f32 %v2257, 0.2
  %v2868 = vmul.f32 %v2262, 0.2
  %v2869 = vmul.f32 %v2265, 0.2
  %v2870 = vmul.f32 %v2270, 0.2
  %v2871 = vmul.f32 %v2273, 0.2
  %v2872 = vmul.f32 %v2278, 0.2
  %v2873 = vmul.f32 %v2281, 0.2
  %v2874 = vmul.f32 %v2286, 0.2
  %v2875 = vmul.f32 %v2289, 0.2
  %v2876 = vmul.f32 %v2294, 0.2
  %v2877 = vmul.f32 %v2297, 0.2
  %v2878 = vmul.f32 %v2302, 0.2
  %v2879 = vmul.f32 %v2305, 0.2
  %v2880 = vmul.f32 %v2310, 0.2
  %v2881 = vmul.f32 %v2313, 0.2
  %v2882 = vmul.f32 %v2318, 0.2
  %v2883 = vmul.f32 %v2321, 0.2
  %v2884 = vmul.f32 %v2326, 0.2
  %v2885 = vmul.f32 %v2329, 0.2
  %v2886 = vmul.f32 %v2334, 0.2
  %v2887 = vmul.f32 %v2337, 0.2
  %v2888 = vmul.f32 %v2342, 0.2
  %v2889 = vmul.f32 %v2345, 0.2
  %v2890 = vmul.f32 %v2350, 0.2
  %v2891 = vmul.f32 %v2353, 0.2
  %v2892 = vmul.f32 %v2358, 0.2
  %v2893 = vmul.f32 %v2361, 0.2
  %v2894 = vmul.f32 %v2366, 0.2
  %v2895 = vmul.f32 %v2369, 0.2
  %v2896 = vmul.f32 %v2374, 0.2
  %v2897 = vmul.f32 %v2377, 0.2
  %v2898 = vmul.f32 %v2382, 0.2
  %v2899 = vmul.f32 %v2385, 0.2
  %v2900 = vsel %vm2388, %v1366, %v2644
  %v2901 = vsel %vm2389, %v1369, %v2645
  %v2902 = vsel %vm2390, %v1374, %v2646
  %v2903 = vsel %vm2391, %v1377, %v2647
  %v2904 = vsel %vm2392, %v1382, %v2648
  %v2905 = vsel %vm2393, %v1385, %v2649
  %v2906 = vsel %vm2394, %v1390, %v2650
  %v2907 = vsel %vm2395, %v1393, %v2651
  %v2908 = vsel %vm2396, %v1398, %v2652
  %v2909 = vsel %vm2397, %v1401, %v2653
  %v2910 = vsel %vm2398, %v1406, %v2654
  %v2911 = vsel %vm2399, %v1409, %v2655
  %v2912 = vsel %vm2400, %v1414, %v2656
  %v2913 = vsel %vm2401, %v1417, %v2657
  %v2914 = vsel %vm2402, %v1422, %v2658
  %v2915 = vsel %vm2403, %v1425, %v2659
  %v2916 = vsel %vm2404, %v1430, %v2660
  %v2917 = vsel %vm2405, %v1433, %v2661
  %v2918 = vsel %vm2406, %v1438, %v2662
  %v2919 = vsel %vm2407, %v1441, %v2663
  %v2920 = vsel %vm2408, %v1446, %v2664
  %v2921 = vsel %vm2409, %v1449, %v2665
  %v2922 = vsel %vm2410, %v1454, %v2666
  %v2923 = vsel %vm2411, %v1457, %v2667
  %v2924 = vsel %vm2412, %v1462, %v2668
  %v2925 = vsel %vm2413, %v1465, %v2669
  %v2926 = vsel %vm2414, %v1470, %v2670
  %v2927 = vsel %vm2415, %v1473, %v2671
  %v2928 = vsel %vm2416, %v1478, %v2672
  %v2929 = vsel %vm2417, %v1481, %v2673
  %v2930 = vsel %vm2418, %v1486, %v2674
  %v2931 = vsel %vm2419, %v1489, %v2675
  %v2932 = vsel %vm2420, %v1494, %v2676
  %v2933 = vsel %vm2421, %v1497, %v2677
  %v2934 = vsel %vm2422, %v1502, %v2678
  %v2935 = vsel %vm2423, %v1505, %v2679
  %v2936 = vsel %vm2424, %v1510, %v2680
  %v2937 = vsel %vm2425, %v1513, %v2681
  %v2938 = vsel %vm2426, %v1518, %v2682
  %v2939 = vsel %vm2427, %v1521, %v2683
  %v2940 = vsel %vm2428, %v1526, %v2684
  %v2941 = vsel %vm2429, %v1529, %v2685
  %v2942 = vsel %vm2430, %v1534, %v2686
  %v2943 = vsel %vm2431, %v1537, %v2687
  %v2944 = vsel %vm2432, %v1542, %v2688
  %v2945 = vsel %vm2433, %v1545, %v2689
  %v2946 = vsel %vm2434, %v1550, %v2690
  %v2947 = vsel %vm2435, %v1553, %v2691
  %v2948 = vsel %vm2436, %v1558, %v2692
  %v2949 = vsel %vm2437, %v1561, %v2693
  %v2950 = vsel %vm2438, %v1566, %v2694
  %v2951 = vsel %vm2439, %v1569, %v2695
  %v2952 = vsel %vm2440, %v1574, %v2696
  %v2953 = vsel %vm2441, %v1577, %v2697
  %v2954 = vsel %vm2442, %v1582, %v2698
  %v2955 = vsel %vm2443, %v1585, %v2699
  %v2956 = vsel %vm2444, %v1590, %v2700
  %v2957 = vsel %vm2445, %v1593, %v2701
  %v2958 = vsel %vm2446, %v1598, %v2702
  %v2959 = vsel %vm2447, %v1601, %v2703
  %v2960 = vsel %vm2448, %v1606, %v2704
  %v2961 = vsel %vm2449, %v1609, %v2705
  %v2962 = vsel %vm2450, %v1614, %v2706
  %v2963 = vsel %vm2451, %v1617, %v2707
  %v2964 = vsel %vm2452, %v1622, %v2708
  %v2965 = vsel %vm2453, %v1625, %v2709
  %v2966 = vsel %vm2454, %v1630, %v2710
  %v2967 = vsel %vm2455, %v1633, %v2711
  %v2968 = vsel %vm2456, %v1638, %v2712
  %v2969 = vsel %vm2457, %v1641, %v2713
  %v2970 = vsel %vm2458, %v1646, %v2714
  %v2971 = vsel %vm2459, %v1649, %v2715
  %v2972 = vsel %vm2460, %v1654, %v2716
  %v2973 = vsel %vm2461, %v1657, %v2717
  %v2974 = vsel %vm2462, %v1662, %v2718
  %v2975 = vsel %vm2463, %v1665, %v2719
  %v2976 = vsel %vm2464, %v1670, %v2720
  %v2977 = vsel %vm2465, %v1673, %v2721
  %v2978 = vsel %vm2466, %v1678, %v2722
  %v2979 = vsel %vm2467, %v1681, %v2723
  %v2980 = vsel %vm2468, %v1686, %v2724
  %v2981 = vsel %vm2469, %v1689, %v2725
  %v2982 = vsel %vm2470, %v1694, %v2726
  %v2983 = vsel %vm2471, %v1697, %v2727
  %v2984 = vsel %vm2472, %v1702, %v2728
  %v2985 = vsel %vm2473, %v1705, %v2729
  %v2986 = vsel %vm2474, %v1710, %v2730
  %v2987 = vsel %vm2475, %v1713, %v2731
  %v2988 = vsel %vm2476, %v1718, %v2732
  %v2989 = vsel %vm2477, %v1721, %v2733
  %v2990 = vsel %vm2478, %v1726, %v2734
  %v2991 = vsel %vm2479, %v1729, %v2735
  %v2992 = vsel %vm2480, %v1734, %v2736
  %v2993 = vsel %vm2481, %v1737, %v2737
  %v2994 = vsel %vm2482, %v1742, %v2738
  %v2995 = vsel %vm2483, %v1745, %v2739
  %v2996 = vsel %vm2484, %v1750, %v2740
  %v2997 = vsel %vm2485, %v1753, %v2741
  %v2998 = vsel %vm2486, %v1758, %v2742
  %v2999 = vsel %vm2487, %v1761, %v2743
  %v3000 = vsel %vm2488, %v1766, %v2744
  %v3001 = vsel %vm2489, %v1769, %v2745
  %v3002 = vsel %vm2490, %v1774, %v2746
  %v3003 = vsel %vm2491, %v1777, %v2747
  %v3004 = vsel %vm2492, %v1782, %v2748
  %v3005 = vsel %vm2493, %v1785, %v2749
  %v3006 = vsel %vm2494, %v1790, %v2750
  %v3007 = vsel %vm2495, %v1793, %v2751
  %v3008 = vsel %vm2496, %v1798, %v2752
  %v3009 = vsel %vm2497, %v1801, %v2753
  %v3010 = vsel %vm2498, %v1806, %v2754
  %v3011 = vsel %vm2499, %v1809, %v2755
  %v3012 = vsel %vm2500, %v1814, %v2756
  %v3013 = vsel %vm2501, %v1817, %v2757
  %v3014 = vsel %vm2502, %v1822, %v2758
  %v3015 = vsel %vm2503, %v1825, %v2759
  %v3016 = vsel %vm2504, %v1830, %v2760
  %v3017 = vsel %vm2505, %v1833, %v2761
  %v3018 = vsel %vm2506, %v1838, %v2762
  %v3019 = vsel %vm2507, %v1841, %v2763
  %v3020 = vsel %vm2508, %v1846, %v2764
  %v3021 = vsel %vm2509, %v1849, %v2765
  %v3022 = vsel %vm2510, %v1854, %v2766
  %v3023 = vsel %vm2511, %v1857, %v2767
  %v3024 = vsel %vm2512, %v1862, %v2768
  %v3025 = vsel %vm2513, %v1865, %v2769
  %v3026 = vsel %vm2514, %v1870, %v2770
  %v3027 = vsel %vm2515, %v1873, %v2771
  %v3028 = vsel %vm2516, %v1878, %v2772
  %v3029 = vsel %vm2517, %v1881, %v2773
  %v3030 = vsel %vm2518, %v1886, %v2774
  %v3031 = vsel %vm2519, %v1889, %v2775
  %v3032 = vsel %vm2520, %v1894, %v2776
  %v3033 = vsel %vm2521, %v1897, %v2777
  %v3034 = vsel %vm2522, %v1902, %v2778
  %v3035 = vsel %vm2523, %v1905, %v2779
  %v3036 = vsel %vm2524, %v1910, %v2780
  %v3037 = vsel %vm2525, %v1913, %v2781
  %v3038 = vsel %vm2526, %v1918, %v2782
  %v3039 = vsel %vm2527, %v1921, %v2783
  %v3040 = vsel %vm2528, %v1926, %v2784
  %v3041 = vsel %vm2529, %v1929, %v2785
  %v3042 = vsel %vm2530, %v1934, %v2786
  %v3043 = vsel %vm2531, %v1937, %v2787
  %v3044 = vsel %vm2532, %v1942, %v2788
  %v3045 = vsel %vm2533, %v1945, %v2789
  %v3046 = vsel %vm2534, %v1950, %v2790
  %v3047 = vsel %vm2535, %v1953, %v2791
  %v3048 = vsel %vm2536, %v1958, %v2792
  %v3049 = vsel %vm2537, %v1961, %v2793
  %v3050 = vsel %vm2538, %v1966, %v2794
  %v3051 = vsel %vm2539, %v1969, %v2795
  %v3052 = vsel %vm2540, %v1974, %v2796
  %v3053 = vsel %vm2541, %v1977, %v2797
  %v3054 = vsel %vm2542, %v1982, %v2798
  %v3055 = vsel %vm2543, %v1985, %v2799
  %v3056 = vsel %vm2544, %v1990, %v2800
  %v3057 = vsel %vm2545, %v1993, %v2801
  %v3058 = vsel %vm2546, %v1998, %v2802
  %v3059 = vsel %vm2547, %v2001, %v2803
  %v3060 = vsel %vm2548, %v2006, %v2804
  %v3061 = vsel %vm2549, %v2009, %v2805
  %v3062 = vsel %vm2550, %v2014, %v2806
  %v3063 = vsel %vm2551, %v2017, %v2807
  %v3064 = vsel %vm2552, %v2022, %v2808
  %v3065 = vsel %vm2553, %v2025, %v2809
  %v3066 = vsel %vm2554, %v2030, %v2810
  %v3067 = vsel %vm2555, %v2033, %v2811
  %v3068 = vsel %vm2556, %v2038, %v2812
  %v3069 = vsel %vm2557, %v2041, %v2813
  %v3070 = vsel %vm2558, %v2046, %v2814
  %v3071 = vsel %vm2559, %v2049, %v2815
  %v3072 = vsel %vm2560, %v2054, %v2816
  %v3073 = vsel %vm2561, %v2057, %v2817
  %v3074 = vsel %vm2562, %v2062, %v2818
  %v3075 = vsel %vm2563, %v2065, %v2819
  %v3076 = vsel %vm2564, %v2070, %v2820
  %v3077 = vsel %vm2565, %v2073, %v2821
  %v3078 = vsel %vm2566, %v2078, %v2822
  %v3079 = vsel %vm2567, %v2081, %v2823
  %v3080 = vsel %vm2568, %v2086, %v2824
  %v3081 = vsel %vm2569, %v2089, %v2825
  %v3082 = vsel %vm2570, %v2094, %v2826
  %v3083 = vsel %vm2571, %v2097, %v2827
  %v3084 = vsel %vm2572, %v2102, %v2828
  %v3085 = vsel %vm2573, %v2105, %v2829
  %v3086 = vsel %vm2574, %v2110, %v2830
  %v3087 = vsel %vm2575, %v2113, %v2831
  %v3088 = vsel %vm2576, %v2118, %v2832
  %v3089 = vsel %vm2577, %v2121, %v2833
  %v3090 = vsel %vm2578, %v2126, %v2834
  %v3091 = vsel %vm2579, %v2129, %v2835
  %v3092 = vsel %vm2580, %v2134, %v2836
  %v3093 = vsel %vm2581, %v2137, %v2837
  %v3094 = vsel %vm2582, %v2142, %v2838
  %v3095 = vsel %vm2583, %v2145, %v2839
  %v3096 = vsel %vm2584, %v2150, %v2840
  %v3097 = vsel %vm2585, %v2153, %v2841
  %v3098 = vsel %vm2586, %v2158, %v2842
  %v3099 = vsel %vm2587, %v2161, %v2843
  %v3100 = vsel %vm2588, %v2166, %v2844
  %v3101 = vsel %vm2589, %v2169, %v2845
  %v3102 = vsel %vm2590, %v2174, %v2846
  %v3103 = vsel %vm2591, %v2177, %v2847
  %v3104 = vsel %vm2592, %v2182, %v2848
  %v3105 = vsel %vm2593, %v2185, %v2849
  %v3106 = vsel %vm2594, %v2190, %v2850
  %v3107 = vsel %vm2595, %v2193, %v2851
  %v3108 = vsel %vm2596, %v2198, %v2852
  %v3109 = vsel %vm2597, %v2201, %v2853
  %v3110 = vsel %vm2598, %v2206, %v2854
  %v3111 = vsel %vm2599, %v2209, %v2855
  %v3112 = vsel %vm2600, %v2214, %v2856
  %v3113 = vsel %vm2601, %v2217, %v2857
  %v3114 = vsel %vm2602, %v2222, %v2858
  %v3115 = vsel %vm2603, %v2225, %v2859
  %v3116 = vsel %vm2604, %v2230, %v2860
  %v3117 = vsel %vm2605, %v2233, %v2861
  %v3118 = vsel %vm2606, %v2238, %v2862
  %v3119 = vsel %vm2607, %v2241, %v2863
  %v3120 = vsel %vm2608, %v2246, %v2864
  %v3121 = vsel %vm2609, %v2249, %v2865
  %v3122 = vsel %vm2610, %v2254, %v2866
  %v3123 = vsel %vm2611, %v2257, %v2867
  %v3124 = vsel %vm2612, %v2262, %v2868
  %v3125 = vsel %vm2613, %v2265, %v2869
  %v3126 = vsel %vm2614, %v2270, %v2870
  %v3127 = vsel %vm2615, %v2273, %v2871
  %v3128 = vsel %vm2616, %v2278, %v2872
  %v3129 = vsel %vm2617, %v2281, %v2873
  %v3130 = vsel %vm2618, %v2286, %v2874
  %v3131 = vsel %vm2619, %v2289, %v2875
  %v3132 = vsel %vm2620, %v2294, %v2876
  %v3133 = vsel %vm2621, %v2297, %v2877
  %v3134 = vsel %vm2622, %v2302, %v2878
  %v3135 = vsel %vm2623, %v2305, %v2879
  %v3136 = vsel %vm2624, %v2310, %v2880
  %v3137 = vsel %vm2625, %v2313, %v2881
  %v3138 = vsel %vm2626, %v2318, %v2882
  %v3139 = vsel %vm2627, %v2321, %v2883
  %v3140 = vsel %vm2628, %v2326, %v2884
  %v3141 = vsel %vm2629, %v2329, %v2885
  %v3142 = vsel %vm2630, %v2334, %v2886
  %v3143 = vsel %vm2631, %v2337, %v2887
  %v3144 = vsel %vm2632, %v2342, %v2888
  %v3145 = vsel %vm2633, %v2345, %v2889
  %v3146 = vsel %vm2634, %v2350, %v2890
  %v3147 = vsel %vm2635, %v2353, %v2891
  %v3148 = vsel %vm2636, %v2358, %v2892
  %v3149 = vsel %vm2637, %v2361, %v2893
  %v3150 = vsel %vm2638, %v2366, %v2894
  %v3151 = vsel %vm2639, %v2369, %v2895
  %v3152 = vsel %vm2640, %v2374, %v2896
  %v3153 = vsel %vm2641, %v2377, %v2897
  %v3154 = vsel %vm2642, %v2382, %v2898
  %v3155 = vsel %vm2643, %v2385, %v2899
  %3156 = vst [vmem:[%s4] sm:$0xff] %v2900
  %3157 = vst [vmem:[%s4 + $0x8] sm:$0xff] %v2901
  %3158 = vst [vmem:[%s4 + $0x10] sm:$0xff] %v2902
  %3159 = vst [vmem:[%s4 + $0x18] sm:$0xff] %v2903
  %3160 = vst [vmem:[%s4 + $0x20] sm:$0xff] %v2904
  %3161 = vst [vmem:[%s4 + $0x28] sm:$0xff] %v2905
  %3162 = vst [vmem:[%s4 + $0x30] sm:$0xff] %v2906
  %3163 = vst [vmem:[%s4 + $0x38] sm:$0xff] %v2907
  %3164 = vst [vmem:[%s4 + $0x40] sm:$0xff] %v2908
  %3165 = vst [vmem:[%s4 + $0x48] sm:$0xff] %v2909
  %3166 = vst [vmem:[%s4 + $0x50] sm:$0xff] %v2910
  %3167 = vst [vmem:[%s4 + $0x58] sm:$0xff] %v2911
  %3168 = vst [vmem:[%s4 + $0x60] sm:$0xff] %v2912
  %3169 = vst [vmem:[%s4 + $0x68] sm:$0xff] %v2913
  %3170 = vst [vmem:[%s4 + $0x70] sm:$0xff] %v2914
  %3171 = vst [vmem:[%s4 + $0x78] sm:$0xff] %v2915
  %3172 = vst [vmem:[%s4 + $0x80] sm:$0xff] %v2916
  %3173 = vst [vmem:[%s4 + $0x88] sm:$0xff] %v2917
  %3174 = vst [vmem:[%s4 + $0x90] sm:$0xff] %v2918
  %3175 = vst [vmem:[%s4 + $0x98] sm:$0xff] %v2919
  %3176 = vst [vmem:[%s4 + $0xa0] sm:$0xff] %v2920
  %3177 = vst [vmem:[%s4 + $0xa8] sm:$0xff] %v2921
  %3178 = vst [vmem:[%s4 + $0xb0] sm:$0xff] %v2922
  %3179 = vst [vmem:[%s4 + $0xb8] sm:$0xff] %v2923
  %3180 = vst [vmem:[%s4 + $0xc0] sm:$0xff] %v2924
  %3181 = vst [vmem:[%s4 + $0xc8] sm:$0xff] %v2925
  %3182 = vst [vmem:[%s4 + $0xd0] sm:$0xff] %v2926
  %3183 = vst [vmem:[%s4 + $0xd8] sm:$0xff] %v2927
  %3184 = vst [vmem:[%s4 + $0xe0] sm:$0xff] %v2928
  %3185 = vst [vmem:[%s4 + $0xe8] sm:$0xff] %v2929
  %3186 = vst [vmem:[%s4 + $0xf0] sm:$0xff] %v2930
  %3187 = vst [vmem:[%s4 + $0xf8] sm:$0xff] %v2931
  %3188 = vst [vmem:[%s4 + $0x100] sm:$0xff] %v2932
  %3189 = vst [vmem:[%s4 + $0x108] sm:$0xff] %v2933
  %3190 = vst [vmem:[%s4 + $0x110] sm:$0xff] %v2934
  %3191 = vst [vmem:[%s4 + $0x118] sm:$0xff] %v2935
  %3192 = vst [vmem:[%s4 + $0x120] sm:$0xff] %v2936
  %3193 = vst [vmem:[%s4 + $0x128] sm:$0xff] %v2937
  %3194 = vst [vmem:[%s4 + $0x130] sm:$0xff] %v2938
  %3195 = vst [vmem:[%s4 + $0x138] sm:$0xff] %v2939
  %3196 = vst [vmem:[%s4 + $0x140] sm:$0xff] %v2940
  %3197 = vst [vmem:[%s4 + $0x148] sm:$0xff] %v2941
  %3198 = vst [vmem:[%s4 + $0x150] sm:$0xff] %v2942
  %3199 = vst [vmem:[%s4 + $0x158] sm:$0xff] %v2943
  %3200 = vst [vmem:[%s4 + $0x160] sm:$0xff] %v2944
  %3201 = vst [vmem:[%s4 + $0x168] sm:$0xff] %v2945
  %3202 = vst [vmem:[%s4 + $0x170] sm:$0xff] %v2946
  %3203 = vst [vmem:[%s4 + $0x178] sm:$0xff] %v2947
  %3204 = vst [vmem:[%s4 + $0x180] sm:$0xff] %v2948
  %3205 = vst [vmem:[%s4 + $0x188] sm:$0xff] %v2949
  %3206 = vst [vmem:[%s4 + $0x190] sm:$0xff] %v2950
  %3207 = vst [vmem:[%s4 + $0x198] sm:$0xff] %v2951
  %3208 = vst [vmem:[%s4 + $0x1a0] sm:$0xff] %v2952
  %3209 = vst [vmem:[%s4 + $0x1a8] sm:$0xff] %v2953
  %3210 = vst [vmem:[%s4 + $0x1b0] sm:$0xff] %v2954
  %3211 = vst [vmem:[%s4 + $0x1b8] sm:$0xff] %v2955
  %3212 = vst [vmem:[%s4 + $0x1c0] sm:$0xff] %v2956
  %3213 = vst [vmem:[%s4 + $0x1c8] sm:$0xff] %v2957
  %3214 = vst [vmem:[%s4 + $0x1d0] sm:$0xff] %v2958
  %3215 = vst [vmem:[%s4 + $0x1d8] sm:$0xff] %v2959
  %3216 = vst [vmem:[%s4 + $0x1e0] sm:$0xff] %v2960
  %3217 = vst [vmem:[%s4 + $0x1e8] sm:$0xff] %v2961
  %3218 = vst [vmem:[%s4 + $0x1f0] sm:$0xff] %v2962
  %3219 = vst [vmem:[%s4 + $0x1f8] sm:$0xff] %v2963
  %3220 = vst [vmem:[%s4 + $0x200] sm:$0xff] %v2964
  %3221 = vst [vmem:[%s4 + $0x208] sm:$0xff] %v2965
  %3222 = vst [vmem:[%s4 + $0x210] sm:$0xff] %v2966
  %3223 = vst [vmem:[%s4 + $0x218] sm:$0xff] %v2967
  %3224 = vst [vmem:[%s4 + $0x220] sm:$0xff] %v2968
  %3225 = vst [vmem:[%s4 + $0x228] sm:$0xff] %v2969
  %3226 = vst [vmem:[%s4 + $0x230] sm:$0xff] %v2970
  %3227 = vst [vmem:[%s4 + $0x238] sm:$0xff] %v2971
  %3228 = vst [vmem:[%s4 + $0x240] sm:$0xff] %v2972
  %3229 = vst [vmem:[%s4 + $0x248] sm:$0xff] %v2973
  %3230 = vst [vmem:[%s4 + $0x250] sm:$0xff] %v2974
  %3231 = vst [vmem:[%s4 + $0x258] sm:$0xff] %v2975
  %3232 = vst [vmem:[%s4 + $0x260] sm:$0xff] %v2976
  %3233 = vst [vmem:[%s4 + $0x268] sm:$0xff] %v2977
  %3234 = vst [vmem:[%s4 + $0x270] sm:$0xff] %v2978
  %3235 = vst [vmem:[%s4 + $0x278] sm:$0xff] %v2979
  %3236 = vst [vmem:[%s4 + $0x280] sm:$0xff] %v2980
  %3237 = vst [vmem:[%s4 + $0x288] sm:$0xff] %v2981
  %3238 = vst [vmem:[%s4 + $0x290] sm:$0xff] %v2982
  %3239 = vst [vmem:[%s4 + $0x298] sm:$0xff] %v2983
  %3240 = vst [vmem:[%s4 + $0x2a0] sm:$0xff] %v2984
  %3241 = vst [vmem:[%s4 + $0x2a8] sm:$0xff] %v2985
  %3242 = vst [vmem:[%s4 + $0x2b0] sm:$0xff] %v2986
  %3243 = vst [vmem:[%s4 + $0x2b8] sm:$0xff] %v2987
  %3244 = vst [vmem:[%s4 + $0x2c0] sm:$0xff] %v2988
  %3245 = vst [vmem:[%s4 + $0x2c8] sm:$0xff] %v2989
  %3246 = vst [vmem:[%s4 + $0x2d0] sm:$0xff] %v2990
  %3247 = vst [vmem:[%s4 + $0x2d8] sm:$0xff] %v2991
  %3248 = vst [vmem:[%s4 + $0x2e0] sm:$0xff] %v2992
  %3249 = vst [vmem:[%s4 + $0x2e8] sm:$0xff] %v2993
  %3250 = vst [vmem:[%s4 + $0x2f0] sm:$0xff] %v2994
  %3251 = vst [vmem:[%s4 + $0x2f8] sm:$0xff] %v2995
  %3252 = vst [vmem:[%s4 + $0x300] sm:$0xff] %v2996
  %3253 = vst [vmem:[%s4 + $0x308] sm:$0xff] %v2997
  %3254 = vst [vmem:[%s4 + $0x310] sm:$0xff] %v2998
  %3255 = vst [vmem:[%s4 + $0x318] sm:$0xff] %v2999
  %3256 = vst [vmem:[%s4 + $0x320] sm:$0xff] %v3000
  %3257 = vst [vmem:[%s4 + $0x328] sm:$0xff] %v3001
  %3258 = vst [vmem:[%s4 + $0x330] sm:$0xff] %v3002
  %3259 = vst [vmem:[%s4 + $0x338] sm:$0xff] %v3003
  %3260 = vst [vmem:[%s4 + $0x340] sm:$0xff] %v3004
  %3261 = vst [vmem:[%s4 + $0x348] sm:$0xff] %v3005
  %3262 = vst [vmem:[%s4 + $0x350] sm:$0xff] %v3006
  %3263 = vst [vmem:[%s4 + $0x358] sm:$0xff] %v3007
  %3264 = vst [vmem:[%s4 + $0x360] sm:$0xff] %v3008
  %3265 = vst [vmem:[%s4 + $0x368] sm:$0xff] %v3009
  %3266 = vst [vmem:[%s4 + $0x370] sm:$0xff] %v3010
  %3267 = vst [vmem:[%s4 + $0x378] sm:$0xff] %v3011
  %3268 = vst [vmem:[%s4 + $0x380] sm:$0xff] %v3012
  %3269 = vst [vmem:[%s4 + $0x388] sm:$0xff] %v3013
  %3270 = vst [vmem:[%s4 + $0x390] sm:$0xff] %v3014
  %3271 = vst [vmem:[%s4 + $0x398] sm:$0xff] %v3015
  %3272 = vst [vmem:[%s4 + $0x3a0] sm:$0xff] %v3016
  %3273 = vst [vmem:[%s4 + $0x3a8] sm:$0xff] %v3017
  %3274 = vst [vmem:[%s4 + $0x3b0] sm:$0xff] %v3018
  %3275 = vst [vmem:[%s4 + $0x3b8] sm:$0xff] %v3019
  %3276 = vst [vmem:[%s4 + $0x3c0] sm:$0xff] %v3020
  %3277 = vst [vmem:[%s4 + $0x3c8] sm:$0xff] %v3021
  %3278 = vst [vmem:[%s4 + $0x3d0] sm:$0xff] %v3022
  %3279 = vst [vmem:[%s4 + $0x3d8] sm:$0xff] %v3023
  %3280 = vst [vmem:[%s4 + $0x3e0] sm:$0xff] %v3024
  %3281 = vst [vmem:[%s4 + $0x3e8] sm:$0xff] %v3025
  %3282 = vst [vmem:[%s4 + $0x3f0] sm:$0xff] %v3026
  %3283 = vst [vmem:[%s4 + $0x3f8] sm:$0xff] %v3027
  %3284 = vst [vmem:[%s4 + $0x400] sm:$0xff] %v3028
  %3285 = vst [vmem:[%s4 + $0x408] sm:$0xff] %v3029
  %3286 = vst [vmem:[%s4 + $0x410] sm:$0xff] %v3030
  %3287 = vst [vmem:[%s4 + $0x418] sm:$0xff] %v3031
  %3288 = vst [vmem:[%s4 + $0x420] sm:$0xff] %v3032
  %3289 = vst [vmem:[%s4 + $0x428] sm:$0xff] %v3033
  %3290 = vst [vmem:[%s4 + $0x430] sm:$0xff] %v3034
  %3291 = vst [vmem:[%s4 + $0x438] sm:$0xff] %v3035
  %3292 = vst [vmem:[%s4 + $0x440] sm:$0xff] %v3036
  %3293 = vst [vmem:[%s4 + $0x448] sm:$0xff] %v3037
  %3294 = vst [vmem:[%s4 + $0x450] sm:$0xff] %v3038
  %3295 = vst [vmem:[%s4 + $0x458] sm:$0xff] %v3039
  %3296 = vst [vmem:[%s4 + $0x460] sm:$0xff] %v3040
  %3297 = vst [vmem:[%s4 + $0x468] sm:$0xff] %v3041
  %3298 = vst [vmem:[%s4 + $0x470] sm:$0xff] %v3042
  %3299 = vst [vmem:[%s4 + $0x478] sm:$0xff] %v3043
  %3300 = vst [vmem:[%s4 + $0x480] sm:$0xff] %v3044
  %3301 = vst [vmem:[%s4 + $0x488] sm:$0xff] %v3045
  %3302 = vst [vmem:[%s4 + $0x490] sm:$0xff] %v3046
  %3303 = vst [vmem:[%s4 + $0x498] sm:$0xff] %v3047
  %3304 = vst [vmem:[%s4 + $0x4a0] sm:$0xff] %v3048
  %3305 = vst [vmem:[%s4 + $0x4a8] sm:$0xff] %v3049
  %3306 = vst [vmem:[%s4 + $0x4b0] sm:$0xff] %v3050
  %3307 = vst [vmem:[%s4 + $0x4b8] sm:$0xff] %v3051
  %3308 = vst [vmem:[%s4 + $0x4c0] sm:$0xff] %v3052
  %3309 = vst [vmem:[%s4 + $0x4c8] sm:$0xff] %v3053
  %3310 = vst [vmem:[%s4 + $0x4d0] sm:$0xff] %v3054
  %3311 = vst [vmem:[%s4 + $0x4d8] sm:$0xff] %v3055
  %3312 = vst [vmem:[%s4 + $0x4e0] sm:$0xff] %v3056
  %3313 = vst [vmem:[%s4 + $0x4e8] sm:$0xff] %v3057
  %3314 = vst [vmem:[%s4 + $0x4f0] sm:$0xff] %v3058
  %3315 = vst [vmem:[%s4 + $0x4f8] sm:$0xff] %v3059
  %3316 = vst [vmem:[%s4 + $0x500] sm:$0xff] %v3060
  %3317 = vst [vmem:[%s4 + $0x508] sm:$0xff] %v3061
  %3318 = vst [vmem:[%s4 + $0x510] sm:$0xff] %v3062
  %3319 = vst [vmem:[%s4 + $0x518] sm:$0xff] %v3063
  %3320 = vst [vmem:[%s4 + $0x520] sm:$0xff] %v3064
  %3321 = vst [vmem:[%s4 + $0x528] sm:$0xff] %v3065
  %3322 = vst [vmem:[%s4 + $0x530] sm:$0xff] %v3066
  %3323 = vst [vmem:[%s4 + $0x538] sm:$0xff] %v3067
  %3324 = vst [vmem:[%s4 + $0x540] sm:$0xff] %v3068
  %3325 = vst [vmem:[%s4 + $0x548] sm:$0xff] %v3069
  %3326 = vst [vmem:[%s4 + $0x550] sm:$0xff] %v3070
  %3327 = vst [vmem:[%s4 + $0x558] sm:$0xff] %v3071
  %3328 = vst [vmem:[%s4 + $0x560] sm:$0xff] %v3072
  %3329 = vst [vmem:[%s4 + $0x568] sm:$0xff] %v3073
  %3330 = vst [vmem:[%s4 + $0x570] sm:$0xff] %v3074
  %3331 = vst [vmem:[%s4 + $0x578] sm:$0xff] %v3075
  %3332 = vst [vmem:[%s4 + $0x580] sm:$0xff] %v3076
  %3333 = vst [vmem:[%s4 + $0x588] sm:$0xff] %v3077
  %3334 = vst [vmem:[%s4 + $0x590] sm:$0xff] %v3078
  %3335 = vst [vmem:[%s4 + $0x598] sm:$0xff] %v3079
  %3336 = vst [vmem:[%s4 + $0x5a0] sm:$0xff] %v3080
  %3337 = vst [vmem:[%s4 + $0x5a8] sm:$0xff] %v3081
  %3338 = vst [vmem:[%s4 + $0x5b0] sm:$0xff] %v3082
  %3339 = vst [vmem:[%s4 + $0x5b8] sm:$0xff] %v3083
  %3340 = vst [vmem:[%s4 + $0x5c0] sm:$0xff] %v3084
  %3341 = vst [vmem:[%s4 + $0x5c8] sm:$0xff] %v3085
  %3342 = vst [vmem:[%s4 + $0x5d0] sm:$0xff] %v3086
  %3343 = vst [vmem:[%s4 + $0x5d8] sm:$0xff] %v3087
  %3344 = vst [vmem:[%s4 + $0x5e0] sm:$0xff] %v3088
  %3345 = vst [vmem:[%s4 + $0x5e8] sm:$0xff] %v3089
  %3346 = vst [vmem:[%s4 + $0x5f0] sm:$0xff] %v3090
  %3347 = vst [vmem:[%s4 + $0x5f8] sm:$0xff] %v3091
  %3348 = vst [vmem:[%s4 + $0x600] sm:$0xff] %v3092
  %3349 = vst [vmem:[%s4 + $0x608] sm:$0xff] %v3093
  %3350 = vst [vmem:[%s4 + $0x610] sm:$0xff] %v3094
  %3351 = vst [vmem:[%s4 + $0x618] sm:$0xff] %v3095
  %3352 = vst [vmem:[%s4 + $0x620] sm:$0xff] %v3096
  %3353 = vst [vmem:[%s4 + $0x628] sm:$0xff] %v3097
  %3354 = vst [vmem:[%s4 + $0x630] sm:$0xff] %v3098
  %3355 = vst [vmem:[%s4 + $0x638] sm:$0xff] %v3099
  %3356 = vst [vmem:[%s4 + $0x640] sm:$0xff] %v3100
  %3357 = vst [vmem:[%s4 + $0x648] sm:$0xff] %v3101
  %3358 = vst [vmem:[%s4 + $0x650] sm:$0xff] %v3102
  %3359 = vst [vmem:[%s4 + $0x658] sm:$0xff] %v3103
  %3360 = vst [vmem:[%s4 + $0x660] sm:$0xff] %v3104
  %3361 = vst [vmem:[%s4 + $0x668] sm:$0xff] %v3105
  %3362 = vst [vmem:[%s4 + $0x670] sm:$0xff] %v3106
  %3363 = vst [vmem:[%s4 + $0x678] sm:$0xff] %v3107
  %3364 = vst [vmem:[%s4 + $0x680] sm:$0xff] %v3108
  %3365 = vst [vmem:[%s4 + $0x688] sm:$0xff] %v3109
  %3366 = vst [vmem:[%s4 + $0x690] sm:$0xff] %v3110
  %3367 = vst [vmem:[%s4 + $0x698] sm:$0xff] %v3111
  %3368 = vst [vmem:[%s4 + $0x6a0] sm:$0xff] %v3112
  %3369 = vst [vmem:[%s4 + $0x6a8] sm:$0xff] %v3113
  %3370 = vst [vmem:[%s4 + $0x6b0] sm:$0xff] %v3114
  %3371 = vst [vmem:[%s4 + $0x6b8] sm:$0xff] %v3115
  %3372 = vst [vmem:[%s4 + $0x6c0] sm:$0xff] %v3116
  %3373 = vst [vmem:[%s4 + $0x6c8] sm:$0xff] %v3117
  %3374 = vst [vmem:[%s4 + $0x6d0] sm:$0xff] %v3118
  %3375 = vst [vmem:[%s4 + $0x6d8] sm:$0xff] %v3119
  %3376 = vst [vmem:[%s4 + $0x6e0] sm:$0xff] %v3120
  %3377 = vst [vmem:[%s4 + $0x6e8] sm:$0xff] %v3121
  %3378 = vst [vmem:[%s4 + $0x6f0] sm:$0xff] %v3122
  %3379 = vst [vmem:[%s4 + $0x6f8] sm:$0xff] %v3123
  %3380 = vst [vmem:[%s4 + $0x700] sm:$0xff] %v3124
  %3381 = vst [vmem:[%s4 + $0x708] sm:$0xff] %v3125
  %3382 = vst [vmem:[%s4 + $0x710] sm:$0xff] %v3126
  %3383 = vst [vmem:[%s4 + $0x718] sm:$0xff] %v3127
  %3384 = vst [vmem:[%s4 + $0x720] sm:$0xff] %v3128
  %3385 = vst [vmem:[%s4 + $0x728] sm:$0xff] %v3129
  %3386 = vst [vmem:[%s4 + $0x730] sm:$0xff] %v3130
  %3387 = vst [vmem:[%s4 + $0x738] sm:$0xff] %v3131
  %3388 = vst [vmem:[%s4 + $0x740] sm:$0xff] %v3132
  %3389 = vst [vmem:[%s4 + $0x748] sm:$0xff] %v3133
  %3390 = vst [vmem:[%s4 + $0x750] sm:$0xff] %v3134
  %3391 = vst [vmem:[%s4 + $0x758] sm:$0xff] %v3135
  %3392 = vst [vmem:[%s4 + $0x760] sm:$0xff] %v3136
  %3393 = vst [vmem:[%s4 + $0x768] sm:$0xff] %v3137
  %3394 = vst [vmem:[%s4 + $0x770] sm:$0xff] %v3138
  %3395 = vst [vmem:[%s4 + $0x778] sm:$0xff] %v3139
  %3396 = vst [vmem:[%s4 + $0x780] sm:$0xff] %v3140
  %3397 = vst [vmem:[%s4 + $0x788] sm:$0xff] %v3141
  %3398 = vst [vmem:[%s4 + $0x790] sm:$0xff] %v3142
  %3399 = vst [vmem:[%s4 + $0x798] sm:$0xff] %v3143
  %3400 = vst [vmem:[%s4 + $0x7a0] sm:$0xff] %v3144
  %3401 = vst [vmem:[%s4 + $0x7a8] sm:$0xff] %v3145
  %3402 = vst [vmem:[%s4 + $0x7b0] sm:$0xff] %v3146
  %3403 = vst [vmem:[%s4 + $0x7b8] sm:$0xff] %v3147
  %3404 = vst [vmem:[%s4 + $0x7c0] sm:$0xff] %v3148
  %3405 = vst [vmem:[%s4 + $0x7c8] sm:$0xff] %v3149
  %3406 = vst [vmem:[%s4 + $0x7d0] sm:$0xff] %v3150
  %3407 = vst [vmem:[%s4 + $0x7d8] sm:$0xff] %v3151
  %3408 = vst [vmem:[%s4 + $0x7e0] sm:$0xff] %v3152
  %3409 = vst [vmem:[%s4 + $0x7e8] sm:$0xff] %v3153
  %3410 = vst [vmem:[%s4 + $0x7f0] sm:$0xff] %v3154
  %3411 = vst [vmem:[%s4 + $0x7f8] sm:$0xff] %v3155
  // Predicated region
  $region18: #{critic_forward.5} parent=0 // pred_check
    _
  $region19: #{critic_forward.5} parent=0 // pred_check_branch
    %3413 = sbr.rel (0) target = $region21
  $region20: #{critic_forward.5} parent=0 // pred_region
    _
  $region21: #{critic_forward.5} parent=0 // pred_fallthru
    _
  // Predicated region
  $region22: #{critic_forward.5} parent=0 // pred_check
    _
  $region23: #{critic_forward.5} parent=0 // pred_check_branch
    %3415 = sbr.rel (0) target = $region25
  $region24: #{critic_forward.5} parent=0 // pred_region
    _
  $region25: #{critic_forward.5} parent=0 // pred_fallthru
    _

// kernel: critic_forward.6
$region0: #{critic_forward.6}
  #allocation0 [shape = 'u32[]', space=smem, size = 0x4, offset = 0x4, fixed_abs, tag = 'smem constant byte address 0x4 - core index']
  #allocation1 [shape = 'u32[144,128]{1,0:T(1,128)}', space=vmem, size = 0x12000, scoped, tag = 'internal scratch']
  %s0 = inlined_call_operand.vmem [shape: bf16[512,128], index: 0, kind: input, shape index: {}]
  %s1 = inlined_call_operand.vmem [shape: bf16[128,128], index: 1, kind: input, shape index: {}]
  %s2 = inlined_call_operand.vmem [shape: f32[1,128], index: 2, kind: input, shape index: {}]
  %s3 = inlined_call_operand.vmem [shape: f32[1,128], index: 3, kind: input, shape index: {}]
  %s4 = inlined_call_operand.vmem [shape: f32[512,128], index: 4, kind: output, shape index: {}]
  %s5 = sld [smem:[#allocation0]]
  $region26: #{critic_forward.6} parent=0
    _
  %s7 = ssub.s32 1, %s5
  %s8 = scalar_select 0, %s7, %s5
  // Predicated region
  $region2: #{critic_forward.6} parent=0 // pred_check
    _
  $region3: #{critic_forward.6} parent=0 // pred_check_branch
    %10 = sbr.rel (0) target = $region5
  $region4: #{critic_forward.6} parent=0 // pred_region
    _
  $region5: #{critic_forward.6} parent=0 // pred_fallthru
    _
  // Predicated region
  $region6: #{critic_forward.6} parent=0 // pred_check
    _
  $region7: #{critic_forward.6} parent=0 // pred_check_branch
    %12 = sbr.rel (0) target = $region9
  $region8: #{critic_forward.6} parent=0 // pred_region
    _
  $region9: #{critic_forward.6} parent=0 // pred_fallthru
    _
  // Predicated region
  $region10: #{critic_forward.6} parent=0 // pred_check
    _
  $region11: #{critic_forward.6} parent=0 // pred_check_branch
    %14 = sbr.rel (0) target = $region13
  $region12: #{critic_forward.6} parent=0 // pred_region
    _
  $region13: #{critic_forward.6} parent=0 // pred_fallthru
    _
  // Predicated region
  $region14: #{critic_forward.6} parent=0 // pred_check
    _
  $region15: #{critic_forward.6} parent=0 // pred_check_branch
    %16 = sbr.rel (0) target = $region17
  $region16: #{critic_forward.6} parent=0 // pred_region
    _
  $region17: #{critic_forward.6} parent=0 // pred_fallthru
    _
  %v18 = vld [vmem:[%s0] sm:$0xf]
  %v19 = vld [vmem:[%s0 + $0x4] sm:$0xf]
  %v20 = vld [vmem:[%s0 + $0x8] sm:$0xf]
  %v21 = vld [vmem:[%s0 + $0xc] sm:$0xf]
  %v22 = vld [vmem:[%s0 + $0x10] sm:$0xf]
  %v23 = vld [vmem:[%s0 + $0x14] sm:$0xf]
  %v24 = vld [vmem:[%s0 + $0x18] sm:$0xf]
  %v25 = vld [vmem:[%s0 + $0x1c] sm:$0xf]
  %v26 = vld [vmem:[%s0 + $0x20] sm:$0xf]
  %v27 = vld [vmem:[%s0 + $0x24] sm:$0xf]
  %v28 = vld [vmem:[%s0 + $0x28] sm:$0xf]
  %v29 = vld [vmem:[%s0 + $0x2c] sm:$0xf]
  %v30 = vld [vmem:[%s0 + $0x30] sm:$0xf]
  %v31 = vld [vmem:[%s0 + $0x34] sm:$0xf]
  %v32 = vld [vmem:[%s0 + $0x38] sm:$0xf]
  %v33 = vld [vmem:[%s0 + $0x3c] sm:$0xf]
  %v34 = vld [vmem:[%s0 + $0x40] sm:$0xf]
  %v35 = vld [vmem:[%s0 + $0x44] sm:$0xf]
  %v36 = vld [vmem:[%s0 + $0x48] sm:$0xf]
  %v37 = vld [vmem:[%s0 + $0x4c] sm:$0xf]
  %v38 = vld [vmem:[%s0 + $0x50] sm:$0xf]
  %v39 = vld [vmem:[%s0 + $0x54] sm:$0xf]
  %v40 = vld [vmem:[%s0 + $0x58] sm:$0xf]
  %v41 = vld [vmem:[%s0 + $0x5c] sm:$0xf]
  %v42 = vld [vmem:[%s0 + $0x60] sm:$0xf]
  %v43 = vld [vmem:[%s0 + $0x64] sm:$0xf]
  %v44 = vld [vmem:[%s0 + $0x68] sm:$0xf]
  %v45 = vld [vmem:[%s0 + $0x6c] sm:$0xf]
  %v46 = vld [vmem:[%s0 + $0x70] sm:$0xf]
  %v47 = vld [vmem:[%s0 + $0x74] sm:$0xf]
  %v48 = vld [vmem:[%s0 + $0x78] sm:$0xf]
  %v49 = vld [vmem:[%s0 + $0x7c] sm:$0xf]
  %v50 = vld [vmem:[%s0 + $0x80] sm:$0xf]
  %v51 = vld [vmem:[%s0 + $0x84] sm:$0xf]
  %v52 = vld [vmem:[%s0 + $0x88] sm:$0xf]
  %v53 = vld [vmem:[%s0 + $0x8c] sm:$0xf]
  %v54 = vld [vmem:[%s0 + $0x90] sm:$0xf]
  %v55 = vld [vmem:[%s0 + $0x94] sm:$0xf]
  %v56 = vld [vmem:[%s0 + $0x98] sm:$0xf]
  %v57 = vld [vmem:[%s0 + $0x9c] sm:$0xf]
  %v58 = vld [vmem:[%s0 + $0xa0] sm:$0xf]
  %v59 = vld [vmem:[%s0 + $0xa4] sm:$0xf]
  %v60 = vld [vmem:[%s0 + $0xa8] sm:$0xf]
  %v61 = vld [vmem:[%s0 + $0xac] sm:$0xf]
  %v62 = vld [vmem:[%s0 + $0xb0] sm:$0xf]
  %v63 = vld [vmem:[%s0 + $0xb4] sm:$0xf]
  %v64 = vld [vmem:[%s0 + $0xb8] sm:$0xf]
  %v65 = vld [vmem:[%s0 + $0xbc] sm:$0xf]
  %v66 = vld [vmem:[%s0 + $0xc0] sm:$0xf]
  %v67 = vld [vmem:[%s0 + $0xc4] sm:$0xf]
  %v68 = vld [vmem:[%s0 + $0xc8] sm:$0xf]
  %v69 = vld [vmem:[%s0 + $0xcc] sm:$0xf]
  %v70 = vld [vmem:[%s0 + $0xd0] sm:$0xf]
  %v71 = vld [vmem:[%s0 + $0xd4] sm:$0xf]
  %v72 = vld [vmem:[%s0 + $0xd8] sm:$0xf]
  %v73 = vld [vmem:[%s0 + $0xdc] sm:$0xf]
  %v74 = vld [vmem:[%s0 + $0xe0] sm:$0xf]
  %v75 = vld [vmem:[%s0 + $0xe4] sm:$0xf]
  %v76 = vld [vmem:[%s0 + $0xe8] sm:$0xf]
  %v77 = vld [vmem:[%s0 + $0xec] sm:$0xf]
  %v78 = vld [vmem:[%s0 + $0xf0] sm:$0xf]
  %v79 = vld [vmem:[%s0 + $0xf4] sm:$0xf]
  %v80 = vld [vmem:[%s0 + $0xf8] sm:$0xf]
  %v81 = vld [vmem:[%s0 + $0xfc] sm:$0xf]
  %v82 = vld [vmem:[%s1] sm:$0xf]
  %v83 = vld [vmem:[%s1 + $0x4] sm:$0xf]
  %v84 = vld [vmem:[%s1 + $0x8] sm:$0xf]
  %v85 = vld [vmem:[%s1 + $0xc] sm:$0xf]
  %v86 = vld [vmem:[%s1 + $0x10] sm:$0xf]
  %v87 = vld [vmem:[%s1 + $0x14] sm:$0xf]
  %v88 = vld [vmem:[%s1 + $0x18] sm:$0xf]
  %v89 = vld [vmem:[%s1 + $0x1c] sm:$0xf]
  %v90 = vld [vmem:[%s1 + $0x20] sm:$0xf]
  %v91 = vld [vmem:[%s1 + $0x24] sm:$0xf]
  %v92 = vld [vmem:[%s1 + $0x28] sm:$0xf]
  %v93 = vld [vmem:[%s1 + $0x2c] sm:$0xf]
  %v94 = vld [vmem:[%s1 + $0x30] sm:$0xf]
  %v95 = vld [vmem:[%s1 + $0x34] sm:$0xf]
  %v96 = vld [vmem:[%s1 + $0x38] sm:$0xf]
  %v97 = vld [vmem:[%s1 + $0x3c] sm:$0xf]
  %v162 = vunpack.c.l.b16 %v18
  %v163 = vunpack.c.l.b16 %v19
  %v164 = vunpack.c.l.b16 %v20
  %v165 = vunpack.c.l.b16 %v21
  %v166 = vunpack.c.l.b16 %v22
  %v167 = vunpack.c.l.b16 %v23
  %v168 = vunpack.c.l.b16 %v24
  %v169 = vunpack.c.l.b16 %v25
  %v170 = vunpack.c.l.b16 %v26
  %v171 = vunpack.c.l.b16 %v27
  %v172 = vunpack.c.l.b16 %v28
  %v173 = vunpack.c.l.b16 %v29
  %v174 = vunpack.c.l.b16 %v30
  %v175 = vunpack.c.l.b16 %v31
  %v176 = vunpack.c.l.b16 %v32
  %v177 = vunpack.c.l.b16 %v33
  %v178 = vunpack.c.l.b16 %v34
  %v179 = vunpack.c.l.b16 %v35
  %v180 = vunpack.c.l.b16 %v36
  %v181 = vunpack.c.l.b16 %v37
  %v182 = vunpack.c.l.b16 %v38
  %v183 = vunpack.c.l.b16 %v39
  %v184 = vunpack.c.l.b16 %v40
  %v185 = vunpack.c.l.b16 %v41
  %v186 = vunpack.c.l.b16 %v42
  %v187 = vunpack.c.l.b16 %v43
  %v188 = vunpack.c.l.b16 %v44
  %v189 = vunpack.c.l.b16 %v45
  %v190 = vunpack.c.l.b16 %v46
  %v191 = vunpack.c.l.b16 %v47
  %v192 = vunpack.c.l.b16 %v48
  %v193 = vunpack.c.l.b16 %v49
  %v194 = vunpack.c.l.b16 %v50
  %v195 = vunpack.c.l.b16 %v51
  %v196 = vunpack.c.l.b16 %v52
  %v197 = vunpack.c.l.b16 %v53
  %v198 = vunpack.c.l.b16 %v54
  %v199 = vunpack.c.l.b16 %v55
  %v200 = vunpack.c.l.b16 %v56
  %v201 = vunpack.c.l.b16 %v57
  %v202 = vunpack.c.l.b16 %v58
  %v203 = vunpack.c.l.b16 %v59
  %v204 = vunpack.c.l.b16 %v60
  %v205 = vunpack.c.l.b16 %v61
  %v206 = vunpack.c.l.b16 %v62
  %v207 = vunpack.c.l.b16 %v63
  %v208 = vunpack.c.l.b16 %v64
  %v209 = vunpack.c.l.b16 %v65
  %v210 = vunpack.c.l.b16 %v66
  %v211 = vunpack.c.l.b16 %v67
  %v212 = vunpack.c.l.b16 %v68
  %v213 = vunpack.c.l.b16 %v69
  %v214 = vunpack.c.l.b16 %v70
  %v215 = vunpack.c.l.b16 %v71
  %v216 = vunpack.c.l.b16 %v72
  %v217 = vunpack.c.l.b16 %v73
  %v218 = vunpack.c.l.b16 %v74
  %v219 = vunpack.c.l.b16 %v75
  %v220 = vunpack.c.l.b16 %v76
  %v221 = vunpack.c.l.b16 %v77
  %v222 = vunpack.c.l.b16 %v78
  %v223 = vunpack.c.l.b16 %v79
  %v224 = vunpack.c.l.b16 %v80
  %v225 = vunpack.c.l.b16 %v81
  %v226 = vpack.c.b16 %v163, %v162
  %v227 = vpack.c.b16 %v165, %v164
  %v228 = vpack.c.b16 %v167, %v166
  %v229 = vpack.c.b16 %v169, %v168
  %v230 = vpack.c.b16 %v171, %v170
  %v231 = vpack.c.b16 %v173, %v172
  %v232 = vpack.c.b16 %v175, %v174
  %v233 = vpack.c.b16 %v177, %v176
  %v234 = vpack.c.b16 %v179, %v178
  %v235 = vpack.c.b16 %v181, %v180
  %v236 = vpack.c.b16 %v183, %v182
  %v237 = vpack.c.b16 %v185, %v184
  %v238 = vpack.c.b16 %v187, %v186
  %v239 = vpack.c.b16 %v189, %v188
  %v240 = vpack.c.b16 %v191, %v190
  %v241 = vpack.c.b16 %v193, %v192
  %v242 = vpack.c.b16 %v195, %v194
  %v243 = vpack.c.b16 %v197, %v196
  %v244 = vpack.c.b16 %v199, %v198
  %v245 = vpack.c.b16 %v201, %v200
  %v246 = vpack.c.b16 %v203, %v202
  %v247 = vpack.c.b16 %v205, %v204
  %v248 = vpack.c.b16 %v207, %v206
  %v249 = vpack.c.b16 %v209, %v208
  %v250 = vpack.c.b16 %v211, %v210
  %v251 = vpack.c.b16 %v213, %v212
  %v252 = vpack.c.b16 %v215, %v214
  %v253 = vpack.c.b16 %v217, %v216
  %v254 = vpack.c.b16 %v219, %v218
  %v255 = vpack.c.b16 %v221, %v220
  %v256 = vpack.c.b16 %v223, %v222
  %v257 = vpack.c.b16 %v225, %v224
  %v306 = vunpack.c.l.b16 %v82
  %v307 = vunpack.c.l.b16 %v83
  %v308 = vunpack.c.l.b16 %v84
  %v309 = vunpack.c.l.b16 %v85
  %v310 = vunpack.c.l.b16 %v86
  %v311 = vunpack.c.l.b16 %v87
  %v312 = vunpack.c.l.b16 %v88
  %v313 = vunpack.c.l.b16 %v89
  %v314 = vunpack.c.l.b16 %v90
  %v315 = vunpack.c.l.b16 %v91
  %v316 = vunpack.c.l.b16 %v92
  %v317 = vunpack.c.l.b16 %v93
  %v318 = vunpack.c.l.b16 %v94
  %v319 = vunpack.c.l.b16 %v95
  %v320 = vunpack.c.l.b16 %v96
  %v321 = vunpack.c.l.b16 %v97
  %v322 = vpack.c.b16 %v307, %v306
  %v323 = vpack.c.b16 %v309, %v308
  %v324 = vpack.c.b16 %v311, %v310
  %v325 = vpack.c.b16 %v313, %v312
  %v326 = vpack.c.b16 %v315, %v314
  %v327 = vpack.c.b16 %v317, %v316
  %v328 = vpack.c.b16 %v319, %v318
  %v329 = vpack.c.b16 %v321, %v320
  %338 = vmatprep.subr.bf16.mxu0 0
  %339 = vmatpush1.bf16.msra.mxu0 %v322
  %340 = vmatprep.subr.bf16.mxu0 0
  %341 = vmatpush1.bf16.msra.mxu0 %v323
  %342 = vmatprep.subr.bf16.mxu0 0
  %343 = vmatpush1.bf16.msra.mxu0 %v324
  %344 = vmatprep.subr.bf16.mxu0 0
  %345 = vmatpush1.bf16.msra.mxu0 %v325
  %346 = vmatprep.subr.bf16.mxu0 0
  %347 = vmatpush1.bf16.msra.mxu0 %v326
  %348 = vmatprep.subr.bf16.mxu0 0
  %349 = vmatpush1.bf16.msra.mxu0 %v327
  %350 = vmatprep.subr.bf16.mxu0 0
  %351 = vmatpush1.bf16.msra.mxu0 %v328
  %352 = vmatprep.subr.bf16.mxu0 0
  %353 = vmatpush1.bf16.msra.mxu0 %v329
  %354 = vmatprep.subr.bf16.mxu0 0
  %355 = vmatpush1.bf16.msra.mxu0 0
  %356 = vmatprep.subr.bf16.mxu0 0
  %357 = vmatpush1.bf16.msra.mxu0 0
  %358 = vmatprep.subr.bf16.mxu0 0
  %359 = vmatpush1.bf16.msra.mxu0 0
  %360 = vmatprep.subr.bf16.mxu0 0
  %361 = vmatpush1.bf16.msra.mxu0 0
  %362 = vmatprep.subr.bf16.mxu0 0
  %363 = vmatpush1.bf16.msra.mxu0 0
  %364 = vmatprep.subr.bf16.mxu0 0
  %365 = vmatpush1.bf16.msra.mxu0 0
  %366 = vmatprep.subr.bf16.mxu0 0
  %367 = vmatpush1.bf16.msra.mxu0 0
  %368 = vmatprep.subr.bf16.mxu0 0
  %369 = vmatpush1.bf16.msra.mxu0 0
  %370 = vmatprep.mubr.bf16.mxu0 0
  %371 = vmatmul.mubr.bf16.gmra.mrb[0].mxu0 %v226
  %v372 = vpop.f32.mrb[0].mxu0
  %v373 = vadd.f32 0.0, %v372
  %v374 = vpop.f32.mrb[0].mxu0
  %v375 = vpop.f32.mrb[0].mxu0
  %v376 = vadd.f32 0.0, %v375
  %v377 = vpop.f32.mrb[0].mxu0
  %378 = vmatprep.mubr.bf16.mxu0 0
  %379 = vmatmul.mubr.bf16.gmra.mrb[0].mxu0 %v227
  %v380 = vpop.f32.mrb[0].mxu0
  %v381 = vadd.f32 0.0, %v380
  %v382 = vpop.f32.mrb[0].mxu0
  %v383 = vpop.f32.mrb[0].mxu0
  %v384 = vadd.f32 0.0, %v383
  %v385 = vpop.f32.mrb[0].mxu0
  %386 = vmatprep.mubr.bf16.mxu0 0
  %387 = vmatmul.mubr.bf16.gmra.mrb[0].mxu0 %v228
  %v388 = vpop.f32.mrb[0].mxu0
  %v389 = vadd.f32 0.0, %v388
  %v390 = vpop.f32.mrb[0].mxu0
  %v391 = vpop.f32.mrb[0].mxu0
  %v392 = vadd.f32 0.0, %v391
  %v393 = vpop.f32.mrb[0].mxu0
  %394 = vmatprep.mubr.bf16.mxu0 0
  %395 = vmatmul.mubr.bf16.gmra.mrb[0].mxu0 %v229
  %v396 = vpop.f32.mrb[0].mxu0
  %v397 = vadd.f32 0.0, %v396
  %v398 = vpop.f32.mrb[0].mxu0
  %v399 = vpop.f32.mrb[0].mxu0
  %v400 = vadd.f32 0.0, %v399
  %v401 = vpop.f32.mrb[0].mxu0
  %402 = vmatprep.mubr.bf16.mxu0 0
  %403 = vmatmul.mubr.bf16.gmra.mrb[0].mxu0 %v230
  %v404 = vpop.f32.mrb[0].mxu0
  %v405 = vadd.f32 0.0, %v404
  %v406 = vpop.f32.mrb[0].mxu0
  %v407 = vpop.f32.mrb[0].mxu0
  %v408 = vadd.f32 0.0, %v407
  %v409 = vpop.f32.mrb[0].mxu0
  %410 = vmatprep.mubr.bf16.mxu0 0
  %411 = vmatmul.mubr.bf16.gmra.mrb[0].mxu0 %v231
  %v412 = vpop.f32.mrb[0].mxu0
  %v413 = vadd.f32 0.0, %v412
  %v414 = vpop.f32.mrb[0].mxu0
  %v415 = vpop.f32.mrb[0].mxu0
  %v416 = vadd.f32 0.0, %v415
  %v417 = vpop.f32.mrb[0].mxu0
  %418 = vmatprep.mubr.bf16.mxu0 0
  %419 = vmatmul.mubr.bf16.gmra.mrb[0].mxu0 %v232
  %v420 = vpop.f32.mrb[0].mxu0
  %v421 = vadd.f32 0.0, %v420
  %v422 = vpop.f32.mrb[0].mxu0
  %v423 = vpop.f32.mrb[0].mxu0
  %v424 = vadd.f32 0.0, %v423
  %v425 = vpop.f32.mrb[0].mxu0
  %426 = vmatprep.mubr.bf16.mxu0 0
  %427 = vmatmul.mubr.bf16.gmra.mrb[0].mxu0 %v233
  %v428 = vpop.f32.mrb[0].mxu0
  %v429 = vadd.f32 0.0, %v428
  %v430 = vpop.f32.mrb[0].mxu0
  %v431 = vpop.f32.mrb[0].mxu0
  %v432 = vadd.f32 0.0, %v431
  %v433 = vpop.f32.mrb[0].mxu0
  %434 = vmatprep.mubr.bf16.mxu0 0
  %435 = vmatmul.mubr.bf16.gmra.mrb[0].mxu0 %v234
  %v436 = vpop.f32.mrb[0].mxu0
  %v437 = vadd.f32 0.0, %v436
  %v438 = vpop.f32.mrb[0].mxu0
  %v439 = vpop.f32.mrb[0].mxu0
  %v440 = vadd.f32 0.0, %v439
  %v441 = vpop.f32.mrb[0].mxu0
  %442 = vmatprep.mubr.bf16.mxu0 0
  %443 = vmatmul.mubr.bf16.gmra.mrb[0].mxu0 %v235
  %v444 = vpop.f32.mrb[0].mxu0
  %v445 = vadd.f32 0.0, %v444
  %v446 = vpop.f32.mrb[0].mxu0
  %v447 = vpop.f32.mrb[0].mxu0
  %v448 = vadd.f32 0.0, %v447
  %v449 = vpop.f32.mrb[0].mxu0
  %450 = vmatprep.mubr.bf16.mxu0 0
  %451 = vmatmul.mubr.bf16.gmra.mrb[0].mxu0 %v236
  %v452 = vpop.f32.mrb[0].mxu0
  %v453 = vadd.f32 0.0, %v452
  %v454 = vpop.f32.mrb[0].mxu0
  %v455 = vpop.f32.mrb[0].mxu0
  %v456 = vadd.f32 0.0, %v455
  %v457 = vpop.f32.mrb[0].mxu0
  %458 = vmatprep.mubr.bf16.mxu0 0
  %459 = vmatmul.mubr.bf16.gmra.mrb[0].mxu0 %v237
  %v460 = vpop.f32.mrb[0].mxu0
  %v461 = vadd.f32 0.0, %v460
  %v462 = vpop.f32.mrb[0].mxu0
  %v463 = vpop.f32.mrb[0].mxu0
  %v464 = vadd.f32 0.0, %v463
  %v465 = vpop.f32.mrb[0].mxu0
  %466 = vmatprep.mubr.bf16.mxu0 0
  %467 = vmatmul.mubr.bf16.gmra.mrb[0].mxu0 %v238
  %v468 = vpop.f32.mrb[0].mxu0
  %v469 = vadd.f32 0.0, %v468
  %v470 = vpop.f32.mrb[0].mxu0
  %v471 = vpop.f32.mrb[0].mxu0
  %v472 = vadd.f32 0.0, %v471
  %v473 = vpop.f32.mrb[0].mxu0
  %474 = vmatprep.mubr.bf16.mxu0 0
  %475 = vmatmul.mubr.bf16.gmra.mrb[0].mxu0 %v239
  %v476 = vpop.f32.mrb[0].mxu0
  %v477 = vadd.f32 0.0, %v476
  %v478 = vpop.f32.mrb[0].mxu0
  %v479 = vpop.f32.mrb[0].mxu0
  %v480 = vadd.f32 0.0, %v479
  %v481 = vpop.f32.mrb[0].mxu0
  %482 = vmatprep.mubr.bf16.mxu0 0
  %483 = vmatmul.mubr.bf16.gmra.mrb[0].mxu0 %v240
  %v484 = vpop.f32.mrb[0].mxu0
  %v485 = vadd.f32 0.0, %v484
  %v486 = vpop.f32.mrb[0].mxu0
  %v487 = vpop.f32.mrb[0].mxu0
  %v488 = vadd.f32 0.0, %v487
  %v489 = vpop.f32.mrb[0].mxu0
  %490 = vmatprep.mubr.bf16.mxu0 0
  %491 = vmatmul.mubr.bf16.gmra.mrb[0].mxu0 %v241
  %v492 = vpop.f32.mrb[0].mxu0
  %v493 = vadd.f32 0.0, %v492
  %v494 = vpop.f32.mrb[0].mxu0
  %v495 = vpop.f32.mrb[0].mxu0
  %v496 = vadd.f32 0.0, %v495
  %v497 = vpop.f32.mrb[0].mxu0
  %498 = vmatprep.mubr.bf16.mxu0 0
  %499 = vmatmul.mubr.bf16.gmra.mrb[0].mxu0 %v242
  %v500 = vpop.f32.mrb[0].mxu0
  %v501 = vadd.f32 0.0, %v500
  %v502 = vpop.f32.mrb[0].mxu0
  %v503 = vpop.f32.mrb[0].mxu0
  %v504 = vadd.f32 0.0, %v503
  %v505 = vpop.f32.mrb[0].mxu0
  %506 = vmatprep.mubr.bf16.mxu0 0
  %507 = vmatmul.mubr.bf16.gmra.mrb[0].mxu0 %v243
  %v508 = vpop.f32.mrb[0].mxu0
  %v509 = vadd.f32 0.0, %v508
  %v510 = vpop.f32.mrb[0].mxu0
  %v511 = vpop.f32.mrb[0].mxu0
  %v512 = vadd.f32 0.0, %v511
  %v513 = vpop.f32.mrb[0].mxu0
  %514 = vmatprep.mubr.bf16.mxu0 0
  %515 = vmatmul.mubr.bf16.gmra.mrb[0].mxu0 %v244
  %v516 = vpop.f32.mrb[0].mxu0
  %v517 = vadd.f32 0.0, %v516
  %v518 = vpop.f32.mrb[0].mxu0
  %v519 = vpop.f32.mrb[0].mxu0
  %v520 = vadd.f32 0.0, %v519
  %v521 = vpop.f32.mrb[0].mxu0
  %522 = vmatprep.mubr.bf16.mxu0 0
  %523 = vmatmul.mubr.bf16.gmra.mrb[0].mxu0 %v245
  %v524 = vpop.f32.mrb[0].mxu0
  %v525 = vadd.f32 0.0, %v524
  %v526 = vpop.f32.mrb[0].mxu0
  %v527 = vpop.f32.mrb[0].mxu0
  %v528 = vadd.f32 0.0, %v527
  %v529 = vpop.f32.mrb[0].mxu0
  %530 = vmatprep.mubr.bf16.mxu0 0
  %531 = vmatmul.mubr.bf16.gmra.mrb[0].mxu0 %v246
  %v532 = vpop.f32.mrb[0].mxu0
  %v533 = vadd.f32 0.0, %v532
  %v534 = vpop.f32.mrb[0].mxu0
  %v535 = vpop.f32.mrb[0].mxu0
  %v536 = vadd.f32 0.0, %v535
  %v537 = vpop.f32.mrb[0].mxu0
  %538 = vmatprep.mubr.bf16.mxu0 0
  %539 = vmatmul.mubr.bf16.gmra.mrb[0].mxu0 %v247
  %v540 = vpop.f32.mrb[0].mxu0
  %v541 = vadd.f32 0.0, %v540
  %v542 = vpop.f32.mrb[0].mxu0
  %v543 = vpop.f32.mrb[0].mxu0
  %v544 = vadd.f32 0.0, %v543
  %v545 = vpop.f32.mrb[0].mxu0
  %546 = vmatprep.mubr.bf16.mxu0 0
  %547 = vmatmul.mubr.bf16.gmra.mrb[0].mxu0 %v248
  %v548 = vpop.f32.mrb[0].mxu0
  %v549 = vadd.f32 0.0, %v548
  %v550 = vpop.f32.mrb[0].mxu0
  %v551 = vpop.f32.mrb[0].mxu0
  %v552 = vadd.f32 0.0, %v551
  %v553 = vpop.f32.mrb[0].mxu0
  %554 = vmatprep.mubr.bf16.mxu0 0
  %555 = vmatmul.mubr.bf16.gmra.mrb[0].mxu0 %v249
  %v556 = vpop.f32.mrb[0].mxu0
  %v557 = vadd.f32 0.0, %v556
  %v558 = vpop.f32.mrb[0].mxu0
  %v559 = vpop.f32.mrb[0].mxu0
  %v560 = vadd.f32 0.0, %v559
  %v561 = vpop.f32.mrb[0].mxu0
  %562 = vmatprep.mubr.bf16.mxu0 0
  %563 = vmatmul.mubr.bf16.gmra.mrb[0].mxu0 %v250
  %v564 = vpop.f32.mrb[0].mxu0
  %v565 = vadd.f32 0.0, %v564
  %v566 = vpop.f32.mrb[0].mxu0
  %v567 = vpop.f32.mrb[0].mxu0
  %v568 = vadd.f32 0.0, %v567
  %v569 = vpop.f32.mrb[0].mxu0
  %570 = vmatprep.mubr.bf16.mxu0 0
  %571 = vmatmul.mubr.bf16.gmra.mrb[0].mxu0 %v251
  %v572 = vpop.f32.mrb[0].mxu0
  %v573 = vadd.f32 0.0, %v572
  %v574 = vpop.f32.mrb[0].mxu0
  %v575 = vpop.f32.mrb[0].mxu0
  %v576 = vadd.f32 0.0, %v575
  %v577 = vpop.f32.mrb[0].mxu0
  %578 = vmatprep.mubr.bf16.mxu0 0
  %579 = vmatmul.mubr.bf16.gmra.mrb[0].mxu0 %v252
  %v580 = vpop.f32.mrb[0].mxu0
  %v581 = vadd.f32 0.0, %v580
  %v582 = vpop.f32.mrb[0].mxu0
  %v583 = vpop.f32.mrb[0].mxu0
  %v584 = vadd.f32 0.0, %v583
  %v585 = vpop.f32.mrb[0].mxu0
  %586 = vmatprep.mubr.bf16.mxu0 0
  %587 = vmatmul.mubr.bf16.gmra.mrb[0].mxu0 %v253
  %v588 = vpop.f32.mrb[0].mxu0
  %v589 = vadd.f32 0.0, %v588
  %v590 = vpop.f32.mrb[0].mxu0
  %v591 = vpop.f32.mrb[0].mxu0
  %v592 = vadd.f32 0.0, %v591
  %v593 = vpop.f32.mrb[0].mxu0
  %594 = vmatprep.mubr.bf16.mxu0 0
  %595 = vmatmul.mubr.bf16.gmra.mrb[0].mxu0 %v254
  %v596 = vpop.f32.mrb[0].mxu0
  %v597 = vadd.f32 0.0, %v596
  %v598 = vpop.f32.mrb[0].mxu0
  %v599 = vpop.f32.mrb[0].mxu0
  %v600 = vadd.f32 0.0, %v599
  %v601 = vpop.f32.mrb[0].mxu0
  %602 = vmatprep.mubr.bf16.mxu0 0
  %603 = vmatmul.mubr.bf16.gmra.mrb[0].mxu0 %v255
  %v604 = vpop.f32.mrb[0].mxu0
  %v605 = vadd.f32 0.0, %v604
  %v606 = vpop.f32.mrb[0].mxu0
  %v607 = vpop.f32.mrb[0].mxu0
  %v608 = vadd.f32 0.0, %v607
  %v609 = vpop.f32.mrb[0].mxu0
  %610 = vmatprep.mubr.bf16.mxu0 0
  %611 = vmatmul.mubr.bf16.gmra.mrb[0].mxu0 %v256
  %v612 = vpop.f32.mrb[0].mxu0
  %v613 = vadd.f32 0.0, %v612
  %v614 = vpop.f32.mrb[0].mxu0
  %v615 = vpop.f32.mrb[0].mxu0
  %v616 = vadd.f32 0.0, %v615
  %v617 = vpop.f32.mrb[0].mxu0
  %618 = vmatprep.mubr.bf16.mxu0 0
  %619 = vmatmul.mubr.bf16.gmra.mrb[0].mxu0 %v257
  %v620 = vpop.f32.mrb[0].mxu0
  %v621 = vadd.f32 0.0, %v620
  %v622 = vpop.f32.mrb[0].mxu0
  %v623 = vpop.f32.mrb[0].mxu0
  %v624 = vadd.f32 0.0, %v623
  %v625 = vpop.f32.mrb[0].mxu0
  %626 = vdwg.mxu0
  %v627 = vadd.f32 %v373, %v376
  %v628 = vadd.f32 %v627, %v381
  %v629 = vadd.f32 %v628, %v384
  %v630 = vadd.f32 %v629, %v389
  %v631 = vadd.f32 %v630, %v392
  %v632 = vadd.f32 %v631, %v397
  %v633 = vadd.f32 %v632, %v400
  %v634 = vadd.f32 %v633, %v405
  %v635 = vadd.f32 %v634, %v408
  %v636 = vadd.f32 %v635, %v413
  %v637 = vadd.f32 %v636, %v416
  %v638 = vadd.f32 %v637, %v421
  %v639 = vadd.f32 %v638, %v424
  %v640 = vadd.f32 %v639, %v429
  %v641 = vadd.f32 %v640, %v432
  %v642 = vadd.f32 %v641, %v437
  %v643 = vadd.f32 %v642, %v440
  %v644 = vadd.f32 %v643, %v445
  %v645 = vadd.f32 %v644, %v448
  %v646 = vadd.f32 %v645, %v453
  %v647 = vadd.f32 %v646, %v456
  %v648 = vadd.f32 %v647, %v461
  %v649 = vadd.f32 %v648, %v464
  %v650 = vadd.f32 %v649, %v469
  %v651 = vadd.f32 %v650, %v472
  %v652 = vadd.f32 %v651, %v477
  %v653 = vadd.f32 %v652, %v480
  %v654 = vadd.f32 %v653, %v485
  %v655 = vadd.f32 %v654, %v488
  %v656 = vadd.f32 %v655, %v493
  %v657 = vadd.f32 %v656, %v496
  %v658 = vadd.f32 %v657, %v501
  %v659 = vadd.f32 %v658, %v504
  %v660 = vadd.f32 %v659, %v509
  %v661 = vadd.f32 %v660, %v512
  %v662 = vadd.f32 %v661, %v517
  %v663 = vadd.f32 %v662, %v520
  %v664 = vadd.f32 %v663, %v525
  %v665 = vadd.f32 %v664, %v528
  %v666 = vadd.f32 %v665, %v533
  %v667 = vadd.f32 %v666, %v536
  %v668 = vadd.f32 %v667, %v541
  %v669 = vadd.f32 %v668, %v544
  %v670 = vadd.f32 %v669, %v549
  %v671 = vadd.f32 %v670, %v552
  %v672 = vadd.f32 %v671, %v557
  %v673 = vadd.f32 %v672, %v560
  %v674 = vadd.f32 %v673, %v565
  %v675 = vadd.f32 %v674, %v568
  %v676 = vadd.f32 %v675, %v573
  %v677 = vadd.f32 %v676, %v576
  %v678 = vadd.f32 %v677, %v581
  %v679 = vadd.f32 %v678, %v584
  %v680 = vadd.f32 %v679, %v589
  %v681 = vadd.f32 %v680, %v592
  %v682 = vadd.f32 %v681, %v597
  %v683 = vadd.f32 %v682, %v600
  %v684 = vadd.f32 %v683, %v605
  %v685 = vadd.f32 %v684, %v608
  %v686 = vadd.f32 %v685, %v613
  %v687 = vadd.f32 %v686, %v616
  %v688 = vadd.f32 %v687, %v621
  %v689 = vadd.f32 %v688, %v624
  %v690 = vrot.slane %v689, 4
  %v691 = vadd.f32 %v689, %v690
  %v692 = vrot.slane %v691, 2
  %v693 = vadd.f32 %v691, %v692
  %v694 = vrot.slane %v693, 1
  %v695 = vadd.f32 %v693, %v694
  %v696 = vmul.f32 %v695, 0.001953125
  %v697 = vsub.f32 %v373, %v696
  %v698 = vsub.f32 %v376, %v696
  %v699 = vsub.f32 %v381, %v696
  %v700 = vsub.f32 %v384, %v696
  %v701 = vsub.f32 %v389, %v696
  %v702 = vsub.f32 %v392, %v696
  %v703 = vsub.f32 %v397, %v696
  %v704 = vsub.f32 %v400, %v696
  %v705 = vsub.f32 %v405, %v696
  %v706 = vsub.f32 %v408, %v696
  %v707 = vsub.f32 %v413, %v696
  %v708 = vsub.f32 %v416, %v696
  %v709 = vsub.f32 %v421, %v696
  %v710 = vsub.f32 %v424, %v696
  %v711 = vsub.f32 %v429, %v696
  %v712 = vsub.f32 %v432, %v696
  %v713 = vsub.f32 %v437, %v696
  %v714 = vsub.f32 %v440, %v696
  %v715 = vsub.f32 %v445, %v696
  %v716 = vsub.f32 %v448, %v696
  %v717 = vsub.f32 %v453, %v696
  %v718 = vsub.f32 %v456, %v696
  %v719 = vsub.f32 %v461, %v696
  %v720 = vsub.f32 %v464, %v696
  %v721 = vsub.f32 %v469, %v696
  %v722 = vsub.f32 %v472, %v696
  %v723 = vsub.f32 %v477, %v696
  %v724 = vsub.f32 %v480, %v696
  %v725 = vsub.f32 %v485, %v696
  %v726 = vsub.f32 %v488, %v696
  %v727 = vsub.f32 %v493, %v696
  %v728 = vsub.f32 %v496, %v696
  %v729 = vsub.f32 %v501, %v696
  %v730 = vsub.f32 %v504, %v696
  %v731 = vsub.f32 %v509, %v696
  %v732 = vsub.f32 %v512, %v696
  %v733 = vsub.f32 %v517, %v696
  %v734 = vsub.f32 %v520, %v696
  %v735 = vsub.f32 %v525, %v696
  %v736 = vsub.f32 %v528, %v696
  %v737 = vsub.f32 %v533, %v696
  %v738 = vsub.f32 %v536, %v696
  %v739 = vsub.f32 %v541, %v696
  %v740 = vsub.f32 %v544, %v696
  %v741 = vsub.f32 %v549, %v696
  %v742 = vsub.f32 %v552, %v696
  %v743 = vsub.f32 %v557, %v696
  %v744 = vsub.f32 %v560, %v696
  %v745 = vsub.f32 %v565, %v696
  %v746 = vsub.f32 %v568, %v696
  %v747 = vsub.f32 %v573, %v696
  %v748 = vsub.f32 %v576, %v696
  %v749 = vsub.f32 %v581, %v696
  %v750 = vsub.f32 %v584, %v696
  %v751 = vsub.f32 %v589, %v696
  %v752 = vsub.f32 %v592, %v696
  %v753 = vsub.f32 %v597, %v696
  %v754 = vsub.f32 %v600, %v696
  %v755 = vsub.f32 %v605, %v696
  %v756 = vsub.f32 %v608, %v696
  %v757 = vsub.f32 %v613, %v696
  %v758 = vsub.f32 %v616, %v696
  %v759 = vsub.f32 %v621, %v696
  %v760 = vsub.f32 %v624, %v696
  %v761 = vmul.f32 %v697, %v697
  %v762 = vmul.f32 %v698, %v698
  %v763 = vmul.f32 %v699, %v699
  %v764 = vmul.f32 %v700, %v700
  %v765 = vmul.f32 %v701, %v701
  %v766 = vmul.f32 %v702, %v702
  %v767 = vmul.f32 %v703, %v703
  %v768 = vmul.f32 %v704, %v704
  %v769 = vmul.f32 %v705, %v705
  %v770 = vmul.f32 %v706, %v706
  %v771 = vmul.f32 %v707, %v707
  %v772 = vmul.f32 %v708, %v708
  %v773 = vmul.f32 %v709, %v709
  %v774 = vmul.f32 %v710, %v710
  %v775 = vmul.f32 %v711, %v711
  %v776 = vmul.f32 %v712, %v712
  %v777 = vmul.f32 %v713, %v713
  %v778 = vmul.f32 %v714, %v714
  %v779 = vmul.f32 %v715, %v715
  %v780 = vmul.f32 %v716, %v716
  %v781 = vmul.f32 %v717, %v717
  %v782 = vmul.f32 %v718, %v718
  %v783 = vmul.f32 %v719, %v719
  %v784 = vmul.f32 %v720, %v720
  %v785 = vmul.f32 %v721, %v721
  %v786 = vmul.f32 %v722, %v722
  %v787 = vmul.f32 %v723, %v723
  %v788 = vmul.f32 %v724, %v724
  %v789 = vmul.f32 %v725, %v725
  %v790 = vmul.f32 %v726, %v726
  %v791 = vmul.f32 %v727, %v727
  %v792 = vmul.f32 %v728, %v728
  %v793 = vmul.f32 %v729, %v729
  %v794 = vmul.f32 %v730, %v730
  %v795 = vmul.f32 %v731, %v731
  %v796 = vmul.f32 %v732, %v732
  %v797 = vmul.f32 %v733, %v733
  %v798 = vmul.f32 %v734, %v734
  %v799 = vmul.f32 %v735, %v735
  %v800 = vmul.f32 %v736, %v736
  %v801 = vmul.f32 %v737, %v737
  %v802 = vmul.f32 %v738, %v738
  %v803 = vmul.f32 %v739, %v739
  %v804 = vmul.f32 %v740, %v740
  %v805 = vmul.f32 %v741, %v741
  %v806 = vmul.f32 %v742, %v742
  %v807 = vmul.f32 %v743, %v743
  %v808 = vmul.f32 %v744, %v744
  %v809 = vmul.f32 %v745, %v745
  %v810 = vmul.f32 %v746, %v746
  %v811 = vmul.f32 %v747, %v747
  %v812 = vmul.f32 %v748, %v748
  %v813 = vmul.f32 %v749, %v749
  %v814 = vmul.f32 %v750, %v750
  %v815 = vmul.f32 %v751, %v751
  %v816 = vmul.f32 %v752, %v752
  %v817 = vmul.f32 %v753, %v753
  %v818 = vmul.f32 %v754, %v754
  %v819 = vmul.f32 %v755, %v755
  %v820 = vmul.f32 %v756, %v756
  %v821 = vmul.f32 %v757, %v757
  %v822 = vmul.f32 %v758, %v758
  %v823 = vmul.f32 %v759, %v759
  %v824 = vmul.f32 %v760, %v760
  %v825 = vadd.f32 %v761, %v762
  %v826 = vadd.f32 %v825, %v763
  %v827 = vadd.f32 %v826, %v764
  %v828 = vadd.f32 %v827, %v765
  %v829 = vadd.f32 %v828, %v766
  %v830 = vadd.f32 %v829, %v767
  %v831 = vadd.f32 %v830, %v768
  %v832 = vadd.f32 %v831, %v769
  %v833 = vadd.f32 %v832, %v770
  %v834 = vadd.f32 %v833, %v771
  %v835 = vadd.f32 %v834, %v772
  %v836 = vadd.f32 %v835, %v773
  %v837 = vadd.f32 %v836, %v774
  %v838 = vadd.f32 %v837, %v775
  %v839 = vadd.f32 %v838, %v776
  %v840 = vadd.f32 %v839, %v777
  %v841 = vadd.f32 %v840, %v778
  %v842 = vadd.f32 %v841, %v779
  %v843 = vadd.f32 %v842, %v780
  %v844 = vadd.f32 %v843, %v781
  %v845 = vadd.f32 %v844, %v782
  %v846 = vadd.f32 %v845, %v783
  %v847 = vadd.f32 %v846, %v784
  %v848 = vadd.f32 %v847, %v785
  %v849 = vadd.f32 %v848, %v786
  %v850 = vadd.f32 %v849, %v787
  %v851 = vadd.f32 %v850, %v788
  %v852 = vadd.f32 %v851, %v789
  %v853 = vadd.f32 %v852, %v790
  %v854 = vadd.f32 %v853, %v791
  %v855 = vadd.f32 %v854, %v792
  %v856 = vadd.f32 %v855, %v793
  %v857 = vadd.f32 %v856, %v794
  %v858 = vadd.f32 %v857, %v795
  %v859 = vadd.f32 %v858, %v796
  %v860 = vadd.f32 %v859, %v797
  %v861 = vadd.f32 %v860, %v798
  %v862 = vadd.f32 %v861, %v799
  %v863 = vadd.f32 %v862, %v800
  %v864 = vadd.f32 %v863, %v801
  %v865 = vadd.f32 %v864, %v802
  %v866 = vadd.f32 %v865, %v803
  %v867 = vadd.f32 %v866, %v804
  %v868 = vadd.f32 %v867, %v805
  %v869 = vadd.f32 %v868, %v806
  %v870 = vadd.f32 %v869, %v807
  %v871 = vadd.f32 %v870, %v808
  %v872 = vadd.f32 %v871, %v809
  %v873 = vadd.f32 %v872, %v810
  %v874 = vadd.f32 %v873, %v811
  %v875 = vadd.f32 %v874, %v812
  %v876 = vadd.f32 %v875, %v813
  %v877 = vadd.f32 %v876, %v814
  %v878 = vadd.f32 %v877, %v815
  %v879 = vadd.f32 %v878, %v816
  %v880 = vadd.f32 %v879, %v817
  %v881 = vadd.f32 %v880, %v818
  %v882 = vadd.f32 %v881, %v819
  %v883 = vadd.f32 %v882, %v820
  %v884 = vadd.f32 %v883, %v821
  %v885 = vadd.f32 %v884, %v822
  %v886 = vadd.f32 %v885, %v823
  %v887 = vadd.f32 %v886, %v824
  %v888 = vrot.slane %v887, 4
  %v889 = vadd.f32 %v887, %v888
  %v890 = vrot.slane %v889, 2
  %v891 = vadd.f32 %v889, %v890
  %v892 = vrot.slane %v891, 1
  %v893 = vadd.f32 %v891, %v892
  %v894 = vmul.f32 %v893, 0.001953125
  %v895 = vld [vmem:[%s2] sm:$0x1]
  %v896 = vadd.f32 %v894, 1e-05
  %v897 = vrsqrt.pop %v896
  %v898 = vmul.f32 %v895, %v897
  %v900 = vlaneseq
  %v901 = vshrl.u32 %v900, 7
  %v902 = vsub.s32 0, %v901
  %v903 = vrot.slane %v898, %v902
  %v905 = vmul.f32 %v697, %v903
  %v906 = vmul.f32 %v698, %v903
  %v907 = vmul.f32 %v699, %v903
  %v908 = vmul.f32 %v700, %v903
  %v909 = vmul.f32 %v701, %v903
  %v910 = vmul.f32 %v702, %v903
  %v911 = vmul.f32 %v703, %v903
  %v912 = vmul.f32 %v704, %v903
  %v913 = vmul.f32 %v705, %v903
  %v914 = vmul.f32 %v706, %v903
  %v915 = vmul.f32 %v707, %v903
  %v916 = vmul.f32 %v708, %v903
  %v917 = vmul.f32 %v709, %v903
  %v918 = vmul.f32 %v710, %v903
  %v919 = vmul.f32 %v711, %v903
  %v920 = vmul.f32 %v712, %v903
  %v921 = vmul.f32 %v713, %v903
  %v922 = vmul.f32 %v714, %v903
  %v923 = vmul.f32 %v715, %v903
  %v924 = vmul.f32 %v716, %v903
  %v925 = vmul.f32 %v717, %v903
  %v926 = vmul.f32 %v718, %v903
  %v927 = vmul.f32 %v719, %v903
  %v928 = vmul.f32 %v720, %v903
  %v929 = vmul.f32 %v721, %v903
  %v930 = vmul.f32 %v722, %v903
  %v931 = vmul.f32 %v723, %v903
  %v932 = vmul.f32 %v724, %v903
  %v933 = vmul.f32 %v725, %v903
  %v934 = vmul.f32 %v726, %v903
  %v935 = vmul.f32 %v727, %v903
  %v936 = vmul.f32 %v728, %v903
  %v937 = vmul.f32 %v729, %v903
  %v938 = vmul.f32 %v730, %v903
  %v939 = vmul.f32 %v731, %v903
  %v940 = vmul.f32 %v732, %v903
  %v941 = vmul.f32 %v733, %v903
  %v942 = vmul.f32 %v734, %v903
  %v943 = vmul.f32 %v735, %v903
  %v944 = vmul.f32 %v736, %v903
  %v945 = vmul.f32 %v737, %v903
  %v946 = vmul.f32 %v738, %v903
  %v947 = vmul.f32 %v739, %v903
  %v948 = vmul.f32 %v740, %v903
  %v949 = vmul.f32 %v741, %v903
  %v950 = vmul.f32 %v742, %v903
  %v951 = vmul.f32 %v743, %v903
  %v952 = vmul.f32 %v744, %v903
  %v953 = vmul.f32 %v745, %v903
  %v954 = vmul.f32 %v746, %v903
  %v955 = vmul.f32 %v747, %v903
  %v956 = vmul.f32 %v748, %v903
  %v957 = vmul.f32 %v749, %v903
  %v958 = vmul.f32 %v750, %v903
  %v959 = vmul.f32 %v751, %v903
  %v960 = vmul.f32 %v752, %v903
  %v961 = vmul.f32 %v753, %v903
  %v962 = vmul.f32 %v754, %v903
  %v963 = vmul.f32 %v755, %v903
  %v964 = vmul.f32 %v756, %v903
  %v965 = vmul.f32 %v757, %v903
  %v966 = vmul.f32 %v758, %v903
  %v967 = vmul.f32 %v759, %v903
  %v968 = vmul.f32 %v760, %v903
  %v969 = vld [vmem:[%s3] sm:$0x1]
  %v971 = vlaneseq
  %v972 = vshrl.u32 %v971, 7
  %v973 = vsub.s32 0, %v972
  %v974 = vrot.slane %v969, %v973
  %v976 = vadd.f32 %v905, %v974
  %v977 = vadd.f32 %v906, %v974
  %v978 = vadd.f32 %v907, %v974
  %v979 = vadd.f32 %v908, %v974
  %v980 = vadd.f32 %v909, %v974
  %v981 = vadd.f32 %v910, %v974
  %v982 = vadd.f32 %v911, %v974
  %v983 = vadd.f32 %v912, %v974
  %v984 = vadd.f32 %v913, %v974
  %v985 = vadd.f32 %v914, %v974
  %v986 = vadd.f32 %v915, %v974
  %v987 = vadd.f32 %v916, %v974
  %v988 = vadd.f32 %v917, %v974
  %v989 = vadd.f32 %v918, %v974
  %v990 = vadd.f32 %v919, %v974
  %v991 = vadd.f32 %v920, %v974
  %v992 = vadd.f32 %v921, %v974
  %v993 = vadd.f32 %v922, %v974
  %v994 = vadd.f32 %v923, %v974
  %v995 = vadd.f32 %v924, %v974
  %v996 = vadd.f32 %v925, %v974
  %v997 = vadd.f32 %v926, %v974
  %v998 = vadd.f32 %v927, %v974
  %v999 = vadd.f32 %v928, %v974
  %v1000 = vadd.f32 %v929, %v974
  %v1001 = vadd.f32 %v930, %v974
  %v1002 = vadd.f32 %v931, %v974
  %v1003 = vadd.f32 %v932, %v974
  %v1004 = vadd.f32 %v933, %v974
  %v1005 = vadd.f32 %v934, %v974
  %v1006 = vadd.f32 %v935, %v974
  %v1007 = vadd.f32 %v936, %v974
  %v1008 = vadd.f32 %v937, %v974
  %v1009 = vadd.f32 %v938, %v974
  %v1010 = vadd.f32 %v939, %v974
  %v1011 = vadd.f32 %v940, %v974
  %v1012 = vadd.f32 %v941, %v974
  %v1013 = vadd.f32 %v942, %v974
  %v1014 = vadd.f32 %v943, %v974
  %v1015 = vadd.f32 %v944, %v974
  %v1016 = vadd.f32 %v945, %v974
  %v1017 = vadd.f32 %v946, %v974
  %v1018 = vadd.f32 %v947, %v974
  %v1019 = vadd.f32 %v948, %v974
  %v1020 = vadd.f32 %v949, %v974
  %v1021 = vadd.f32 %v950, %v974
  %v1022 = vadd.f32 %v951, %v974
  %v1023 = vadd.f32 %v952, %v974
  %v1024 = vadd.f32 %v953, %v974
  %v1025 = vadd.f32 %v954, %v974
  %v1026 = vadd.f32 %v955, %v974
  %v1027 = vadd.f32 %v956, %v974
  %v1028 = vadd.f32 %v957, %v974
  %v1029 = vadd.f32 %v958, %v974
  %v1030 = vadd.f32 %v959, %v974
  %v1031 = vadd.f32 %v960, %v974
  %v1032 = vadd.f32 %v961, %v974
  %v1033 = vadd.f32 %v962, %v974
  %v1034 = vadd.f32 %v963, %v974
  %v1035 = vadd.f32 %v964, %v974
  %v1036 = vadd.f32 %v965, %v974
  %v1037 = vadd.f32 %v966, %v974
  %v1038 = vadd.f32 %v967, %v974
  %v1039 = vadd.f32 %v968, %v974
  %vm1040 = vcmp.ge.f32.partialorder %v976, 0.0
  %vm1041 = vcmp.ge.f32.partialorder %v977, 0.0
  %vm1042 = vcmp.ge.f32.partialorder %v978, 0.0
  %vm1043 = vcmp.ge.f32.partialorder %v979, 0.0
  %vm1044 = vcmp.ge.f32.partialorder %v980, 0.0
  %vm1045 = vcmp.ge.f32.partialorder %v981, 0.0
  %vm1046 = vcmp.ge.f32.partialorder %v982, 0.0
  %vm1047 = vcmp.ge.f32.partialorder %v983, 0.0
  %vm1048 = vcmp.ge.f32.partialorder %v984, 0.0
  %vm1049 = vcmp.ge.f32.partialorder %v985, 0.0
  %vm1050 = vcmp.ge.f32.partialorder %v986, 0.0
  %vm1051 = vcmp.ge.f32.partialorder %v987, 0.0
  %vm1052 = vcmp.ge.f32.partialorder %v988, 0.0
  %vm1053 = vcmp.ge.f32.partialorder %v989, 0.0
  %vm1054 = vcmp.ge.f32.partialorder %v990, 0.0
  %vm1055 = vcmp.ge.f32.partialorder %v991, 0.0
  %vm1056 = vcmp.ge.f32.partialorder %v992, 0.0
  %vm1057 = vcmp.ge.f32.partialorder %v993, 0.0
  %vm1058 = vcmp.ge.f32.partialorder %v994, 0.0
  %vm1059 = vcmp.ge.f32.partialorder %v995, 0.0
  %vm1060 = vcmp.ge.f32.partialorder %v996, 0.0
  %vm1061 = vcmp.ge.f32.partialorder %v997, 0.0
  %vm1062 = vcmp.ge.f32.partialorder %v998, 0.0
  %vm1063 = vcmp.ge.f32.partialorder %v999, 0.0
  %vm1064 = vcmp.ge.f32.partialorder %v1000, 0.0
  %vm1065 = vcmp.ge.f32.partialorder %v1001, 0.0
  %vm1066 = vcmp.ge.f32.partialorder %v1002, 0.0
  %vm1067 = vcmp.ge.f32.partialorder %v1003, 0.0
  %vm1068 = vcmp.ge.f32.partialorder %v1004, 0.0
  %vm1069 = vcmp.ge.f32.partialorder %v1005, 0.0
  %vm1070 = vcmp.ge.f32.partialorder %v1006, 0.0
  %vm1071 = vcmp.ge.f32.partialorder %v1007, 0.0
  %vm1072 = vcmp.ge.f32.partialorder %v1008, 0.0
  %vm1073 = vcmp.ge.f32.partialorder %v1009, 0.0
  %vm1074 = vcmp.ge.f32.partialorder %v1010, 0.0
  %vm1075 = vcmp.ge.f32.partialorder %v1011, 0.0
  %vm1076 = vcmp.ge.f32.partialorder %v1012, 0.0
  %vm1077 = vcmp.ge.f32.partialorder %v1013, 0.0
  %vm1078 = vcmp.ge.f32.partialorder %v1014, 0.0
  %vm1079 = vcmp.ge.f32.partialorder %v1015, 0.0
  %vm1080 = vcmp.ge.f32.partialorder %v1016, 0.0
  %vm1081 = vcmp.ge.f32.partialorder %v1017, 0.0
  %vm1082 = vcmp.ge.f32.partialorder %v1018, 0.0
  %vm1083 = vcmp.ge.f32.partialorder %v1019, 0.0
  %vm1084 = vcmp.ge.f32.partialorder %v1020, 0.0
  %vm1085 = vcmp.ge.f32.partialorder %v1021, 0.0
  %vm1086 = vcmp.ge.f32.partialorder %v1022, 0.0
  %vm1087 = vcmp.ge.f32.partialorder %v1023, 0.0
  %vm1088 = vcmp.ge.f32.partialorder %v1024, 0.0
  %vm1089 = vcmp.ge.f32.partialorder %v1025, 0.0
  %vm1090 = vcmp.ge.f32.partialorder %v1026, 0.0
  %vm1091 = vcmp.ge.f32.partialorder %v1027, 0.0
  %vm1092 = vcmp.ge.f32.partialorder %v1028, 0.0
  %vm1093 = vcmp.ge.f32.partialorder %v1029, 0.0
  %vm1094 = vcmp.ge.f32.partialorder %v1030, 0.0
  %vm1095 = vcmp.ge.f32.partialorder %v1031, 0.0
  %vm1096 = vcmp.ge.f32.partialorder %v1032, 0.0
  %vm1097 = vcmp.ge.f32.partialorder %v1033, 0.0
  %vm1098 = vcmp.ge.f32.partialorder %v1034, 0.0
  %vm1099 = vcmp.ge.f32.partialorder %v1035, 0.0
  %vm1100 = vcmp.ge.f32.partialorder %v1036, 0.0
  %vm1101 = vcmp.ge.f32.partialorder %v1037, 0.0
  %vm1102 = vcmp.ge.f32.partialorder %v1038, 0.0
  %vm1103 = vcmp.ge.f32.partialorder %v1039, 0.0
  %v1104 = vmul.f32 %v976, 0.2
  %v1105 = vmul.f32 %v977, 0.2
  %v1106 = vmul.f32 %v978, 0.2
  %v1107 = vmul.f32 %v979, 0.2
  %v1108 = vmul.f32 %v980, 0.2
  %v1109 = vmul.f32 %v981, 0.2
  %v1110 = vmul.f32 %v982, 0.2
  %v1111 = vmul.f32 %v983, 0.2
  %v1112 = vmul.f32 %v984, 0.2
  %v1113 = vmul.f32 %v985, 0.2
  %v1114 = vmul.f32 %v986, 0.2
  %v1115 = vmul.f32 %v987, 0.2
  %v1116 = vmul.f32 %v988, 0.2
  %v1117 = vmul.f32 %v989, 0.2
  %v1118 = vmul.f32 %v990, 0.2
  %v1119 = vmul.f32 %v991, 0.2
  %v1120 = vmul.f32 %v992, 0.2
  %v1121 = vmul.f32 %v993, 0.2
  %v1122 = vmul.f32 %v994, 0.2
  %v1123 = vmul.f32 %v995, 0.2
  %v1124 = vmul.f32 %v996, 0.2
  %v1125 = vmul.f32 %v997, 0.2
  %v1126 = vmul.f32 %v998, 0.2
  %v1127 = vmul.f32 %v999, 0.2
  %v1128 = vmul.f32 %v1000, 0.2
  %v1129 = vmul.f32 %v1001, 0.2
  %v1130 = vmul.f32 %v1002, 0.2
  %v1131 = vmul.f32 %v1003, 0.2
  %v1132 = vmul.f32 %v1004, 0.2
  %v1133 = vmul.f32 %v1005, 0.2
  %v1134 = vmul.f32 %v1006, 0.2
  %v1135 = vmul.f32 %v1007, 0.2
  %v1136 = vmul.f32 %v1008, 0.2
  %v1137 = vmul.f32 %v1009, 0.2
  %v1138 = vmul.f32 %v1010, 0.2
  %v1139 = vmul.f32 %v1011, 0.2
  %v1140 = vmul.f32 %v1012, 0.2
  %v1141 = vmul.f32 %v1013, 0.2
  %v1142 = vmul.f32 %v1014, 0.2
  %v1143 = vmul.f32 %v1015, 0.2
  %v1144 = vmul.f32 %v1016, 0.2
  %v1145 = vmul.f32 %v1017, 0.2
  %v1146 = vmul.f32 %v1018, 0.2
  %v1147 = vmul.f32 %v1019, 0.2
  %v1148 = vmul.f32 %v1020, 0.2
  %v1149 = vmul.f32 %v1021, 0.2
  %v1150 = vmul.f32 %v1022, 0.2
  %v1151 = vmul.f32 %v1023, 0.2
  %v1152 = vmul.f32 %v1024, 0.2
  %v1153 = vmul.f32 %v1025, 0.2
  %v1154 = vmul.f32 %v1026, 0.2
  %v1155 = vmul.f32 %v1027, 0.2
  %v1156 = vmul.f32 %v1028, 0.2
  %v1157 = vmul.f32 %v1029, 0.2
  %v1158 = vmul.f32 %v1030, 0.2
  %v1159 = vmul.f32 %v1031, 0.2
  %v1160 = vmul.f32 %v1032, 0.2
  %v1161 = vmul.f32 %v1033, 0.2
  %v1162 = vmul.f32 %v1034, 0.2
  %v1163 = vmul.f32 %v1035, 0.2
  %v1164 = vmul.f32 %v1036, 0.2
  %v1165 = vmul.f32 %v1037, 0.2
  %v1166 = vmul.f32 %v1038, 0.2
  %v1167 = vmul.f32 %v1039, 0.2
  %v1168 = vsel %vm1040, %v976, %v1104
  %v1169 = vsel %vm1041, %v977, %v1105
  %v1170 = vsel %vm1042, %v978, %v1106
  %v1171 = vsel %vm1043, %v979, %v1107
  %v1172 = vsel %vm1044, %v980, %v1108
  %v1173 = vsel %vm1045, %v981, %v1109
  %v1174 = vsel %vm1046, %v982, %v1110
  %v1175 = vsel %vm1047, %v983, %v1111
  %v1176 = vsel %vm1048, %v984, %v1112
  %v1177 = vsel %vm1049, %v985, %v1113
  %v1178 = vsel %vm1050, %v986, %v1114
  %v1179 = vsel %vm1051, %v987, %v1115
  %v1180 = vsel %vm1052, %v988, %v1116
  %v1181 = vsel %vm1053, %v989, %v1117
  %v1182 = vsel %vm1054, %v990, %v1118
  %v1183 = vsel %vm1055, %v991, %v1119
  %v1184 = vsel %vm1056, %v992, %v1120
  %v1185 = vsel %vm1057, %v993, %v1121
  %v1186 = vsel %vm1058, %v994, %v1122
  %v1187 = vsel %vm1059, %v995, %v1123
  %v1188 = vsel %vm1060, %v996, %v1124
  %v1189 = vsel %vm1061, %v997, %v1125
  %v1190 = vsel %vm1062, %v998, %v1126
  %v1191 = vsel %vm1063, %v999, %v1127
  %v1192 = vsel %vm1064, %v1000, %v1128
  %v1193 = vsel %vm1065, %v1001, %v1129
  %v1194 = vsel %vm1066, %v1002, %v1130
  %v1195 = vsel %vm1067, %v1003, %v1131
  %v1196 = vsel %vm1068, %v1004, %v1132
  %v1197 = vsel %vm1069, %v1005, %v1133
  %v1198 = vsel %vm1070, %v1006, %v1134
  %v1199 = vsel %vm1071, %v1007, %v1135
  %v1200 = vsel %vm1072, %v1008, %v1136
  %v1201 = vsel %vm1073, %v1009, %v1137
  %v1202 = vsel %vm1074, %v1010, %v1138
  %v1203 = vsel %vm1075, %v1011, %v1139
  %v1204 = vsel %vm1076, %v1012, %v1140
  %v1205 = vsel %vm1077, %v1013, %v1141
  %v1206 = vsel %vm1078, %v1014, %v1142
  %v1207 = vsel %vm1079, %v1015, %v1143
  %v1208 = vsel %vm1080, %v1016, %v1144
  %v1209 = vsel %vm1081, %v1017, %v1145
  %v1210 = vsel %vm1082, %v1018, %v1146
  %v1211 = vsel %vm1083, %v1019, %v1147
  %v1212 = vsel %vm1084, %v1020, %v1148
  %v1213 = vsel %vm1085, %v1021, %v1149
  %v1214 = vsel %vm1086, %v1022, %v1150
  %v1215 = vsel %vm1087, %v1023, %v1151
  %v1216 = vsel %vm1088, %v1024, %v1152
  %v1217 = vsel %vm1089, %v1025, %v1153
  %v1218 = vsel %vm1090, %v1026, %v1154
  %v1219 = vsel %vm1091, %v1027, %v1155
  %v1220 = vsel %vm1092, %v1028, %v1156
  %v1221 = vsel %vm1093, %v1029, %v1157
  %v1222 = vsel %vm1094, %v1030, %v1158
  %v1223 = vsel %vm1095, %v1031, %v1159
  %v1224 = vsel %vm1096, %v1032, %v1160
  %v1225 = vsel %vm1097, %v1033, %v1161
  %v1226 = vsel %vm1098, %v1034, %v1162
  %v1227 = vsel %vm1099, %v1035, %v1163
  %v1228 = vsel %vm1100, %v1036, %v1164
  %v1229 = vsel %vm1101, %v1037, %v1165
  %v1230 = vsel %vm1102, %v1038, %v1166
  %v1231 = vsel %vm1103, %v1039, %v1167
  %1232 = vst [vmem:[%s4] sm:$0xff] %v1168
  %1233 = vst [vmem:[%s4 + $0x8] sm:$0xff] %v1169
  %1234 = vst [vmem:[%s4 + $0x10] sm:$0xff] %v1170
  %1235 = vst [vmem:[%s4 + $0x18] sm:$0xff] %v1171
  %1236 = vst [vmem:[%s4 + $0x20] sm:$0xff] %v1172
  %1237 = vst [vmem:[%s4 + $0x28] sm:$0xff] %v1173
  %1238 = vst [vmem:[%s4 + $0x30] sm:$0xff] %v1174
  %1239 = vst [vmem:[%s4 + $0x38] sm:$0xff] %v1175
  %1240 = vst [vmem:[%s4 + $0x40] sm:$0xff] %v1176
  %1241 = vst [vmem:[%s4 + $0x48] sm:$0xff] %v1177
  %1242 = vst [vmem:[%s4 + $0x50] sm:$0xff] %v1178
  %1243 = vst [vmem:[%s4 + $0x58] sm:$0xff] %v1179
  %1244 = vst [vmem:[%s4 + $0x60] sm:$0xff] %v1180
  %1245 = vst [vmem:[%s4 + $0x68] sm:$0xff] %v1181
  %1246 = vst [vmem:[%s4 + $0x70] sm:$0xff] %v1182
  %1247 = vst [vmem:[%s4 + $0x78] sm:$0xff] %v1183
  %1248 = vst [vmem:[%s4 + $0x80] sm:$0xff] %v1184
  %1249 = vst [vmem:[%s4 + $0x88] sm:$0xff] %v1185
  %1250 = vst [vmem:[%s4 + $0x90] sm:$0xff] %v1186
  %1251 = vst [vmem:[%s4 + $0x98] sm:$0xff] %v1187
  %1252 = vst [vmem:[%s4 + $0xa0] sm:$0xff] %v1188
  %1253 = vst [vmem:[%s4 + $0xa8] sm:$0xff] %v1189
  %1254 = vst [vmem:[%s4 + $0xb0] sm:$0xff] %v1190
  %1255 = vst [vmem:[%s4 + $0xb8] sm:$0xff] %v1191
  %1256 = vst [vmem:[%s4 + $0xc0] sm:$0xff] %v1192
  %1257 = vst [vmem:[%s4 + $0xc8] sm:$0xff] %v1193
  %1258 = vst [vmem:[%s4 + $0xd0] sm:$0xff] %v1194
  %1259 = vst [vmem:[%s4 + $0xd8] sm:$0xff] %v1195
  %1260 = vst [vmem:[%s4 + $0xe0] sm:$0xff] %v1196
  %1261 = vst [vmem:[%s4 + $0xe8] sm:$0xff] %v1197
  %1262 = vst [vmem:[%s4 + $0xf0] sm:$0xff] %v1198
  %1263 = vst [vmem:[%s4 + $0xf8] sm:$0xff] %v1199
  %1264 = vst [vmem:[%s4 + $0x100] sm:$0xff] %v1200
  %1265 = vst [vmem:[%s4 + $0x108] sm:$0xff] %v1201
  %1266 = vst [vmem:[%s4 + $0x110] sm:$0xff] %v1202
  %1267 = vst [vmem:[%s4 + $0x118] sm:$0xff] %v1203
  %1268 = vst [vmem:[%s4 + $0x120] sm:$0xff] %v1204
  %1269 = vst [vmem:[%s4 + $0x128] sm:$0xff] %v1205
  %1270 = vst [vmem:[%s4 + $0x130] sm:$0xff] %v1206
  %1271 = vst [vmem:[%s4 + $0x138] sm:$0xff] %v1207
  %1272 = vst [vmem:[%s4 + $0x140] sm:$0xff] %v1208
  %1273 = vst [vmem:[%s4 + $0x148] sm:$0xff] %v1209
  %1274 = vst [vmem:[%s4 + $0x150] sm:$0xff] %v1210
  %1275 = vst [vmem:[%s4 + $0x158] sm:$0xff] %v1211
  %1276 = vst [vmem:[%s4 + $0x160] sm:$0xff] %v1212
  %1277 = vst [vmem:[%s4 + $0x168] sm:$0xff] %v1213
  %1278 = vst [vmem:[%s4 + $0x170] sm:$0xff] %v1214
  %1279 = vst [vmem:[%s4 + $0x178] sm:$0xff] %v1215
  %1280 = vst [vmem:[%s4 + $0x180] sm:$0xff] %v1216
  %1281 = vst [vmem:[%s4 + $0x188] sm:$0xff] %v1217
  %1282 = vst [vmem:[%s4 + $0x190] sm:$0xff] %v1218
  %1283 = vst [vmem:[%s4 + $0x198] sm:$0xff] %v1219
  %1284 = vst [vmem:[%s4 + $0x1a0] sm:$0xff] %v1220
  %1285 = vst [vmem:[%s4 + $0x1a8] sm:$0xff] %v1221
  %1286 = vst [vmem:[%s4 + $0x1b0] sm:$0xff] %v1222
  %1287 = vst [vmem:[%s4 + $0x1b8] sm:$0xff] %v1223
  %1288 = vst [vmem:[%s4 + $0x1c0] sm:$0xff] %v1224
  %1289 = vst [vmem:[%s4 + $0x1c8] sm:$0xff] %v1225
  %1290 = vst [vmem:[%s4 + $0x1d0] sm:$0xff] %v1226
  %1291 = vst [vmem:[%s4 + $0x1d8] sm:$0xff] %v1227
  %1292 = vst [vmem:[%s4 + $0x1e0] sm:$0xff] %v1228
  %1293 = vst [vmem:[%s4 + $0x1e8] sm:$0xff] %v1229
  %1294 = vst [vmem:[%s4 + $0x1f0] sm:$0xff] %v1230
  %1295 = vst [vmem:[%s4 + $0x1f8] sm:$0xff] %v1231
  // Predicated region
  $region18: #{critic_forward.6} parent=0 // pred_check
    _
  $region19: #{critic_forward.6} parent=0 // pred_check_branch
    %1297 = sbr.rel (0) target = $region21
  $region20: #{critic_forward.6} parent=0 // pred_region
    _
  $region21: #{critic_forward.6} parent=0 // pred_fallthru
    _
  // Predicated region
  $region22: #{critic_forward.6} parent=0 // pred_check
    _
  $region23: #{critic_forward.6} parent=0 // pred_check_branch
    %1299 = sbr.rel (0) target = $region25
  $region24: #{critic_forward.6} parent=0 // pred_region
    _
  $region25: #{critic_forward.6} parent=0 // pred_fallthru
    _

// kernel: critic_forward.7
$region0: #{critic_forward.7}
  #allocation0 [shape = 'u32[]', space=smem, size = 0x4, offset = 0x4, fixed_abs, tag = 'smem constant byte address 0x4 - core index']
  #allocation1 [shape = 'u32[144,128]{1,0:T(1,128)}', space=vmem, size = 0x12000, scoped, tag = 'internal scratch']
  %s0 = inlined_call_operand.vmem [shape: bf16[128,256], index: 0, kind: input, shape index: {}]
  %s1 = inlined_call_operand.vmem [shape: bf16[256,128], index: 1, kind: input, shape index: {}]
  %s2 = inlined_call_operand.vmem [shape: f32[1,128], index: 2, kind: input, shape index: {}]
  %s3 = inlined_call_operand.vmem [shape: f32[1,128], index: 3, kind: input, shape index: {}]
  %s4 = inlined_call_operand.vmem [shape: f32[128,128], index: 4, kind: output, shape index: {}]
  %s5 = sld [smem:[#allocation0]]
  $region26: #{critic_forward.7} parent=0
    _
  %s7 = ssub.s32 1, %s5
  %s8 = scalar_select 0, %s7, %s5
  // Predicated region
  $region2: #{critic_forward.7} parent=0 // pred_check
    _
  $region3: #{critic_forward.7} parent=0 // pred_check_branch
    %10 = sbr.rel (0) target = $region5
  $region4: #{critic_forward.7} parent=0 // pred_region
    _
  $region5: #{critic_forward.7} parent=0 // pred_fallthru
    _
  // Predicated region
  $region6: #{critic_forward.7} parent=0 // pred_check
    _
  $region7: #{critic_forward.7} parent=0 // pred_check_branch
    %12 = sbr.rel (0) target = $region9
  $region8: #{critic_forward.7} parent=0 // pred_region
    _
  $region9: #{critic_forward.7} parent=0 // pred_fallthru
    _
  // Predicated region
  $region10: #{critic_forward.7} parent=0 // pred_check
    _
  $region11: #{critic_forward.7} parent=0 // pred_check_branch
    %14 = sbr.rel (0) target = $region13
  $region12: #{critic_forward.7} parent=0 // pred_region
    _
  $region13: #{critic_forward.7} parent=0 // pred_fallthru
    _
  // Predicated region
  $region14: #{critic_forward.7} parent=0 // pred_check
    _
  $region15: #{critic_forward.7} parent=0 // pred_check_branch
    %16 = sbr.rel (0) target = $region17
  $region16: #{critic_forward.7} parent=0 // pred_region
    _
  $region17: #{critic_forward.7} parent=0 // pred_fallthru
    _
  %v18 = vld [vmem:[%s0] sm:$0xff]
  %v19 = vld [vmem:[%s0 + $0x8] sm:$0xff]
  %v20 = vld [vmem:[%s0 + $0x10] sm:$0xff]
  %v21 = vld [vmem:[%s0 + $0x18] sm:$0xff]
  %v22 = vld [vmem:[%s0 + $0x20] sm:$0xff]
  %v23 = vld [vmem:[%s0 + $0x28] sm:$0xff]
  %v24 = vld [vmem:[%s0 + $0x30] sm:$0xff]
  %v25 = vld [vmem:[%s0 + $0x38] sm:$0xff]
  %v26 = vld [vmem:[%s0 + $0x40] sm:$0xff]
  %v27 = vld [vmem:[%s0 + $0x48] sm:$0xff]
  %v28 = vld [vmem:[%s0 + $0x50] sm:$0xff]
  %v29 = vld [vmem:[%s0 + $0x58] sm:$0xff]
  %v30 = vld [vmem:[%s0 + $0x60] sm:$0xff]
  %v31 = vld [vmem:[%s0 + $0x68] sm:$0xff]
  %v32 = vld [vmem:[%s0 + $0x70] sm:$0xff]
  %v33 = vld [vmem:[%s0 + $0x78] sm:$0xff]
  %v34 = vld [vmem:[%s1] sm:$0xf]
  %v35 = vld [vmem:[%s1 + $0x4] sm:$0xf]
  %v36 = vld [vmem:[%s1 + $0x8] sm:$0xf]
  %v37 = vld [vmem:[%s1 + $0xc] sm:$0xf]
  %v38 = vld [vmem:[%s1 + $0x10] sm:$0xf]
  %v39 = vld [vmem:[%s1 + $0x14] sm:$0xf]
  %v40 = vld [vmem:[%s1 + $0x18] sm:$0xf]
  %v41 = vld [vmem:[%s1 + $0x1c] sm:$0xf]
  %v42 = vld [vmem:[%s1 + $0x20] sm:$0xf]
  %v43 = vld [vmem:[%s1 + $0x24] sm:$0xf]
  %v44 = vld [vmem:[%s1 + $0x28] sm:$0xf]
  %v45 = vld [vmem:[%s1 + $0x2c] sm:$0xf]
  %v46 = vld [vmem:[%s1 + $0x30] sm:$0xf]
  %v47 = vld [vmem:[%s1 + $0x34] sm:$0xf]
  %v48 = vld [vmem:[%s1 + $0x38] sm:$0xf]
  %v49 = vld [vmem:[%s1 + $0x3c] sm:$0xf]
  %v50 = vld [vmem:[%s1 + $0x40] sm:$0xf]
  %v51 = vld [vmem:[%s1 + $0x44] sm:$0xf]
  %v52 = vld [vmem:[%s1 + $0x48] sm:$0xf]
  %v53 = vld [vmem:[%s1 + $0x4c] sm:$0xf]
  %v54 = vld [vmem:[%s1 + $0x50] sm:$0xf]
  %v55 = vld [vmem:[%s1 + $0x54] sm:$0xf]
  %v56 = vld [vmem:[%s1 + $0x58] sm:$0xf]
  %v57 = vld [vmem:[%s1 + $0x5c] sm:$0xf]
  %v58 = vld [vmem:[%s1 + $0x60] sm:$0xf]
  %v59 = vld [vmem:[%s1 + $0x64] sm:$0xf]
  %v60 = vld [vmem:[%s1 + $0x68] sm:$0xf]
  %v61 = vld [vmem:[%s1 + $0x6c] sm:$0xf]
  %v62 = vld [vmem:[%s1 + $0x70] sm:$0xf]
  %v63 = vld [vmem:[%s1 + $0x74] sm:$0xf]
  %v64 = vld [vmem:[%s1 + $0x78] sm:$0xf]
  %v65 = vld [vmem:[%s1 + $0x7c] sm:$0xf]
  %v82 = vunpack.c.l.b16 %v18
  %v83 = vunpack.c.h.b16 %v18
  %v84 = vunpack.c.l.b16 %v19
  %v85 = vunpack.c.h.b16 %v19
  %v86 = vunpack.c.l.b16 %v20
  %v87 = vunpack.c.h.b16 %v20
  %v88 = vunpack.c.l.b16 %v21
  %v89 = vunpack.c.h.b16 %v21
  %v90 = vunpack.c.l.b16 %v22
  %v91 = vunpack.c.h.b16 %v22
  %v92 = vunpack.c.l.b16 %v23
  %v93 = vunpack.c.h.b16 %v23
  %v94 = vunpack.c.l.b16 %v24
  %v95 = vunpack.c.h.b16 %v24
  %v96 = vunpack.c.l.b16 %v25
  %v97 = vunpack.c.h.b16 %v25
  %v98 = vunpack.c.l.b16 %v26
  %v99 = vunpack.c.h.b16 %v26
  %v100 = vunpack.c.l.b16 %v27
  %v101 = vunpack.c.h.b16 %v27
  %v102 = vunpack.c.l.b16 %v28
  %v103 = vunpack.c.h.b16 %v28
  %v104 = vunpack.c.l.b16 %v29
  %v105 = vunpack.c.h.b16 %v29
  %v106 = vunpack.c.l.b16 %v30
  %v107 = vunpack.c.h.b16 %v30
  %v108 = vunpack.c.l.b16 %v31
  %v109 = vunpack.c.h.b16 %v31
  %v110 = vunpack.c.l.b16 %v32
  %v111 = vunpack.c.h.b16 %v32
  %v112 = vunpack.c.l.b16 %v33
  %v113 = vunpack.c.h.b16 %v33
  %v114 = vpack.c.b16 %v84, %v82
  %v115 = vpack.c.b16 %v85, %v83
  %v116 = vpack.c.b16 %v88, %v86
  %v117 = vpack.c.b16 %v89, %v87
  %v118 = vpack.c.b16 %v92, %v90
  %v119 = vpack.c.b16 %v93, %v91
  %v120 = vpack.c.b16 %v96, %v94
  %v121 = vpack.c.b16 %v97, %v95
  %v122 = vpack.c.b16 %v100, %v98
  %v123 = vpack.c.b16 %v101, %v99
  %v124 = vpack.c.b16 %v104, %v102
  %v125 = vpack.c.b16 %v105, %v103
  %v126 = vpack.c.b16 %v108, %v106
  %v127 = vpack.c.b16 %v109, %v107
  %v128 = vpack.c.b16 %v112, %v110
  %v129 = vpack.c.b16 %v113, %v111
  %v178 = vunpack.c.l.b16 %v34
  %v179 = vunpack.c.l.b16 %v35
  %v180 = vunpack.c.l.b16 %v36
  %v181 = vunpack.c.l.b16 %v37
  %v182 = vunpack.c.l.b16 %v38
  %v183 = vunpack.c.l.b16 %v39
  %v184 = vunpack.c.l.b16 %v40
  %v185 = vunpack.c.l.b16 %v41
  %v186 = vunpack.c.l.b16 %v42
  %v187 = vunpack.c.l.b16 %v43
  %v188 = vunpack.c.l.b16 %v44
  %v189 = vunpack.c.l.b16 %v45
  %v190 = vunpack.c.l.b16 %v46
  %v191 = vunpack.c.l.b16 %v47
  %v192 = vunpack.c.l.b16 %v48
  %v193 = vunpack.c.l.b16 %v49
  %v194 = vunpack.c.l.b16 %v50
  %v195 = vunpack.c.l.b16 %v51
  %v196 = vunpack.c.l.b16 %v52
  %v197 = vunpack.c.l.b16 %v53
  %v198 = vunpack.c.l.b16 %v54
  %v199 = vunpack.c.l.b16 %v55
  %v200 = vunpack.c.l.b16 %v56
  %v201 = vunpack.c.l.b16 %v57
  %v202 = vunpack.c.l.b16 %v58
  %v203 = vunpack.c.l.b16 %v59
  %v204 = vunpack.c.l.b16 %v60
  %v205 = vunpack.c.l.b16 %v61
  %v206 = vunpack.c.l.b16 %v62
  %v207 = vunpack.c.l.b16 %v63
  %v208 = vunpack.c.l.b16 %v64
  %v209 = vunpack.c.l.b16 %v65
  %v210 = vpack.c.b16 %v179, %v178
  %v211 = vpack.c.b16 %v181, %v180
  %v212 = vpack.c.b16 %v183, %v182
  %v213 = vpack.c.b16 %v185, %v184
  %v214 = vpack.c.b16 %v187, %v186
  %v215 = vpack.c.b16 %v189, %v188
  %v216 = vpack.c.b16 %v191, %v190
  %v217 = vpack.c.b16 %v193, %v192
  %v218 = vpack.c.b16 %v195, %v194
  %v219 = vpack.c.b16 %v197, %v196
  %v220 = vpack.c.b16 %v199, %v198
  %v221 = vpack.c.b16 %v201, %v200
  %v222 = vpack.c.b16 %v203, %v202
  %v223 = vpack.c.b16 %v205, %v204
  %v224 = vpack.c.b16 %v207, %v206
  %v225 = vpack.c.b16 %v209, %v208
  %242 = vmatprep.subr.bf16.mxu0 0
  %243 = vmatpush1.bf16.msra.mxu0 %v210
  %244 = vmatprep.subr.bf16.mxu0 0
  %245 = vmatpush1.bf16.msra.mxu0 %v211
  %246 = vmatprep.subr.bf16.mxu0 0
  %247 = vmatpush1.bf16.msra.mxu0 %v212
  %248 = vmatprep.subr.bf16.mxu0 0
  %249 = vmatpush1.bf16.msra.mxu0 %v213
  %250 = vmatprep.subr.bf16.mxu0 0
  %251 = vmatpush1.bf16.msra.mxu0 %v214
  %252 = vmatprep.subr.bf16.mxu0 0
  %253 = vmatpush1.bf16.msra.mxu0 %v215
  %254 = vmatprep.subr.bf16.mxu0 0
  %255 = vmatpush1.bf16.msra.mxu0 %v216
  %256 = vmatprep.subr.bf16.mxu0 0
  %257 = vmatpush1.bf16.msra.mxu0 %v217
  %258 = vmatprep.subr.bf16.mxu0 0
  %259 = vmatpush1.bf16.msra.mxu0 %v218
  %260 = vmatprep.subr.bf16.mxu0 0
  %261 = vmatpush1.bf16.msra.mxu0 %v219
  %262 = vmatprep.subr.bf16.mxu0 0
  %263 = vmatpush1.bf16.msra.mxu0 %v220
  %264 = vmatprep.subr.bf16.mxu0 0
  %265 = vmatpush1.bf16.msra.mxu0 %v221
  %266 = vmatprep.subr.bf16.mxu0 0
  %267 = vmatpush1.bf16.msra.mxu0 %v222
  %268 = vmatprep.subr.bf16.mxu0 0
  %269 = vmatpush1.bf16.msra.mxu0 %v223
  %270 = vmatprep.subr.bf16.mxu0 0
  %271 = vmatpush1.bf16.msra.mxu0 %v224
  %272 = vmatprep.subr.bf16.mxu0 0
  %273 = vmatpush1.bf16.msra.mxu0 %v225
  %274 = vmatprep.mubr.bf16.mxu0 %v115
  %275 = vmatmul.mubr.bf16.gmra.mrb[0].mxu0 %v114
  %v276 = vpop.f32.mrb[0].mxu0
  %v277 = vadd.f32 0.0, %v276
  %v278 = vpop.f32.mrb[0].mxu0
  %v279 = vpop.f32.mrb[0].mxu0
  %v280 = vadd.f32 0.0, %v279
  %v281 = vpop.f32.mrb[0].mxu0
  %282 = vmatprep.mubr.bf16.mxu0 %v117
  %283 = vmatmul.mubr.bf16.gmra.mrb[0].mxu0 %v116
  %v284 = vpop.f32.mrb[0].mxu0
  %v285 = vadd.f32 0.0, %v284
  %v286 = vpop.f32.mrb[0].mxu0
  %v287 = vpop.f32.mrb[0].mxu0
  %v288 = vadd.f32 0.0, %v287
  %v289 = vpop.f32.mrb[0].mxu0
  %290 = vmatprep.mubr.bf16.mxu0 %v119
  %291 = vmatmul.mubr.bf16.gmra.mrb[0].mxu0 %v118
  %v292 = vpop.f32.mrb[0].mxu0
  %v293 = vadd.f32 0.0, %v292
  %v294 = vpop.f32.mrb[0].mxu0
  %v295 = vpop.f32.mrb[0].mxu0
  %v296 = vadd.f32 0.0, %v295
  %v297 = vpop.f32.mrb[0].mxu0
  %298 = vmatprep.mubr.bf16.mxu0 %v121
  %299 = vmatmul.mubr.bf16.gmra.mrb[0].mxu0 %v120
  %v300 = vpop.f32.mrb[0].mxu0
  %v301 = vadd.f32 0.0, %v300
  %v302 = vpop.f32.mrb[0].mxu0
  %v303 = vpop.f32.mrb[0].mxu0
  %v304 = vadd.f32 0.0, %v303
  %v305 = vpop.f32.mrb[0].mxu0
  %306 = vmatprep.mubr.bf16.mxu0 %v123
  %307 = vmatmul.mubr.bf16.gmra.mrb[0].mxu0 %v122
  %v308 = vpop.f32.mrb[0].mxu0
  %v309 = vadd.f32 0.0, %v308
  %v310 = vpop.f32.mrb[0].mxu0
  %v311 = vpop.f32.mrb[0].mxu0
  %v312 = vadd.f32 0.0, %v311
  %v313 = vpop.f32.mrb[0].mxu0
  %314 = vmatprep.mubr.bf16.mxu0 %v125
  %315 = vmatmul.mubr.bf16.gmra.mrb[0].mxu0 %v124
  %v316 = vpop.f32.mrb[0].mxu0
  %v317 = vadd.f32 0.0, %v316
  %v318 = vpop.f32.mrb[0].mxu0
  %v319 = vpop.f32.mrb[0].mxu0
  %v320 = vadd.f32 0.0, %v319
  %v321 = vpop.f32.mrb[0].mxu0
  %322 = vmatprep.mubr.bf16.mxu0 %v127
  %323 = vmatmul.mubr.bf16.gmra.mrb[0].mxu0 %v126
  %v324 = vpop.f32.mrb[0].mxu0
  %v325 = vadd.f32 0.0, %v324
  %v326 = vpop.f32.mrb[0].mxu0
  %v327 = vpop.f32.mrb[0].mxu0
  %v328 = vadd.f32 0.0, %v327
  %v329 = vpop.f32.mrb[0].mxu0
  %330 = vmatprep.mubr.bf16.mxu0 %v129
  %331 = vmatmul.mubr.bf16.gmra.mrb[0].mxu0 %v128
  %v332 = vpop.f32.mrb[0].mxu0
  %v333 = vadd.f32 0.0, %v332
  %v334 = vpop.f32.mrb[0].mxu0
  %v335 = vpop.f32.mrb[0].mxu0
  %v336 = vadd.f32 0.0, %v335
  %v337 = vpop.f32.mrb[0].mxu0
  %338 = vdwg.mxu0
  %v339 = vadd.f32 %v277, %v280
  %v340 = vadd.f32 %v339, %v285
  %v341 = vadd.f32 %v340, %v288
  %v342 = vadd.f32 %v341, %v293
  %v343 = vadd.f32 %v342, %v296
  %v344 = vadd.f32 %v343, %v301
  %v345 = vadd.f32 %v344, %v304
  %v346 = vadd.f32 %v345, %v309
  %v347 = vadd.f32 %v346, %v312
  %v348 = vadd.f32 %v347, %v317
  %v349 = vadd.f32 %v348, %v320
  %v350 = vadd.f32 %v349, %v325
  %v351 = vadd.f32 %v350, %v328
  %v352 = vadd.f32 %v351, %v333
  %v353 = vadd.f32 %v352, %v336
  %v354 = vrot.slane %v353, 4
  %v355 = vadd.f32 %v353, %v354
  %v356 = vrot.slane %v355, 2
  %v357 = vadd.f32 %v355, %v356
  %v358 = vrot.slane %v357, 1
  %v359 = vadd.f32 %v357, %v358
  %v360 = vmul.f32 %v359, 0.0078125
  %v361 = vsub.f32 %v277, %v360
  %v362 = vsub.f32 %v280, %v360
  %v363 = vsub.f32 %v285, %v360
  %v364 = vsub.f32 %v288, %v360
  %v365 = vsub.f32 %v293, %v360
  %v366 = vsub.f32 %v296, %v360
  %v367 = vsub.f32 %v301, %v360
  %v368 = vsub.f32 %v304, %v360
  %v369 = vsub.f32 %v309, %v360
  %v370 = vsub.f32 %v312, %v360
  %v371 = vsub.f32 %v317, %v360
  %v372 = vsub.f32 %v320, %v360
  %v373 = vsub.f32 %v325, %v360
  %v374 = vsub.f32 %v328, %v360
  %v375 = vsub.f32 %v333, %v360
  %v376 = vsub.f32 %v336, %v360
  %v377 = vmul.f32 %v361, %v361
  %v378 = vmul.f32 %v362, %v362
  %v379 = vmul.f32 %v363, %v363
  %v380 = vmul.f32 %v364, %v364
  %v381 = vmul.f32 %v365, %v365
  %v382 = vmul.f32 %v366, %v366
  %v383 = vmul.f32 %v367, %v367
  %v384 = vmul.f32 %v368, %v368
  %v385 = vmul.f32 %v369, %v369
  %v386 = vmul.f32 %v370, %v370
  %v387 = vmul.f32 %v371, %v371
  %v388 = vmul.f32 %v372, %v372
  %v389 = vmul.f32 %v373, %v373
  %v390 = vmul.f32 %v374, %v374
  %v391 = vmul.f32 %v375, %v375
  %v392 = vmul.f32 %v376, %v376
  %v393 = vadd.f32 %v377, %v378
  %v394 = vadd.f32 %v393, %v379
  %v395 = vadd.f32 %v394, %v380
  %v396 = vadd.f32 %v395, %v381
  %v397 = vadd.f32 %v396, %v382
  %v398 = vadd.f32 %v397, %v383
  %v399 = vadd.f32 %v398, %v384
  %v400 = vadd.f32 %v399, %v385
  %v401 = vadd.f32 %v400, %v386
  %v402 = vadd.f32 %v401, %v387
  %v403 = vadd.f32 %v402, %v388
  %v404 = vadd.f32 %v403, %v389
  %v405 = vadd.f32 %v404, %v390
  %v406 = vadd.f32 %v405, %v391
  %v407 = vadd.f32 %v406, %v392
  %v408 = vrot.slane %v407, 4
  %v409 = vadd.f32 %v407, %v408
  %v410 = vrot.slane %v409, 2
  %v411 = vadd.f32 %v409, %v410
  %v412 = vrot.slane %v411, 1
  %v413 = vadd.f32 %v411, %v412
  %v414 = vmul.f32 %v413, 0.0078125
  %v415 = vld [vmem:[%s2] sm:$0x1]
  %v416 = vadd.f32 %v414, 1e-05
  %v417 = vrsqrt.pop %v416
  %v418 = vmul.f32 %v415, %v417
  %v420 = vlaneseq
  %v421 = vshrl.u32 %v420, 7
  %v422 = vsub.s32 0, %v421
  %v423 = vrot.slane %v418, %v422
  %v425 = vmul.f32 %v361, %v423
  %v426 = vmul.f32 %v362, %v423
  %v427 = vmul.f32 %v363, %v423
  %v428 = vmul.f32 %v364, %v423
  %v429 = vmul.f32 %v365, %v423
  %v430 = vmul.f32 %v366, %v423
  %v431 = vmul.f32 %v367, %v423
  %v432 = vmul.f32 %v368, %v423
  %v433 = vmul.f32 %v369, %v423
  %v434 = vmul.f32 %v370, %v423
  %v435 = vmul.f32 %v371, %v423
  %v436 = vmul.f32 %v372, %v423
  %v437 = vmul.f32 %v373, %v423
  %v438 = vmul.f32 %v374, %v423
  %v439 = vmul.f32 %v375, %v423
  %v440 = vmul.f32 %v376, %v423
  %v441 = vld [vmem:[%s3] sm:$0x1]
  %v443 = vlaneseq
  %v444 = vshrl.u32 %v443, 7
  %v445 = vsub.s32 0, %v444
  %v446 = vrot.slane %v441, %v445
  %v448 = vadd.f32 %v425, %v446
  %v449 = vadd.f32 %v426, %v446
  %v450 = vadd.f32 %v427, %v446
  %v451 = vadd.f32 %v428, %v446
  %v452 = vadd.f32 %v429, %v446
  %v453 = vadd.f32 %v430, %v446
  %v454 = vadd.f32 %v431, %v446
  %v455 = vadd.f32 %v432, %v446
  %v456 = vadd.f32 %v433, %v446
  %v457 = vadd.f32 %v434, %v446
  %v458 = vadd.f32 %v435, %v446
  %v459 = vadd.f32 %v436, %v446
  %v460 = vadd.f32 %v437, %v446
  %v461 = vadd.f32 %v438, %v446
  %v462 = vadd.f32 %v439, %v446
  %v463 = vadd.f32 %v440, %v446
  %vm464 = vcmp.ge.f32.partialorder %v448, 0.0
  %vm465 = vcmp.ge.f32.partialorder %v449, 0.0
  %vm466 = vcmp.ge.f32.partialorder %v450, 0.0
  %vm467 = vcmp.ge.f32.partialorder %v451, 0.0
  %vm468 = vcmp.ge.f32.partialorder %v452, 0.0
  %vm469 = vcmp.ge.f32.partialorder %v453, 0.0
  %vm470 = vcmp.ge.f32.partialorder %v454, 0.0
  %vm471 = vcmp.ge.f32.partialorder %v455, 0.0
  %vm472 = vcmp.ge.f32.partialorder %v456, 0.0
  %vm473 = vcmp.ge.f32.partialorder %v457, 0.0
  %vm474 = vcmp.ge.f32.partialorder %v458, 0.0
  %vm475 = vcmp.ge.f32.partialorder %v459, 0.0
  %vm476 = vcmp.ge.f32.partialorder %v460, 0.0
  %vm477 = vcmp.ge.f32.partialorder %v461, 0.0
  %vm478 = vcmp.ge.f32.partialorder %v462, 0.0
  %vm479 = vcmp.ge.f32.partialorder %v463, 0.0
  %v480 = vmul.f32 %v448, 0.2
  %v481 = vmul.f32 %v449, 0.2
  %v482 = vmul.f32 %v450, 0.2
  %v483 = vmul.f32 %v451, 0.2
  %v484 = vmul.f32 %v452, 0.2
  %v485 = vmul.f32 %v453, 0.2
  %v486 = vmul.f32 %v454, 0.2
  %v487 = vmul.f32 %v455, 0.2
  %v488 = vmul.f32 %v456, 0.2
  %v489 = vmul.f32 %v457, 0.2
  %v490 = vmul.f32 %v458, 0.2
  %v491 = vmul.f32 %v459, 0.2
  %v492 = vmul.f32 %v460, 0.2
  %v493 = vmul.f32 %v461, 0.2
  %v494 = vmul.f32 %v462, 0.2
  %v495 = vmul.f32 %v463, 0.2
  %v496 = vsel %vm464, %v448, %v480
  %v497 = vsel %vm465, %v449, %v481
  %v498 = vsel %vm466, %v450, %v482
  %v499 = vsel %vm467, %v451, %v483
  %v500 = vsel %vm468, %v452, %v484
  %v501 = vsel %vm469, %v453, %v485
  %v502 = vsel %vm470, %v454, %v486
  %v503 = vsel %vm471, %v455, %v487
  %v504 = vsel %vm472, %v456, %v488
  %v505 = vsel %vm473, %v457, %v489
  %v506 = vsel %vm474, %v458, %v490
  %v507 = vsel %vm475, %v459, %v491
  %v508 = vsel %vm476, %v460, %v492
  %v509 = vsel %vm477, %v461, %v493
  %v510 = vsel %vm478, %v462, %v494
  %v511 = vsel %vm479, %v463, %v495
  %512 = vst [vmem:[%s4] sm:$0xff] %v496
  %513 = vst [vmem:[%s4 + $0x8] sm:$0xff] %v497
  %514 = vst [vmem:[%s4 + $0x10] sm:$0xff] %v498
  %515 = vst [vmem:[%s4 + $0x18] sm:$0xff] %v499
  %516 = vst [vmem:[%s4 + $0x20] sm:$0xff] %v500
  %517 = vst [vmem:[%s4 + $0x28] sm:$0xff] %v501
  %518 = vst [vmem:[%s4 + $0x30] sm:$0xff] %v502
  %519 = vst [vmem:[%s4 + $0x38] sm:$0xff] %v503
  %520 = vst [vmem:[%s4 + $0x40] sm:$0xff] %v504
  %521 = vst [vmem:[%s4 + $0x48] sm:$0xff] %v505
  %522 = vst [vmem:[%s4 + $0x50] sm:$0xff] %v506
  %523 = vst [vmem:[%s4 + $0x58] sm:$0xff] %v507
  %524 = vst [vmem:[%s4 + $0x60] sm:$0xff] %v508
  %525 = vst [vmem:[%s4 + $0x68] sm:$0xff] %v509
  %526 = vst [vmem:[%s4 + $0x70] sm:$0xff] %v510
  %527 = vst [vmem:[%s4 + $0x78] sm:$0xff] %v511
  // Predicated region
  $region18: #{critic_forward.7} parent=0 // pred_check
    _
  $region19: #{critic_forward.7} parent=0 // pred_check_branch
    %529 = sbr.rel (0) target = $region21
  $region20: #{critic_forward.7} parent=0 // pred_region
    _
  $region21: #{critic_forward.7} parent=0 // pred_fallthru
    _
  // Predicated region
  $region22: #{critic_forward.7} parent=0 // pred_check
    _
  $region23: #{critic_forward.7} parent=0 // pred_check_branch
    %531 = sbr.rel (0) target = $region25
  $region24: #{critic_forward.7} parent=0 // pred_region
    _
  $region25: #{critic_forward.7} parent=0 // pred_fallthru
    _

// kernel: critic_forward.8
$region0: #{critic_forward.8}
  #allocation0 [shape = 'u32[]', space=smem, size = 0x4, offset = 0x4, fixed_abs, tag = 'smem constant byte address 0x4 - core index']
  #allocation1 [shape = 'u32[144,128]{1,0:T(1,128)}', space=vmem, size = 0x12000, scoped, tag = 'internal scratch']
  %s0 = inlined_call_operand.vmem [shape: bf16[32,512], index: 0, kind: input, shape index: {}]
  %s1 = inlined_call_operand.vmem [shape: bf16[512,128], index: 1, kind: input, shape index: {}]
  %s2 = inlined_call_operand.vmem [shape: f32[1,128], index: 2, kind: input, shape index: {}]
  %s3 = inlined_call_operand.vmem [shape: f32[1,128], index: 3, kind: input, shape index: {}]
  %s4 = inlined_call_operand.vmem [shape: f32[32,128], index: 4, kind: output, shape index: {}]
  %s5 = sld [smem:[#allocation0]]
  $region26: #{critic_forward.8} parent=0
    _
  %s7 = ssub.s32 1, %s5
  %s8 = scalar_select 0, %s7, %s5
  // Predicated region
  $region2: #{critic_forward.8} parent=0 // pred_check
    _
  $region3: #{critic_forward.8} parent=0 // pred_check_branch
    %10 = sbr.rel (0) target = $region5
  $region4: #{critic_forward.8} parent=0 // pred_region
    _
  $region5: #{critic_forward.8} parent=0 // pred_fallthru
    _
  // Predicated region
  $region6: #{critic_forward.8} parent=0 // pred_check
    _
  $region7: #{critic_forward.8} parent=0 // pred_check_branch
    %12 = sbr.rel (0) target = $region9
  $region8: #{critic_forward.8} parent=0 // pred_region
    _
  $region9: #{critic_forward.8} parent=0 // pred_fallthru
    _
  // Predicated region
  $region10: #{critic_forward.8} parent=0 // pred_check
    _
  $region11: #{critic_forward.8} parent=0 // pred_check_branch
    %14 = sbr.rel (0) target = $region13
  $region12: #{critic_forward.8} parent=0 // pred_region
    _
  $region13: #{critic_forward.8} parent=0 // pred_fallthru
    _
  // Predicated region
  $region14: #{critic_forward.8} parent=0 // pred_check
    _
  $region15: #{critic_forward.8} parent=0 // pred_check_branch
    %16 = sbr.rel (0) target = $region17
  $region16: #{critic_forward.8} parent=0 // pred_region
    _
  $region17: #{critic_forward.8} parent=0 // pred_fallthru
    _
  %v18 = vld [vmem:[%s0] sm:$0xff]
  %v19 = vld [vmem:[%s0 + $0x8] sm:$0xff]
  %v20 = vld [vmem:[%s0 + $0x10] sm:$0xff]
  %v21 = vld [vmem:[%s0 + $0x18] sm:$0xff]
  %v22 = vld [vmem:[%s0 + $0x20] sm:$0xff]
  %v23 = vld [vmem:[%s0 + $0x28] sm:$0xff]
  %v24 = vld [vmem:[%s0 + $0x30] sm:$0xff]
  %v25 = vld [vmem:[%s0 + $0x38] sm:$0xff]
  %v26 = vld [vmem:[%s1] sm:$0xf]
  %v27 = vld [vmem:[%s1 + $0x4] sm:$0xf]
  %v28 = vld [vmem:[%s1 + $0x8] sm:$0xf]
  %v29 = vld [vmem:[%s1 + $0xc] sm:$0xf]
  %v30 = vld [vmem:[%s1 + $0x10] sm:$0xf]
  %v31 = vld [vmem:[%s1 + $0x14] sm:$0xf]
  %v32 = vld [vmem:[%s1 + $0x18] sm:$0xf]
  %v33 = vld [vmem:[%s1 + $0x1c] sm:$0xf]
  %v34 = vld [vmem:[%s1 + $0x20] sm:$0xf]
  %v35 = vld [vmem:[%s1 + $0x24] sm:$0xf]
  %v36 = vld [vmem:[%s1 + $0x28] sm:$0xf]
  %v37 = vld [vmem:[%s1 + $0x2c] sm:$0xf]
  %v38 = vld [vmem:[%s1 + $0x30] sm:$0xf]
  %v39 = vld [vmem:[%s1 + $0x34] sm:$0xf]
  %v40 = vld [vmem:[%s1 + $0x38] sm:$0xf]
  %v41 = vld [vmem:[%s1 + $0x3c] sm:$0xf]
  %v42 = vld [vmem:[%s1 + $0x40] sm:$0xf]
  %v43 = vld [vmem:[%s1 + $0x44] sm:$0xf]
  %v44 = vld [vmem:[%s1 + $0x48] sm:$0xf]
  %v45 = vld [vmem:[%s1 + $0x4c] sm:$0xf]
  %v46 = vld [vmem:[%s1 + $0x50] sm:$0xf]
  %v47 = vld [vmem:[%s1 + $0x54] sm:$0xf]
  %v48 = vld [vmem:[%s1 + $0x58] sm:$0xf]
  %v49 = vld [vmem:[%s1 + $0x5c] sm:$0xf]
  %v50 = vld [vmem:[%s1 + $0x60] sm:$0xf]
  %v51 = vld [vmem:[%s1 + $0x64] sm:$0xf]
  %v52 = vld [vmem:[%s1 + $0x68] sm:$0xf]
  %v53 = vld [vmem:[%s1 + $0x6c] sm:$0xf]
  %v54 = vld [vmem:[%s1 + $0x70] sm:$0xf]
  %v55 = vld [vmem:[%s1 + $0x74] sm:$0xf]
  %v56 = vld [vmem:[%s1 + $0x78] sm:$0xf]
  %v57 = vld [vmem:[%s1 + $0x7c] sm:$0xf]
  %v58 = vld [vmem:[%s1 + $0x80] sm:$0xf]
  %v59 = vld [vmem:[%s1 + $0x84] sm:$0xf]
  %v60 = vld [vmem:[%s1 + $0x88] sm:$0xf]
  %v61 = vld [vmem:[%s1 + $0x8c] sm:$0xf]
  %v62 = vld [vmem:[%s1 + $0x90] sm:$0xf]
  %v63 = vld [vmem:[%s1 + $0x94] sm:$0xf]
  %v64 = vld [vmem:[%s1 + $0x98] sm:$0xf]
  %v65 = vld [vmem:[%s1 + $0x9c] sm:$0xf]
  %v66 = vld [vmem:[%s1 + $0xa0] sm:$0xf]
  %v67 = vld [vmem:[%s1 + $0xa4] sm:$0xf]
  %v68 = vld [vmem:[%s1 + $0xa8] sm:$0xf]
  %v69 = vld [vmem:[%s1 + $0xac] sm:$0xf]
  %v70 = vld [vmem:[%s1 + $0xb0] sm:$0xf]
  %v71 = vld [vmem:[%s1 + $0xb4] sm:$0xf]
  %v72 = vld [vmem:[%s1 + $0xb8] sm:$0xf]
  %v73 = vld [vmem:[%s1 + $0xbc] sm:$0xf]
  %v74 = vld [vmem:[%s1 + $0xc0] sm:$0xf]
  %v75 = vld [vmem:[%s1 + $0xc4] sm:$0xf]
  %v76 = vld [vmem:[%s1 + $0xc8] sm:$0xf]
  %v77 = vld [vmem:[%s1 + $0xcc] sm:$0xf]
  %v78 = vld [vmem:[%s1 + $0xd0] sm:$0xf]
  %v79 = vld [vmem:[%s1 + $0xd4] sm:$0xf]
  %v80 = vld [vmem:[%s1 + $0xd8] sm:$0xf]
  %v81 = vld [vmem:[%s1 + $0xdc] sm:$0xf]
  %v82 = vld [vmem:[%s1 + $0xe0] sm:$0xf]
  %v83 = vld [vmem:[%s1 + $0xe4] sm:$0xf]
  %v84 = vld [vmem:[%s1 + $0xe8] sm:$0xf]
  %v85 = vld [vmem:[%s1 + $0xec] sm:$0xf]
  %v86 = vld [vmem:[%s1 + $0xf0] sm:$0xf]
  %v87 = vld [vmem:[%s1 + $0xf4] sm:$0xf]
  %v88 = vld [vmem:[%s1 + $0xf8] sm:$0xf]
  %v89 = vld [vmem:[%s1 + $0xfc] sm:$0xf]
  %v98 = vunpack.c.l.b16 %v18
  %v99 = vunpack.c.h.b16 %v18
  %v100 = vunpack.c.l.b16 %v19
  %v101 = vunpack.c.h.b16 %v19
  %v102 = vunpack.c.l.b16 %v20
  %v103 = vunpack.c.h.b16 %v20
  %v104 = vunpack.c.l.b16 %v21
  %v105 = vunpack.c.h.b16 %v21
  %v106 = vunpack.c.l.b16 %v22
  %v107 = vunpack.c.h.b16 %v22
  %v108 = vunpack.c.l.b16 %v23
  %v109 = vunpack.c.h.b16 %v23
  %v110 = vunpack.c.l.b16 %v24
  %v111 = vunpack.c.h.b16 %v24
  %v112 = vunpack.c.l.b16 %v25
  %v113 = vunpack.c.h.b16 %v25
  %v114 = vpack.c.b16 %v102, %v98
  %v115 = vpack.c.b16 %v103, %v99
  %v116 = vpack.c.b16 %v104, %v100
  %v117 = vpack.c.b16 %v105, %v101
  %v118 = vpack.c.b16 %v110, %v106
  %v119 = vpack.c.b16 %v111, %v107
  %v120 = vpack.c.b16 %v112, %v108
  %v121 = vpack.c.b16 %v113, %v109
  %v194 = vunpack.c.l.b16 %v26
  %v195 = vunpack.c.l.b16 %v27
  %v196 = vunpack.c.l.b16 %v28
  %v197 = vunpack.c.l.b16 %v29
  %v198 = vunpack.c.l.b16 %v30
  %v199 = vunpack.c.l.b16 %v31
  %v200 = vunpack.c.l.b16 %v32
  %v201 = vunpack.c.l.b16 %v33
  %v202 = vunpack.c.l.b16 %v34
  %v203 = vunpack.c.l.b16 %v35
  %v204 = vunpack.c.l.b16 %v36
  %v205 = vunpack.c.l.b16 %v37
  %v206 = vunpack.c.l.b16 %v38
  %v207 = vunpack.c.l.b16 %v39
  %v208 = vunpack.c.l.b16 %v40
  %v209 = vunpack.c.l.b16 %v41
  %v210 = vunpack.c.l.b16 %v42
  %v211 = vunpack.c.l.b16 %v43
  %v212 = vunpack.c.l.b16 %v44
  %v213 = vunpack.c.l.b16 %v45
  %v214 = vunpack.c.l.b16 %v46
  %v215 = vunpack.c.l.b16 %v47
  %v216 = vunpack.c.l.b16 %v48
  %v217 = vunpack.c.l.b16 %v49
  %v218 = vunpack.c.l.b16 %v50
  %v219 = vunpack.c.l.b16 %v51
  %v220 = vunpack.c.l.b16 %v52
  %v221 = vunpack.c.l.b16 %v53
  %v222 = vunpack.c.l.b16 %v54
  %v223 = vunpack.c.l.b16 %v55
  %v224 = vunpack.c.l.b16 %v56
  %v225 = vunpack.c.l.b16 %v57
  %v226 = vunpack.c.l.b16 %v58
  %v227 = vunpack.c.l.b16 %v59
  %v228 = vunpack.c.l.b16 %v60
  %v229 = vunpack.c.l.b16 %v61
  %v230 = vunpack.c.l.b16 %v62
  %v231 = vunpack.c.l.b16 %v63
  %v232 = vunpack.c.l.b16 %v64
  %v233 = vunpack.c.l.b16 %v65
  %v234 = vunpack.c.l.b16 %v66
  %v235 = vunpack.c.l.b16 %v67
  %v236 = vunpack.c.l.b16 %v68
  %v237 = vunpack.c.l.b16 %v69
  %v238 = vunpack.c.l.b16 %v70
  %v239 = vunpack.c.l.b16 %v71
  %v240 = vunpack.c.l.b16 %v72
  %v241 = vunpack.c.l.b16 %v73
  %v242 = vunpack.c.l.b16 %v74
  %v243 = vunpack.c.l.b16 %v75
  %v244 = vunpack.c.l.b16 %v76
  %v245 = vunpack.c.l.b16 %v77
  %v246 = vunpack.c.l.b16 %v78
  %v247 = vunpack.c.l.b16 %v79
  %v248 = vunpack.c.l.b16 %v80
  %v249 = vunpack.c.l.b16 %v81
  %v250 = vunpack.c.l.b16 %v82
  %v251 = vunpack.c.l.b16 %v83
  %v252 = vunpack.c.l.b16 %v84
  %v253 = vunpack.c.l.b16 %v85
  %v254 = vunpack.c.l.b16 %v86
  %v255 = vunpack.c.l.b16 %v87
  %v256 = vunpack.c.l.b16 %v88
  %v257 = vunpack.c.l.b16 %v89
  %v258 = vpack.c.b16 %v195, %v194
  %v259 = vpack.c.b16 %v197, %v196
  %v260 = vpack.c.b16 %v199, %v198
  %v261 = vpack.c.b16 %v201, %v200
  %v262 = vpack.c.b16 %v203, %v202
  %v263 = vpack.c.b16 %v205, %v204
  %v264 = vpack.c.b16 %v207, %v206
  %v265 = vpack.c.b16 %v209, %v208
  %v266 = vpack.c.b16 %v211, %v210
  %v267 = vpack.c.b16 %v213, %v212
  %v268 = vpack.c.b16 %v215, %v214
  %v269 = vpack.c.b16 %v217, %v216
  %v270 = vpack.c.b16 %v219, %v218
  %v271 = vpack.c.b16 %v221, %v220
  %v272 = vpack.c.b16 %v223, %v222
  %v273 = vpack.c.b16 %v225, %v224
  %v274 = vpack.c.b16 %v227, %v226
  %v275 = vpack.c.b16 %v229, %v228
  %v276 = vpack.c.b16 %v231, %v230
  %v277 = vpack.c.b16 %v233, %v232
  %v278 = vpack.c.b16 %v235, %v234
  %v279 = vpack.c.b16 %v237, %v236
  %v280 = vpack.c.b16 %v239, %v238
  %v281 = vpack.c.b16 %v241, %v240
  %v282 = vpack.c.b16 %v243, %v242
  %v283 = vpack.c.b16 %v245, %v244
  %v284 = vpack.c.b16 %v247, %v246
  %v285 = vpack.c.b16 %v249, %v248
  %v286 = vpack.c.b16 %v251, %v250
  %v287 = vpack.c.b16 %v253, %v252
  %v288 = vpack.c.b16 %v255, %v254
  %v289 = vpack.c.b16 %v257, %v256
  %322 = vmatprep.subr.bf16.mxu0 0
  %323 = vmatpush1.bf16.msra.mxu0 %v258
  %324 = vmatprep.subr.bf16.mxu0 0
  %325 = vmatpush1.bf16.msra.mxu0 %v259
  %326 = vmatprep.subr.bf16.mxu0 0
  %327 = vmatpush1.bf16.msra.mxu0 %v260
  %328 = vmatprep.subr.bf16.mxu0 0
  %329 = vmatpush1.bf16.msra.mxu0 %v261
  %330 = vmatprep.subr.bf16.mxu0 0
  %331 = vmatpush1.bf16.msra.mxu0 %v262
  %332 = vmatprep.subr.bf16.mxu0 0
  %333 = vmatpush1.bf16.msra.mxu0 %v263
  %334 = vmatprep.subr.bf16.mxu0 0
  %335 = vmatpush1.bf16.msra.mxu0 %v264
  %336 = vmatprep.subr.bf16.mxu0 0
  %337 = vmatpush1.bf16.msra.mxu0 %v265
  %338 = vmatprep.subr.bf16.mxu0 0
  %339 = vmatpush1.bf16.msra.mxu0 %v266
  %340 = vmatprep.subr.bf16.mxu0 0
  %341 = vmatpush1.bf16.msra.mxu0 %v267
  %342 = vmatprep.subr.bf16.mxu0 0
  %343 = vmatpush1.bf16.msra.mxu0 %v268
  %344 = vmatprep.subr.bf16.mxu0 0
  %345 = vmatpush1.bf16.msra.mxu0 %v269
  %346 = vmatprep.subr.bf16.mxu0 0
  %347 = vmatpush1.bf16.msra.mxu0 %v270
  %348 = vmatprep.subr.bf16.mxu0 0
  %349 = vmatpush1.bf16.msra.mxu0 %v271
  %350 = vmatprep.subr.bf16.mxu0 0
  %351 = vmatpush1.bf16.msra.mxu0 %v272
  %352 = vmatprep.subr.bf16.mxu0 0
  %353 = vmatpush1.bf16.msra.mxu0 %v273
  %354 = vmatprep.mubr.bf16.mxu0 %v115
  %355 = vmatmul.mubr.bf16.gmra.mrb[0].mxu0 %v114
  %v356 = vpop.f32.mrb[0].mxu0
  %v357 = vadd.f32 0.0, %v356
  %v358 = vpop.f32.mrb[0].mxu0
  %v359 = vpop.f32.mrb[0].mxu0
  %v360 = vadd.f32 0.0, %v359
  %v361 = vpop.f32.mrb[0].mxu0
  %362 = vmatprep.mubr.bf16.mxu0 %v119
  %363 = vmatmul.mubr.bf16.gmra.mrb[0].mxu0 %v118
  %v364 = vpop.f32.mrb[0].mxu0
  %v365 = vadd.f32 0.0, %v364
  %v366 = vpop.f32.mrb[0].mxu0
  %v367 = vpop.f32.mrb[0].mxu0
  %v368 = vadd.f32 0.0, %v367
  %v369 = vpop.f32.mrb[0].mxu0
  %370 = vdwg.mxu0
  %371 = vmatprep.subr.bf16.mxu0 0
  %372 = vmatpush1.bf16.msra.mxu0 %v274
  %373 = vmatprep.subr.bf16.mxu0 0
  %374 = vmatpush1.bf16.msra.mxu0 %v275
  %375 = vmatprep.subr.bf16.mxu0 0
  %376 = vmatpush1.bf16.msra.mxu0 %v276
  %377 = vmatprep.subr.bf16.mxu0 0
  %378 = vmatpush1.bf16.msra.mxu0 %v277
  %379 = vmatprep.subr.bf16.mxu0 0
  %380 = vmatpush1.bf16.msra.mxu0 %v278
  %381 = vmatprep.subr.bf16.mxu0 0
  %382 = vmatpush1.bf16.msra.mxu0 %v279
  %383 = vmatprep.subr.bf16.mxu0 0
  %384 = vmatpush1.bf16.msra.mxu0 %v280
  %385 = vmatprep.subr.bf16.mxu0 0
  %386 = vmatpush1.bf16.msra.mxu0 %v281
  %387 = vmatprep.subr.bf16.mxu0 0
  %388 = vmatpush1.bf16.msra.mxu0 %v282
  %389 = vmatprep.subr.bf16.mxu0 0
  %390 = vmatpush1.bf16.msra.mxu0 %v283
  %391 = vmatprep.subr.bf16.mxu0 0
  %392 = vmatpush1.bf16.msra.mxu0 %v284
  %393 = vmatprep.subr.bf16.mxu0 0
  %394 = vmatpush1.bf16.msra.mxu0 %v285
  %395 = vmatprep.subr.bf16.mxu0 0
  %396 = vmatpush1.bf16.msra.mxu0 %v286
  %397 = vmatprep.subr.bf16.mxu0 0
  %398 = vmatpush1.bf16.msra.mxu0 %v287
  %399 = vmatprep.subr.bf16.mxu0 0
  %400 = vmatpush1.bf16.msra.mxu0 %v288
  %401 = vmatprep.subr.bf16.mxu0 0
  %402 = vmatpush1.bf16.msra.mxu0 %v289
  %403 = vmatprep.mubr.bf16.mxu0 %v117
  %404 = vmatmul.mubr.bf16.gmra.mrb[0].mxu0 %v116
  %v405 = vpop.f32.mrb[0].mxu0
  %v406 = vadd.f32 %v357, %v405
  %v407 = vpop.f32.mrb[0].mxu0
  %v408 = vpop.f32.mrb[0].mxu0
  %v409 = vadd.f32 %v360, %v408
  %v410 = vpop.f32.mrb[0].mxu0
  %411 = vmatprep.mubr.bf16.mxu0 %v121
  %412 = vmatmul.mubr.bf16.gmra.mrb[0].mxu0 %v120
  %v413 = vpop.f32.mrb[0].mxu0
  %v414 = vadd.f32 %v365, %v413
  %v415 = vpop.f32.mrb[0].mxu0
  %v416 = vpop.f32.mrb[0].mxu0
  %v417 = vadd.f32 %v368, %v416
  %v418 = vpop.f32.mrb[0].mxu0
  %419 = vdwg.mxu0
  %v420 = vadd.f32 %v406, %v409
  %v421 = vadd.f32 %v420, %v414
  %v422 = vadd.f32 %v421, %v417
  %v423 = vrot.slane %v422, 4
  %v424 = vadd.f32 %v422, %v423
  %v425 = vrot.slane %v424, 2
  %v426 = vadd.f32 %v424, %v425
  %v427 = vrot.slane %v426, 1
  %v428 = vadd.f32 %v426, %v427
  %v429 = vmul.f32 %v428, 0.03125
  %v430 = vsub.f32 %v406, %v429
  %v431 = vsub.f32 %v409, %v429
  %v432 = vsub.f32 %v414, %v429
  %v433 = vsub.f32 %v417, %v429
  %v434 = vmul.f32 %v430, %v430
  %v435 = vmul.f32 %v431, %v431
  %v436 = vmul.f32 %v432, %v432
  %v437 = vmul.f32 %v433, %v433
  %v438 = vadd.f32 %v434, %v435
  %v439 = vadd.f32 %v438, %v436
  %v440 = vadd.f32 %v439, %v437
  %v441 = vrot.slane %v440, 4
  %v442 = vadd.f32 %v440, %v441
  %v443 = vrot.slane %v442, 2
  %v444 = vadd.f32 %v442, %v443
  %v445 = vrot.slane %v444, 1
  %v446 = vadd.f32 %v444, %v445
  %v447 = vmul.f32 %v446, 0.03125
  %v448 = vld [vmem:[%s2] sm:$0x1]
  %v449 = vadd.f32 %v447, 1e-05
  %v450 = vrsqrt.pop %v449
  %v451 = vmul.f32 %v448, %v450
  %v453 = vlaneseq
  %v454 = vshrl.u32 %v453, 7
  %v455 = vsub.s32 0, %v454
  %v456 = vrot.slane %v451, %v455
  %v458 = vmul.f32 %v430, %v456
  %v459 = vmul.f32 %v431, %v456
  %v460 = vmul.f32 %v432, %v456
  %v461 = vmul.f32 %v433, %v456
  %v462 = vld [vmem:[%s3] sm:$0x1]
  %v464 = vlaneseq
  %v465 = vshrl.u32 %v464, 7
  %v466 = vsub.s32 0, %v465
  %v467 = vrot.slane %v462, %v466
  %v469 = vadd.f32 %v458, %v467
  %v470 = vadd.f32 %v459, %v467
  %v471 = vadd.f32 %v460, %v467
  %v472 = vadd.f32 %v461, %v467
  %vm473 = vcmp.ge.f32.partialorder %v469, 0.0
  %vm474 = vcmp.ge.f32.partialorder %v470, 0.0
  %vm475 = vcmp.ge.f32.partialorder %v471, 0.0
  %vm476 = vcmp.ge.f32.partialorder %v472, 0.0
  %v477 = vmul.f32 %v469, 0.2
  %v478 = vmul.f32 %v470, 0.2
  %v479 = vmul.f32 %v471, 0.2
  %v480 = vmul.f32 %v472, 0.2
  %v481 = vsel %vm473, %v469, %v477
  %v482 = vsel %vm474, %v470, %v478
  %v483 = vsel %vm475, %v471, %v479
  %v484 = vsel %vm476, %v472, %v480
  %485 = vst [vmem:[%s4] sm:$0xff] %v481
  %486 = vst [vmem:[%s4 + $0x8] sm:$0xff] %v482
  %487 = vst [vmem:[%s4 + $0x10] sm:$0xff] %v483
  %488 = vst [vmem:[%s4 + $0x18] sm:$0xff] %v484
  // Predicated region
  $region18: #{critic_forward.8} parent=0 // pred_check
    _
  $region19: #{critic_forward.8} parent=0 // pred_check_branch
    %490 = sbr.rel (0) target = $region21
  $region20: #{critic_forward.8} parent=0 // pred_region
    _
  $region21: #{critic_forward.8} parent=0 // pred_fallthru
    _
  // Predicated region
  $region22: #{critic_forward.8} parent=0 // pred_check
    _
  $region23: #{critic_forward.8} parent=0 // pred_check_branch
    %492 = sbr.rel (0) target = $region25
  $region24: #{critic_forward.8} parent=0 // pred_region
    _
  $region25: #{critic_forward.8} parent=0 // pred_fallthru
    _

// kernel: critic_forward.9
$region0: #{critic_forward.9}
  #allocation0 [shape = 'u32[]', space=smem, size = 0x4, offset = 0x4, fixed_abs, tag = 'smem constant byte address 0x4 - core index']
  #allocation1 [shape = 'u32[144,128]{1,0:T(1,128)}', space=vmem, size = 0x12000, scoped, tag = 'internal scratch']
  %s0 = inlined_call_operand.vmem [shape: bf16[2,1024], index: 0, kind: input, shape index: {}]
  %s1 = inlined_call_operand.vmem [shape: bf16[1024,128], index: 1, kind: input, shape index: {}]
  %s2 = inlined_call_operand.vmem [shape: f32[1,128], index: 2, kind: input, shape index: {}]
  %s3 = inlined_call_operand.vmem [shape: f32[1,128], index: 3, kind: input, shape index: {}]
  %s4 = inlined_call_operand.vmem [shape: f32[2,128], index: 4, kind: output, shape index: {}]
  %s5 = sld [smem:[#allocation0]]
  $region26: #{critic_forward.9} parent=0
    _
  %s7 = ssub.s32 1, %s5
  %s8 = scalar_select 0, %s7, %s5
  // Predicated region
  $region2: #{critic_forward.9} parent=0 // pred_check
    _
  $region3: #{critic_forward.9} parent=0 // pred_check_branch
    %10 = sbr.rel (0) target = $region5
  $region4: #{critic_forward.9} parent=0 // pred_region
    _
  $region5: #{critic_forward.9} parent=0 // pred_fallthru
    _
  // Predicated region
  $region6: #{critic_forward.9} parent=0 // pred_check
    _
  $region7: #{critic_forward.9} parent=0 // pred_check_branch
    %12 = sbr.rel (0) target = $region9
  $region8: #{critic_forward.9} parent=0 // pred_region
    _
  $region9: #{critic_forward.9} parent=0 // pred_fallthru
    _
  // Predicated region
  $region10: #{critic_forward.9} parent=0 // pred_check
    _
  $region11: #{critic_forward.9} parent=0 // pred_check_branch
    %14 = sbr.rel (0) target = $region13
  $region12: #{critic_forward.9} parent=0 // pred_region
    _
  $region13: #{critic_forward.9} parent=0 // pred_fallthru
    _
  // Predicated region
  $region14: #{critic_forward.9} parent=0 // pred_check
    _
  $region15: #{critic_forward.9} parent=0 // pred_check_branch
    %16 = sbr.rel (0) target = $region17
  $region16: #{critic_forward.9} parent=0 // pred_region
    _
  $region17: #{critic_forward.9} parent=0 // pred_fallthru
    _
  %v18 = vld [vmem:[%s0] sm:$0xff]
  %v19 = vld [vmem:[%s1] sm:$0xf]
  %v20 = vld [vmem:[%s1 + $0x4] sm:$0xf]
  %v21 = vld [vmem:[%s1 + $0x8] sm:$0xf]
  %v22 = vld [vmem:[%s1 + $0xc] sm:$0xf]
  %v23 = vld [vmem:[%s1 + $0x10] sm:$0xf]
  %v24 = vld [vmem:[%s1 + $0x14] sm:$0xf]
  %v25 = vld [vmem:[%s1 + $0x18] sm:$0xf]
  %v26 = vld [vmem:[%s1 + $0x1c] sm:$0xf]
  %v27 = vld [vmem:[%s1 + $0x20] sm:$0xf]
  %v28 = vld [vmem:[%s1 + $0x24] sm:$0xf]
  %v29 = vld [vmem:[%s1 + $0x28] sm:$0xf]
  %v30 = vld [vmem:[%s1 + $0x2c] sm:$0xf]
  %v31 = vld [vmem:[%s1 + $0x30] sm:$0xf]
  %v32 = vld [vmem:[%s1 + $0x34] sm:$0xf]
  %v33 = vld [vmem:[%s1 + $0x38] sm:$0xf]
  %v34 = vld [vmem:[%s1 + $0x3c] sm:$0xf]
  %v35 = vld [vmem:[%s1 + $0x40] sm:$0xf]
  %v36 = vld [vmem:[%s1 + $0x44] sm:$0xf]
  %v37 = vld [vmem:[%s1 + $0x48] sm:$0xf]
  %v38 = vld [vmem:[%s1 + $0x4c] sm:$0xf]
  %v39 = vld [vmem:[%s1 + $0x50] sm:$0xf]
  %v40 = vld [vmem:[%s1 + $0x54] sm:$0xf]
  %v41 = vld [vmem:[%s1 + $0x58] sm:$0xf]
  %v42 = vld [vmem:[%s1 + $0x5c] sm:$0xf]
  %v43 = vld [vmem:[%s1 + $0x60] sm:$0xf]
  %v44 = vld [vmem:[%s1 + $0x64] sm:$0xf]
  %v45 = vld [vmem:[%s1 + $0x68] sm:$0xf]
  %v46 = vld [vmem:[%s1 + $0x6c] sm:$0xf]
  %v47 = vld [vmem:[%s1 + $0x70] sm:$0xf]
  %v48 = vld [vmem:[%s1 + $0x74] sm:$0xf]
  %v49 = vld [vmem:[%s1 + $0x78] sm:$0xf]
  %v50 = vld [vmem:[%s1 + $0x7c] sm:$0xf]
  %v51 = vld [vmem:[%s1 + $0x80] sm:$0xf]
  %v52 = vld [vmem:[%s1 + $0x84] sm:$0xf]
  %v53 = vld [vmem:[%s1 + $0x88] sm:$0xf]
  %v54 = vld [vmem:[%s1 + $0x8c] sm:$0xf]
  %v55 = vld [vmem:[%s1 + $0x90] sm:$0xf]
  %v56 = vld [vmem:[%s1 + $0x94] sm:$0xf]
  %v57 = vld [vmem:[%s1 + $0x98] sm:$0xf]
  %v58 = vld [vmem:[%s1 + $0x9c] sm:$0xf]
  %v59 = vld [vmem:[%s1 + $0xa0] sm:$0xf]
  %v60 = vld [vmem:[%s1 + $0xa4] sm:$0xf]
  %v61 = vld [vmem:[%s1 + $0xa8] sm:$0xf]
  %v62 = vld [vmem:[%s1 + $0xac] sm:$0xf]
  %v63 = vld [vmem:[%s1 + $0xb0] sm:$0xf]
  %v64 = vld [vmem:[%s1 + $0xb4] sm:$0xf]
  %v65 = vld [vmem:[%s1 + $0xb8] sm:$0xf]
  %v66 = vld [vmem:[%s1 + $0xbc] sm:$0xf]
  %v67 = vld [vmem:[%s1 + $0xc0] sm:$0xf]
  %v68 = vld [vmem:[%s1 + $0xc4] sm:$0xf]
  %v69 = vld [vmem:[%s1 + $0xc8] sm:$0xf]
  %v70 = vld [vmem:[%s1 + $0xcc] sm:$0xf]
  %v71 = vld [vmem:[%s1 + $0xd0] sm:$0xf]
  %v72 = vld [vmem:[%s1 + $0xd4] sm:$0xf]
  %v73 = vld [vmem:[%s1 + $0xd8] sm:$0xf]
  %v74 = vld [vmem:[%s1 + $0xdc] sm:$0xf]
  %v75 = vld [vmem:[%s1 + $0xe0] sm:$0xf]
  %v76 = vld [vmem:[%s1 + $0xe4] sm:$0xf]
  %v77 = vld [vmem:[%s1 + $0xe8] sm:$0xf]
  %v78 = vld [vmem:[%s1 + $0xec] sm:$0xf]
  %v79 = vld [vmem:[%s1 + $0xf0] sm:$0xf]
  %v80 = vld [vmem:[%s1 + $0xf4] sm:$0xf]
  %v81 = vld [vmem:[%s1 + $0xf8] sm:$0xf]
  %v82 = vld [vmem:[%s1 + $0xfc] sm:$0xf]
  %v83 = vld [vmem:[%s1 + $0x100] sm:$0xf]
  %v84 = vld [vmem:[%s1 + $0x104] sm:$0xf]
  %v85 = vld [vmem:[%s1 + $0x108] sm:$0xf]
  %v86 = vld [vmem:[%s1 + $0x10c] sm:$0xf]
  %v87 = vld [vmem:[%s1 + $0x110] sm:$0xf]
  %v88 = vld [vmem:[%s1 + $0x114] sm:$0xf]
  %v89 = vld [vmem:[%s1 + $0x118] sm:$0xf]
  %v90 = vld [vmem:[%s1 + $0x11c] sm:$0xf]
  %v91 = vld [vmem:[%s1 + $0x120] sm:$0xf]
  %v92 = vld [vmem:[%s1 + $0x124] sm:$0xf]
  %v93 = vld [vmem:[%s1 + $0x128] sm:$0xf]
  %v94 = vld [vmem:[%s1 + $0x12c] sm:$0xf]
  %v95 = vld [vmem:[%s1 + $0x130] sm:$0xf]
  %v96 = vld [vmem:[%s1 + $0x134] sm:$0xf]
  %v97 = vld [vmem:[%s1 + $0x138] sm:$0xf]
  %v98 = vld [vmem:[%s1 + $0x13c] sm:$0xf]
  %v99 = vld [vmem:[%s1 + $0x140] sm:$0xf]
  %v100 = vld [vmem:[%s1 + $0x144] sm:$0xf]
  %v101 = vld [vmem:[%s1 + $0x148] sm:$0xf]
  %v102 = vld [vmem:[%s1 + $0x14c] sm:$0xf]
  %v103 = vld [vmem:[%s1 + $0x150] sm:$0xf]
  %v104 = vld [vmem:[%s1 + $0x154] sm:$0xf]
  %v105 = vld [vmem:[%s1 + $0x158] sm:$0xf]
  %v106 = vld [vmem:[%s1 + $0x15c] sm:$0xf]
  %v107 = vld [vmem:[%s1 + $0x160] sm:$0xf]
  %v108 = vld [vmem:[%s1 + $0x164] sm:$0xf]
  %v109 = vld [vmem:[%s1 + $0x168] sm:$0xf]
  %v110 = vld [vmem:[%s1 + $0x16c] sm:$0xf]
  %v111 = vld [vmem:[%s1 + $0x170] sm:$0xf]
  %v112 = vld [vmem:[%s1 + $0x174] sm:$0xf]
  %v113 = vld [vmem:[%s1 + $0x178] sm:$0xf]
  %v114 = vld [vmem:[%s1 + $0x17c] sm:$0xf]
  %v115 = vld [vmem:[%s1 + $0x180] sm:$0xf]
  %v116 = vld [vmem:[%s1 + $0x184] sm:$0xf]
  %v117 = vld [vmem:[%s1 + $0x188] sm:$0xf]
  %v118 = vld [vmem:[%s1 + $0x18c] sm:$0xf]
  %v119 = vld [vmem:[%s1 + $0x190] sm:$0xf]
  %v120 = vld [vmem:[%s1 + $0x194] sm:$0xf]
  %v121 = vld [vmem:[%s1 + $0x198] sm:$0xf]
  %v122 = vld [vmem:[%s1 + $0x19c] sm:$0xf]
  %v123 = vld [vmem:[%s1 + $0x1a0] sm:$0xf]
  %v124 = vld [vmem:[%s1 + $0x1a4] sm:$0xf]
  %v125 = vld [vmem:[%s1 + $0x1a8] sm:$0xf]
  %v126 = vld [vmem:[%s1 + $0x1ac] sm:$0xf]
  %v127 = vld [vmem:[%s1 + $0x1b0] sm:$0xf]
  %v128 = vld [vmem:[%s1 + $0x1b4] sm:$0xf]
  %v129 = vld [vmem:[%s1 + $0x1b8] sm:$0xf]
  %v130 = vld [vmem:[%s1 + $0x1bc] sm:$0xf]
  %v131 = vld [vmem:[%s1 + $0x1c0] sm:$0xf]
  %v132 = vld [vmem:[%s1 + $0x1c4] sm:$0xf]
  %v133 = vld [vmem:[%s1 + $0x1c8] sm:$0xf]
  %v134 = vld [vmem:[%s1 + $0x1cc] sm:$0xf]
  %v135 = vld [vmem:[%s1 + $0x1d0] sm:$0xf]
  %v136 = vld [vmem:[%s1 + $0x1d4] sm:$0xf]
  %v137 = vld [vmem:[%s1 + $0x1d8] sm:$0xf]
  %v138 = vld [vmem:[%s1 + $0x1dc] sm:$0xf]
  %v139 = vld [vmem:[%s1 + $0x1e0] sm:$0xf]
  %v140 = vld [vmem:[%s1 + $0x1e4] sm:$0xf]
  %v141 = vld [vmem:[%s1 + $0x1e8] sm:$0xf]
  %v142 = vld [vmem:[%s1 + $0x1ec] sm:$0xf]
  %v143 = vld [vmem:[%s1 + $0x1f0] sm:$0xf]
  %v144 = vld [vmem:[%s1 + $0x1f4] sm:$0xf]
  %v145 = vld [vmem:[%s1 + $0x1f8] sm:$0xf]
  %v146 = vld [vmem:[%s1 + $0x1fc] sm:$0xf]
  %v148 = vcombine.high %v18, %v18
  %v150 = vunpack.c.l.s4 1966171168
  %v151 = vunpack.c.0.s8 %v150
  %v152 = vlaneseq
  %v153 = vshrl.u32 %v152, 7
  %v154 = vsub.s32 %v151, %v153
  %v155 = vrot.slane %v18, %v154
  %v157 = vunpack.c.l.s4 1966171168
  %v158 = vunpack.c.0.s8 %v157
  %v159 = vlaneseq
  %v160 = vshrl.u32 %v159, 7
  %v161 = vsub.s32 %v158, %v160
  %v162 = vrot.slane %v148, %v161
  %v163 = vcombine.high %v155, %v155
  %v164 = vcombine.high %v162, %v162
  %v166 = vunpack.c.l.s4 1966171168
  %v167 = vunpack.c.0.s8 %v166
  %v168 = vlaneseq
  %v169 = vshrl.u32 %v168, 7
  %v170 = vsub.s32 %v167, %v169
  %v171 = vrot.slane %v155, %v170
  %v173 = vunpack.c.l.s4 1966171168
  %v174 = vunpack.c.0.s8 %v173
  %v175 = vlaneseq
  %v176 = vshrl.u32 %v175, 7
  %v177 = vsub.s32 %v174, %v176
  %v178 = vrot.slane %v162, %v177
  %v180 = vunpack.c.l.s4 1966171168
  %v181 = vunpack.c.0.s8 %v180
  %v182 = vlaneseq
  %v183 = vshrl.u32 %v182, 7
  %v184 = vsub.s32 %v181, %v183
  %v185 = vrot.slane %v163, %v184
  %v187 = vunpack.c.l.s4 1966171168
  %v188 = vunpack.c.0.s8 %v187
  %v189 = vlaneseq
  %v190 = vshrl.u32 %v189, 7
  %v191 = vsub.s32 %v188, %v190
  %v192 = vrot.slane %v164, %v191
  %v193 = vcombine.high %v171, %v171
  %v194 = vcombine.high %v178, %v178
  %v195 = vcombine.high %v185, %v185
  %v196 = vcombine.high %v192, %v192
  %v333 = vunpack.c.l.b16 %v19
  %v334 = vunpack.c.l.b16 %v20
  %v335 = vunpack.c.l.b16 %v21
  %v336 = vunpack.c.l.b16 %v22
  %v337 = vunpack.c.l.b16 %v23
  %v338 = vunpack.c.l.b16 %v24
  %v339 = vunpack.c.l.b16 %v25
  %v340 = vunpack.c.l.b16 %v26
  %v341 = vunpack.c.l.b16 %v27
  %v342 = vunpack.c.l.b16 %v28
  %v343 = vunpack.c.l.b16 %v29
  %v344 = vunpack.c.l.b16 %v30
  %v345 = vunpack.c.l.b16 %v31
  %v346 = vunpack.c.l.b16 %v32
  %v347 = vunpack.c.l.b16 %v33
  %v348 = vunpack.c.l.b16 %v34
  %v349 = vunpack.c.l.b16 %v35
  %v350 = vunpack.c.l.b16 %v36
  %v351 = vunpack.c.l.b16 %v37
  %v352 = vunpack.c.l.b16 %v38
  %v353 = vunpack.c.l.b16 %v39
  %v354 = vunpack.c.l.b16 %v40
  %v355 = vunpack.c.l.b16 %v41
  %v356 = vunpack.c.l.b16 %v42
  %v357 = vunpack.c.l.b16 %v43
  %v358 = vunpack.c.l.b16 %v44
  %v359 = vunpack.c.l.b16 %v45
  %v360 = vunpack.c.l.b16 %v46
  %v361 = vunpack.c.l.b16 %v47
  %v362 = vunpack.c.l.b16 %v48
  %v363 = vunpack.c.l.b16 %v49
  %v364 = vunpack.c.l.b16 %v50
  %v365 = vunpack.c.l.b16 %v51
  %v366 = vunpack.c.l.b16 %v52
  %v367 = vunpack.c.l.b16 %v53
  %v368 = vunpack.c.l.b16 %v54
  %v369 = vunpack.c.l.b16 %v55
  %v370 = vunpack.c.l.b16 %v56
  %v371 = vunpack.c.l.b16 %v57
  %v372 = vunpack.c.l.b16 %v58
  %v373 = vunpack.c.l.b16 %v59
  %v374 = vunpack.c.l.b16 %v60
  %v375 = vunpack.c.l.b16 %v61
  %v376 = vunpack.c.l.b16 %v62
  %v377 = vunpack.c.l.b16 %v63
  %v378 = vunpack.c.l.b16 %v64
  %v379 = vunpack.c.l.b16 %v65
  %v380 = vunpack.c.l.b16 %v66
  %v381 = vunpack.c.l.b16 %v67
  %v382 = vunpack.c.l.b16 %v68
  %v383 = vunpack.c.l.b16 %v69
  %v384 = vunpack.c.l.b16 %v70
  %v385 = vunpack.c.l.b16 %v71
  %v386 = vunpack.c.l.b16 %v72
  %v387 = vunpack.c.l.b16 %v73
  %v388 = vunpack.c.l.b16 %v74
  %v389 = vunpack.c.l.b16 %v75
  %v390 = vunpack.c.l.b16 %v76
  %v391 = vunpack.c.l.b16 %v77
  %v392 = vunpack.c.l.b16 %v78
  %v393 = vunpack.c.l.b16 %v79
  %v394 = vunpack.c.l.b16 %v80
  %v395 = vunpack.c.l.b16 %v81
  %v396 = vunpack.c.l.b16 %v82
  %v397 = vunpack.c.l.b16 %v83
  %v398 = vunpack.c.l.b16 %v84
  %v399 = vunpack.c.l.b16 %v85
  %v400 = vunpack.c.l.b16 %v86
  %v401 = vunpack.c.l.b16 %v87
  %v402 = vunpack.c.l.b16 %v88
  %v403 = vunpack.c.l.b16 %v89
  %v404 = vunpack.c.l.b16 %v90
  %v405 = vunpack.c.l.b16 %v91
  %v406 = vunpack.c.l.b16 %v92
  %v407 = vunpack.c.l.b16 %v93
  %v408 = vunpack.c.l.b16 %v94
  %v409 = vunpack.c.l.b16 %v95
  %v410 = vunpack.c.l.b16 %v96
  %v411 = vunpack.c.l.b16 %v97
  %v412 = vunpack.c.l.b16 %v98
  %v413 = vunpack.c.l.b16 %v99
  %v414 = vunpack.c.l.b16 %v100
  %v415 = vunpack.c.l.b16 %v101
  %v416 = vunpack.c.l.b16 %v102
  %v417 = vunpack.c.l.b16 %v103
  %v418 = vunpack.c.l.b16 %v104
  %v419 = vunpack.c.l.b16 %v105
  %v420 = vunpack.c.l.b16 %v106
  %v421 = vunpack.c.l.b16 %v107
  %v422 = vunpack.c.l.b16 %v108
  %v423 = vunpack.c.l.b16 %v109
  %v424 = vunpack.c.l.b16 %v110
  %v425 = vunpack.c.l.b16 %v111
  %v426 = vunpack.c.l.b16 %v112
  %v427 = vunpack.c.l.b16 %v113
  %v428 = vunpack.c.l.b16 %v114
  %v429 = vunpack.c.l.b16 %v115
  %v430 = vunpack.c.l.b16 %v116
  %v431 = vunpack.c.l.b16 %v117
  %v432 = vunpack.c.l.b16 %v118
  %v433 = vunpack.c.l.b16 %v119
  %v434 = vunpack.c.l.b16 %v120
  %v435 = vunpack.c.l.b16 %v121
  %v436 = vunpack.c.l.b16 %v122
  %v437 = vunpack.c.l.b16 %v123
  %v438 = vunpack.c.l.b16 %v124
  %v439 = vunpack.c.l.b16 %v125
  %v440 = vunpack.c.l.b16 %v126
  %v441 = vunpack.c.l.b16 %v127
  %v442 = vunpack.c.l.b16 %v128
  %v443 = vunpack.c.l.b16 %v129
  %v444 = vunpack.c.l.b16 %v130
  %v445 = vunpack.c.l.b16 %v131
  %v446 = vunpack.c.l.b16 %v132
  %v447 = vunpack.c.l.b16 %v133
  %v448 = vunpack.c.l.b16 %v134
  %v449 = vunpack.c.l.b16 %v135
  %v450 = vunpack.c.l.b16 %v136
  %v451 = vunpack.c.l.b16 %v137
  %v452 = vunpack.c.l.b16 %v138
  %v453 = vunpack.c.l.b16 %v139
  %v454 = vunpack.c.l.b16 %v140
  %v455 = vunpack.c.l.b16 %v141
  %v456 = vunpack.c.l.b16 %v142
  %v457 = vunpack.c.l.b16 %v143
  %v458 = vunpack.c.l.b16 %v144
  %v459 = vunpack.c.l.b16 %v145
  %v460 = vunpack.c.l.b16 %v146
  %v461 = vpack.c.b16 %v334, %v333
  %v462 = vpack.c.b16 %v336, %v335
  %v463 = vpack.c.b16 %v338, %v337
  %v464 = vpack.c.b16 %v340, %v339
  %v465 = vpack.c.b16 %v342, %v341
  %v466 = vpack.c.b16 %v344, %v343
  %v467 = vpack.c.b16 %v346, %v345
  %v468 = vpack.c.b16 %v348, %v347
  %v469 = vpack.c.b16 %v350, %v349
  %v470 = vpack.c.b16 %v352, %v351
  %v471 = vpack.c.b16 %v354, %v353
  %v472 = vpack.c.b16 %v356, %v355
  %v473 = vpack.c.b16 %v358, %v357
  %v474 = vpack.c.b16 %v360, %v359
  %v475 = vpack.c.b16 %v362, %v361
  %v476 = vpack.c.b16 %v364, %v363
  %v477 = vpack.c.b16 %v366, %v365
  %v478 = vpack.c.b16 %v368, %v367
  %v479 = vpack.c.b16 %v370, %v369
  %v480 = vpack.c.b16 %v372, %v371
  %v481 = vpack.c.b16 %v374, %v373
  %v482 = vpack.c.b16 %v376, %v375
  %v483 = vpack.c.b16 %v378, %v377
  %v484 = vpack.c.b16 %v380, %v379
  %v485 = vpack.c.b16 %v382, %v381
  %v486 = vpack.c.b16 %v384, %v383
  %v487 = vpack.c.b16 %v386, %v385
  %v488 = vpack.c.b16 %v388, %v387
  %v489 = vpack.c.b16 %v390, %v389
  %v490 = vpack.c.b16 %v392, %v391
  %v491 = vpack.c.b16 %v394, %v393
  %v492 = vpack.c.b16 %v396, %v395
  %v493 = vpack.c.b16 %v398, %v397
  %v494 = vpack.c.b16 %v400, %v399
  %v495 = vpack.c.b16 %v402, %v401
  %v496 = vpack.c.b16 %v404, %v403
  %v497 = vpack.c.b16 %v406, %v405
  %v498 = vpack.c.b16 %v408, %v407
  %v499 = vpack.c.b16 %v410, %v409
  %v500 = vpack.c.b16 %v412, %v411
  %v501 = vpack.c.b16 %v414, %v413
  %v502 = vpack.c.b16 %v416, %v415
  %v503 = vpack.c.b16 %v418, %v417
  %v504 = vpack.c.b16 %v420, %v419
  %v505 = vpack.c.b16 %v422, %v421
  %v506 = vpack.c.b16 %v424, %v423
  %v507 = vpack.c.b16 %v426, %v425
  %v508 = vpack.c.b16 %v428, %v427
  %v509 = vpack.c.b16 %v430, %v429
  %v510 = vpack.c.b16 %v432, %v431
  %v511 = vpack.c.b16 %v434, %v433
  %v512 = vpack.c.b16 %v436, %v435
  %v513 = vpack.c.b16 %v438, %v437
  %v514 = vpack.c.b16 %v440, %v439
  %v515 = vpack.c.b16 %v442, %v441
  %v516 = vpack.c.b16 %v444, %v443
  %v517 = vpack.c.b16 %v446, %v445
  %v518 = vpack.c.b16 %v448, %v447
  %v519 = vpack.c.b16 %v450, %v449
  %v520 = vpack.c.b16 %v452, %v451
  %v521 = vpack.c.b16 %v454, %v453
  %v522 = vpack.c.b16 %v456, %v455
  %v523 = vpack.c.b16 %v458, %v457
  %v524 = vpack.c.b16 %v460, %v459
  %589 = vmatprep.subr.bf16.mxu0 0
  %590 = vmatpush1.bf16.msra.mxu0 %v461
  %591 = vmatprep.subr.bf16.mxu0 0
  %592 = vmatpush1.bf16.msra.mxu0 %v462
  %593 = vmatprep.subr.bf16.mxu0 0
  %594 = vmatpush1.bf16.msra.mxu0 %v463
  %595 = vmatprep.subr.bf16.mxu0 0
  %596 = vmatpush1.bf16.msra.mxu0 %v464
  %597 = vmatprep.subr.bf16.mxu0 0
  %598 = vmatpush1.bf16.msra.mxu0 %v465
  %599 = vmatprep.subr.bf16.mxu0 0
  %600 = vmatpush1.bf16.msra.mxu0 %v466
  %601 = vmatprep.subr.bf16.mxu0 0
  %602 = vmatpush1.bf16.msra.mxu0 %v467
  %603 = vmatprep.subr.bf16.mxu0 0
  %604 = vmatpush1.bf16.msra.mxu0 %v468
  %605 = vmatprep.subr.bf16.mxu0 0
  %606 = vmatpush1.bf16.msra.mxu0 %v469
  %607 = vmatprep.subr.bf16.mxu0 0
  %608 = vmatpush1.bf16.msra.mxu0 %v470
  %609 = vmatprep.subr.bf16.mxu0 0
  %610 = vmatpush1.bf16.msra.mxu0 %v471
  %611 = vmatprep.subr.bf16.mxu0 0
  %612 = vmatpush1.bf16.msra.mxu0 %v472
  %613 = vmatprep.subr.bf16.mxu0 0
  %614 = vmatpush1.bf16.msra.mxu0 %v473
  %615 = vmatprep.subr.bf16.mxu0 0
  %616 = vmatpush1.bf16.msra.mxu0 %v474
  %617 = vmatprep.subr.bf16.mxu0 0
  %618 = vmatpush1.bf16.msra.mxu0 %v475
  %619 = vmatprep.subr.bf16.mxu0 0
  %620 = vmatpush1.bf16.msra.mxu0 %v476
  %621 = vmatprep.mubr.bf16.mxu0 %v185
  %622 = vmatmul.mubr.bf16.gmra.mrb[0].mxu0 %v171
  %v623 = vpop.f32.mrb[0].mxu0
  %v624 = vadd.f32 0.0, %v623
  %v625 = vpop.f32.mrb[0].mxu0
  %v626 = vpop.f32.mrb[0].mxu0
  %v627 = vpop.f32.mrb[0].mxu0
  %628 = vdwg.mxu0
  %629 = vmatprep.subr.bf16.mxu0 0
  %630 = vmatpush1.bf16.msra.mxu0 %v477
  %631 = vmatprep.subr.bf16.mxu0 0
  %632 = vmatpush1.bf16.msra.mxu0 %v478
  %633 = vmatprep.subr.bf16.mxu0 0
  %634 = vmatpush1.bf16.msra.mxu0 %v479
  %635 = vmatprep.subr.bf16.mxu0 0
  %636 = vmatpush1.bf16.msra.mxu0 %v480
  %637 = vmatprep.subr.bf16.mxu0 0
  %638 = vmatpush1.bf16.msra.mxu0 %v481
  %639 = vmatprep.subr.bf16.mxu0 0
  %640 = vmatpush1.bf16.msra.mxu0 %v482
  %641 = vmatprep.subr.bf16.mxu0 0
  %642 = vmatpush1.bf16.msra.mxu0 %v483
  %643 = vmatprep.subr.bf16.mxu0 0
  %644 = vmatpush1.bf16.msra.mxu0 %v484
  %645 = vmatprep.subr.bf16.mxu0 0
  %646 = vmatpush1.bf16.msra.mxu0 %v485
  %647 = vmatprep.subr.bf16.mxu0 0
  %648 = vmatpush1.bf16.msra.mxu0 %v486
  %649 = vmatprep.subr.bf16.mxu0 0
  %650 = vmatpush1.bf16.msra.mxu0 %v487
  %651 = vmatprep.subr.bf16.mxu0 0
  %652 = vmatpush1.bf16.msra.mxu0 %v488
  %653 = vmatprep.subr.bf16.mxu0 0
  %654 = vmatpush1.bf16.msra.mxu0 %v489
  %655 = vmatprep.subr.bf16.mxu0 0
  %656 = vmatpush1.bf16.msra.mxu0 %v490
  %657 = vmatprep.subr.bf16.mxu0 0
  %658 = vmatpush1.bf16.msra.mxu0 %v491
  %659 = vmatprep.subr.bf16.mxu0 0
  %660 = vmatpush1.bf16.msra.mxu0 %v492
  %661 = vmatprep.mubr.bf16.mxu0 %v195
  %662 = vmatmul.mubr.bf16.gmra.mrb[0].mxu0 %v193
  %v663 = vpop.f32.mrb[0].mxu0
  %v664 = vadd.f32 %v624, %v663
  %v665 = vpop.f32.mrb[0].mxu0
  %v666 = vpop.f32.mrb[0].mxu0
  %v667 = vpop.f32.mrb[0].mxu0
  %668 = vdwg.mxu0
  %669 = vmatprep.subr.bf16.mxu0 0
  %670 = vmatpush1.bf16.msra.mxu0 %v493
  %671 = vmatprep.subr.bf16.mxu0 0
  %672 = vmatpush1.bf16.msra.mxu0 %v494
  %673 = vmatprep.subr.bf16.mxu0 0
  %674 = vmatpush1.bf16.msra.mxu0 %v495
  %675 = vmatprep.subr.bf16.mxu0 0
  %676 = vmatpush1.bf16.msra.mxu0 %v496
  %677 = vmatprep.subr.bf16.mxu0 0
  %678 = vmatpush1.bf16.msra.mxu0 %v497
  %679 = vmatprep.subr.bf16.mxu0 0
  %680 = vmatpush1.bf16.msra.mxu0 %v498
  %681 = vmatprep.subr.bf16.mxu0 0
  %682 = vmatpush1.bf16.msra.mxu0 %v499
  %683 = vmatprep.subr.bf16.mxu0 0
  %684 = vmatpush1.bf16.msra.mxu0 %v500
  %685 = vmatprep.subr.bf16.mxu0 0
  %686 = vmatpush1.bf16.msra.mxu0 %v501
  %687 = vmatprep.subr.bf16.mxu0 0
  %688 = vmatpush1.bf16.msra.mxu0 %v502
  %689 = vmatprep.subr.bf16.mxu0 0
  %690 = vmatpush1.bf16.msra.mxu0 %v503
  %691 = vmatprep.subr.bf16.mxu0 0
  %692 = vmatpush1.bf16.msra.mxu0 %v504
  %693 = vmatprep.subr.bf16.mxu0 0
  %694 = vmatpush1.bf16.msra.mxu0 %v505
  %695 = vmatprep.subr.bf16.mxu0 0
  %696 = vmatpush1.bf16.msra.mxu0 %v506
  %697 = vmatprep.subr.bf16.mxu0 0
  %698 = vmatpush1.bf16.msra.mxu0 %v507
  %699 = vmatprep.subr.bf16.mxu0 0
  %700 = vmatpush1.bf16.msra.mxu0 %v508
  %701 = vmatprep.mubr.bf16.mxu0 %v192
  %702 = vmatmul.mubr.bf16.gmra.mrb[0].mxu0 %v178
  %v703 = vpop.f32.mrb[0].mxu0
  %v704 = vadd.f32 %v664, %v703
  %v705 = vpop.f32.mrb[0].mxu0
  %v706 = vpop.f32.mrb[0].mxu0
  %v707 = vpop.f32.mrb[0].mxu0
  %708 = vdwg.mxu0
  %709 = vmatprep.subr.bf16.mxu0 0
  %710 = vmatpush1.bf16.msra.mxu0 %v509
  %711 = vmatprep.subr.bf16.mxu0 0
  %712 = vmatpush1.bf16.msra.mxu0 %v510
  %713 = vmatprep.subr.bf16.mxu0 0
  %714 = vmatpush1.bf16.msra.mxu0 %v511
  %715 = vmatprep.subr.bf16.mxu0 0
  %716 = vmatpush1.bf16.msra.mxu0 %v512
  %717 = vmatprep.subr.bf16.mxu0 0
  %718 = vmatpush1.bf16.msra.mxu0 %v513
  %719 = vmatprep.subr.bf16.mxu0 0
  %720 = vmatpush1.bf16.msra.mxu0 %v514
  %721 = vmatprep.subr.bf16.mxu0 0
  %722 = vmatpush1.bf16.msra.mxu0 %v515
  %723 = vmatprep.subr.bf16.mxu0 0
  %724 = vmatpush1.bf16.msra.mxu0 %v516
  %725 = vmatprep.subr.bf16.mxu0 0
  %726 = vmatpush1.bf16.msra.mxu0 %v517
  %727 = vmatprep.subr.bf16.mxu0 0
  %728 = vmatpush1.bf16.msra.mxu0 %v518
  %729 = vmatprep.subr.bf16.mxu0 0
  %730 = vmatpush1.bf16.msra.mxu0 %v519
  %731 = vmatprep.subr.bf16.mxu0 0
  %732 = vmatpush1.bf16.msra.mxu0 %v520
  %733 = vmatprep.subr.bf16.mxu0 0
  %734 = vmatpush1.bf16.msra.mxu0 %v521
  %735 = vmatprep.subr.bf16.mxu0 0
  %736 = vmatpush1.bf16.msra.mxu0 %v522
  %737 = vmatprep.subr.bf16.mxu0 0
  %738 = vmatpush1.bf16.msra.mxu0 %v523
  %739 = vmatprep.subr.bf16.mxu0 0
  %740 = vmatpush1.bf16.msra.mxu0 %v524
  %741 = vmatprep.mubr.bf16.mxu0 %v196
  %742 = vmatmul.mubr.bf16.gmra.mrb[0].mxu0 %v194
  %v743 = vpop.f32.mrb[0].mxu0
  %v744 = vadd.f32 %v704, %v743
  %v745 = vpop.f32.mrb[0].mxu0
  %v746 = vpop.f32.mrb[0].mxu0
  %v747 = vpop.f32.mrb[0].mxu0
  %748 = vdwg.mxu0
  %749 = vst [vmem:[%s4] sm:$0x3] %v744
  // Predicated region
  $region18: #{critic_forward.9} parent=0 // pred_check
    _
  $region19: #{critic_forward.9} parent=0 // pred_check_branch
    %751 = sbr.rel (0) target = $region21
  $region20: #{critic_forward.9} parent=0 // pred_region
    _
  $region21: #{critic_forward.9} parent=0 // pred_fallthru
    _
  // Predicated region
  $region22: #{critic_forward.9} parent=0 // pred_check
    _
  $region23: #{critic_forward.9} parent=0 // pred_check_branch
    %753 = sbr.rel (0) target = $region25
  $region24: #{critic_forward.9} parent=0 // pred_region
    _
  $region25: #{critic_forward.9} parent=0 // pred_fallthru
    _

</llo_original>
